<compile_context>
chip_gen: v7x
topology: tpu7x:2x2x1
jax: 0.10.0
libtpu: 0.0.40
codegen_flags: <defaults>
</compile_context>

<pallas_src>
import functools

import numpy as np
import jax
import jax.numpy as jnp
from jax import lax
from jax.experimental import pallas as pl
from jax.experimental.pallas import tpu as pltpu


_BIG = 3.0e38  # finite "sorts last" sentinel for padded slots


def _round_up(x, m):
    return ((int(x) + m - 1) // m) * m


def _mf_rank_kernel(tj, lens_ref, score_ref, rank_ref, scr_ref):
    # lens_ref : VMEM (TC, 1) int32 — valid slots per class row
    # score_ref: VMEM (TC, N) f32   — member-vs-center similarity (pads junk)
    # rank_ref : VMEM (TC, N) int32 — ascending-similarity rank (pads -> N)
    # scr_ref  : VMEM (TC, N) f32   — masked-score scratch, sliced along j
    tc, n = score_ref.shape
    lens = lens_ref[...]                                      # (TC, 1)
    lane = lax.broadcasted_iota(jnp.int32, (tc, n), 1)        # slot index i
    valid = lane < lens                                       # (TC, N) bool

    score = jnp.where(valid, score_ref[...], _BIG)            # pads sort last
    scr_ref[...] = score

    s_i = score[:, :, None]                                   # (TC, N, 1)
    i_i = lane[:, :, None]                                    # (TC, N, 1)
    lj = lax.broadcasted_iota(jnp.int32, (1, 1, tj), 2)       # hoisted iota

    n_chunks = n // tj

    # rank_i = #{ j : score_j < score_i }  (index tie-break == stable
    # ascending argsort).  j is processed in TJ-lane chunks so live data is
    # bounded by (TC, N, TJ) instead of a full (C, N, N) tensor.
    def body(c, acc):
        j0 = pl.multiple_of(c * tj, tj)
        s_j = scr_ref[:, pl.ds(j0, tj)][:, None, :]           # (TC, 1, TJ)
        i_j = lj + j0                                         # (1, 1, TJ)
        less = (s_j < s_i) | ((s_j == s_i) & (i_j < i_i))
        return acc + jnp.sum(less.astype(jnp.int32), axis=2)

    rank = lax.fori_loop(0, n_chunks, body,
                         jnp.zeros((tc, n), jnp.int32),
                         unroll=(n_chunks <= 8))

    # Padded slots can never be selected: push them past any budget.
    rank_ref[...] = jnp.where(valid, rank, jnp.int32(n))


@jax.jit
def _mf_ranks_device(feats, ids_mat, lens, labels):
    # feats  : (n_nodes, d) float   — node features (or reps)
    # ids_mat: (C_PAD, N_PAD) int32 — per-class id slots; pads -> zero row
    # lens   : (C_PAD, 1) int32     — valid slots per class row
    # labels : (n_nodes+1,) int32   — class row of each node (C_PAD = dummy)
    n_nodes, dft = feats.shape
    c_pad, n_pad = ids_mat.shape

    feats = feats.astype(jnp.float32)
    feats_pad = jnp.concatenate(
        [feats, jnp.zeros((1, dft), jnp.float32)], axis=0)    # row n_nodes = 0

    # Class centers via segment-sum over node labels (no (C,N,D) gather).
    # Assumes ids per class are disjoint, which holds for ERGNN class splits.
    sums = jax.ops.segment_sum(feats_pad, labels, num_segments=c_pad + 1)
    centers = sums[:c_pad] / jnp.maximum(lens, 1).astype(jnp.float32)

    # Similarity of every node to every class center: one MXU matmul.
    sim_ct = jnp.dot(centers, feats_pad.T,
                     preferred_element_type=jnp.float32)      # (C_PAD, n_nodes+1)

    # Gather only the (C_PAD, N_PAD) scalar scores the rank kernel needs.
    score = jnp.take_along_axis(sim_ct, ids_mat, axis=1)      # (C_PAD, N_PAD)

    tc = 8                                  # c_pad is a multiple of 8
    tj = 256 if n_pad % 256 == 0 else 128   # n_pad is a multiple of 128

    return pl.pallas_call(
        functools.partial(_mf_rank_kernel, tj),
        grid=(c_pad // tc,),
        in_specs=[pl.BlockSpec((tc, 1), lambda i: (i, 0)),
                  pl.BlockSpec((tc, n_pad), lambda i: (i, 0))],
        out_specs=pl.BlockSpec((tc, n_pad), lambda i: (i, 0)),
        out_shape=jax.ShapeDtypeStruct((c_pad, n_pad), jnp.int32),
        scratch_shapes=[pltpu.VMEM((tc, n_pad), jnp.float32)],
        compiler_params=pltpu.CompilerParams(
            dimension_semantics=("parallel",)),
    )(lens, score)


class MFSamplerPallas:
    """Pallas/TPU equivalent of GCGL/Baselines/ergnn_utils.MF_sampler."""

    def __init__(self, plus):
        self.plus = plus

    def __call__(self, ids_per_cls_train, budget, feats, reps, d):
        if self.plus:
            return self.sampling(ids_per_cls_train, budget, reps, d)
        return self.sampling(ids_per_cls_train, budget, feats, d)

    def sampling(self, ids_per_cls_train, budget, vecs, d):
        # TODO(synk): the reference's except-branch (vecs supplied as a
        # per-task dict indexed as vecs[i][ids]) is not ported; only the
        # dense-tensor path is.
        keys = list(ids_per_cls_train.keys())
        vec = jnp.asarray(vecs, dtype=jnp.float32)
        n_nodes = int(vec.shape[0])

        max_len = max((len(ids_per_cls_train[k]) for k in keys), default=1)
        c_pad = max(8, _round_up(max(len(keys), 1), 8))
        n_pad = max(128, _round_up(max_len, 128))

        ids_mat = np.full((c_pad, n_pad), n_nodes, dtype=np.int32)  # pad -> zero row
        lens = np.zeros((c_pad, 1), dtype=np.int32)
        labels = np.full((n_nodes + 1,), c_pad, dtype=np.int32)     # dummy segment
        for r, k in enumerate(keys):
            ids = np.asarray(list(ids_per_cls_train[k]), dtype=np.int32)
            if ids.size:
                ids_mat[r, : ids.size] = ids
                labels[ids] = r
            lens[r, 0] = ids.size

        ranks = _mf_ranks_device(vec, jnp.asarray(ids_mat),
                                 jnp.asarray(lens), jnp.asarray(labels))
        ranks = np.asarray(jax.block_until_ready(ranks))

        ids_selected = {}
        for r, k in enumerate(keys):
            ids = list(ids_per_cls_train[k])
            kk = min(budget, len(ids))
            # valid slots hold ranks 0..len-1; pads hold n_pad, so the first
            # kk argsort entries are exactly the kk lowest-similarity members
            # in ascending-similarity order (matches the reference ordering).
            order = np.argsort(ranks[r], kind="stable")[:kk]
            ids_selected[k] = [int(ids[j]) for j in order]
        return ids_selected


def _reference_mf(ids_per_cls_train, budget, vecs):
    """Pure-numpy reference mirroring the PyTorch MF_sampler semantics."""
    v = np.asarray(vecs, dtype=np.float64)
    out = {}
    for i, ids in ids_per_cls_train.items():
        sub = v[list(ids)]
        center = sub.mean(axis=0)
        sim = sub @ center
        order = np.argsort(sim, kind="stable")[: min(budget, len(ids))]
        out[i] = [int(ids[j]) for j in order]
    return out


if __name__ == "__main__":
    key = jax.random.PRNGKey(0)
    kf, kr = jax.random.split(key)

    # small synthetic "graph": 40 nodes, feature dim d = 32
    n_nodes, d = 40, 32
    feats = jax.random.normal(kf, (n_nodes, d), dtype=jnp.float32)
    reps = jax.random.normal(kr, (n_nodes, d), dtype=jnp.float32)

    ids_per_cls_train = {
        0: list(range(0, 10)),    # 10 ids
        1: list(range(10, 23)),   # 13 ids
        2: list(range(30, 33)),   # 3 ids (< budget -> take all)
    }
    budget = 5

    ok = True
    for plus, vecs in ((False, feats), (True, reps)):
        sampler = MFSamplerPallas(plus=plus)
        out = sampler(ids_per_cls_train, budget, feats, reps, d)
        ref = _reference_mf(ids_per_cls_train, budget, vecs)
        for c, ids in ids_per_cls_train.items():
            sel = out[c]
            kk = min(budget, len(ids))
            if len(sel) != kk or len(set(sel)) != len(sel):
                ok = False
            if not set(sel).issubset(set(ids)):
                ok = False
            if set(sel) != set(ref[c]):
                ok = False

    if ok:
        print("KERNEL_OK")
    else:
        print("KERNEL_MISMATCH")
</pallas_src>

<mosaic_0001>
module attributes {stable_mosaic.version = 11 : i64} {
  func.func @_mf_rank_kernel(%arg0: i32, %arg1: memref<8x1xi32, #tpu.memory_space<vmem>>, %arg2: memref<8x128xf32, #tpu.memory_space<vmem>>, %arg3: memref<8x128xi32, #tpu.memory_space<vmem>>, %arg4: memref<8x128xf32, #tpu.memory_space<vmem>>) attributes {dimension_semantics = [#tpu.dimension_semantics<parallel>], iteration_bounds = array<i64: 1>, scalar_prefetch = 0 : i64, scratch_operands = 1 : i64, tpu.core_type = #tpu.core_type<tc>, window_params = [{transform_indices = @transform_0, window_bounds = array<i64: 8, 1>}, {transform_indices = @transform_1, window_bounds = array<i64: 8, 128>}, {transform_indices = @transform_2, window_bounds = array<i64: 8, 128>}]} {
    %c0 = arith.constant 0 : index
    %c0_0 = arith.constant 0 : index
    %0 = vector.load %arg1[%c0, %c0_0] : memref<8x1xi32, #tpu.memory_space<vmem>>, vector<8x1xi32>
    %1 = tpu.iota {dimensions = array<i32: 1>} : vector<8x128xi32>
    %2 = vector.broadcast %0 : vector<8x1xi32> to vector<8x128xi32>
    %3 = arith.cmpi slt, %1, %2 : vector<8x128xi32>
    %c0_1 = arith.constant 0 : index
    %c0_2 = arith.constant 0 : index
    %4 = vector.load %arg2[%c0_1, %c0_2] : memref<8x128xf32, #tpu.memory_space<vmem>>, vector<8x128xf32>
    %cst = arith.constant 3.000000e+38 : f32
    %5 = vector.broadcast %cst : f32 to vector<8x128xf32>
    %6 = arith.select %3, %4, %5 : vector<8x128xi1>, vector<8x128xf32>
    %c0_3 = arith.constant 0 : index
    %c0_4 = arith.constant 0 : index
    %7 = vector.load %arg4[%c0_3, %c0_4] : memref<8x128xf32, #tpu.memory_space<vmem>>, vector<8x128xf32>
    tpu.vector_store %arg4[%c0_3, %c0_4], %6 {strides = array<i32>} : memref<8x128xf32, #tpu.memory_space<vmem>>, vector<8x128xf32>,
    %8 = vector.shape_cast %6 : vector<8x128xf32> to vector<8x128x1xf32>
    %9 = vector.shape_cast %1 : vector<8x128xi32> to vector<8x128x1xi32>
    %10 = tpu.iota {dimensions = array<i32: 2>} : vector<1x1x128xi32>
    %c0_i32 = arith.constant 0 : i32
    %11 = vector.broadcast %c0_i32 : i32 to vector<8x128xi32>
    %c0_i32_5 = arith.constant 0 : i32
    %c128_i32 = arith.constant 128 : i32
    %12 = arith.muli %c0_i32_5, %c128_i32 : i32
    %13 = tpu.assume_multiple %12, 128 : i32
    %c0_6 = arith.constant 0 : index
    %14 = arith.index_cast %13 : i32 to index
    %15 = vector.load %arg4[%c0_6, %14] : memref<8x128xf32, #tpu.memory_space<vmem>>, vector<8x128xf32>
    %16 = vector.shape_cast %15 : vector<8x128xf32> to vector<8x1x128xf32>
    %17 = vector.broadcast %13 : i32 to vector<1x1x128xi32>
    %18 = arith.addi %10, %17 : vector<1x1x128xi32>
    %19 = vector.broadcast %16 : vector<8x1x128xf32> to vector<8x128x128xf32>
    %20 = vector.broadcast %8 : vector<8x128x1xf32> to vector<8x128x128xf32>
    %21 = arith.cmpf olt, %19, %20 : vector<8x128x128xf32>
    %22 = vector.broadcast %16 : vector<8x1x128xf32> to vector<8x128x128xf32>
    %23 = vector.broadcast %8 : vector<8x128x1xf32> to vector<8x128x128xf32>
    %24 = arith.cmpf oeq, %22, %23 : vector<8x128x128xf32>
    %25 = vector.broadcast %18 : vector<1x1x128xi32> to vector<8x128x128xi32>
    %26 = vector.broadcast %9 : vector<8x128x1xi32> to vector<8x128x128xi32>
    %27 = arith.cmpi slt, %25, %26 : vector<8x128x128xi32>
    %28 = arith.andi %24, %27 : vector<8x128x128xi1>
    %29 = arith.ori %21, %28 : vector<8x128x128xi1>
    %30 = arith.extui %29 : vector<8x128x128xi1> to vector<8x128x128xi32>
    %cst_7 = arith.constant dense<0> : vector<8x128xi32>
    %31 = vector.multi_reduction <add>, %30, %cst_7 [2] : vector<8x128x128xi32> to vector<8x128xi32>
    %32 = arith.addi %11, %31 : vector<8x128xi32>
    %c1_i32 = arith.constant 1 : i32
    %c128_i32_8 = arith.constant 128 : i32
    %33 = vector.broadcast %c128_i32_8 : i32 to vector<8x128xi32>
    %34 = arith.select %3, %32, %33 : vector<8x128xi1>, vector<8x128xi32>
    %c0_9 = arith.constant 0 : index
    %c0_10 = arith.constant 0 : index
    %35 = vector.load %arg3[%c0_9, %c0_10] : memref<8x128xi32, #tpu.memory_space<vmem>>, vector<8x128xi32>
    tpu.vector_store %arg3[%c0_9, %c0_10], %34 {strides = array<i32>} : memref<8x128xi32, #tpu.memory_space<vmem>>, vector<8x128xi32>,
    return
  }
  func.func @transform_0(%arg0: i32) -> (i32, i32) {
    %c0_i32 = arith.constant 0 : i32
    %c0_i32_0 = arith.constant 0 : i32
    return %arg0, %c0_i32 : i32, i32
  }
  func.func @transform_1(%arg0: i32) -> (i32, i32) {
    %c0_i32 = arith.constant 0 : i32
    %c0_i32_0 = arith.constant 0 : i32
    return %arg0, %c0_i32 : i32, i32
  }
  func.func @transform_2(%arg0: i32) -> (i32, i32) {
    %c0_i32 = arith.constant 0 : i32
    %c0_i32_0 = arith.constant 0 : i32
    return %arg0, %c0_i32 : i32, i32
  }
}

</mosaic_0001>

<llo_original>
// kernel: _mf_ranks_device.1
$region0: #{_mf_ranks_device.1}
  #allocation0 [shape = 'u32[]', space=smem, size = 0x4, offset = 0x4, fixed_abs, tag = 'smem constant byte address 0x4 - core index']
  #allocation1 [shape = 'u32[144,128]{1,0:T(1,128)}', space=vmem, size = 0x12000, scoped, tag = 'internal scratch']
  #allocation2 [shape = 'f32[8,128]{1,0:T(8,128)}', space=vmem, size = 0x1000, scoped, tag = 'scratch operand']
  %s0 = inlined_call_operand.vmem [shape: s32[8,1], index: 0, kind: input, shape index: {}]
  %s1 = inlined_call_operand.vmem [shape: f32[8,128], index: 1, kind: input, shape index: {}]
  %s2 = inlined_call_operand.hbm [shape: s32[8,128], index: 2, kind: output, shape index: {}]
  %s3 = sld [smem:[#allocation0]]
  $region18: #{_mf_ranks_device.1} parent=0
    _
  %s5 = ssub.s32 1, %s3
  %s6 = scalar_select 0, %s5, %s3
  $region1: #{_mf_ranks_device.1} parent=0
    #allocation3 [shape = 'u8[4096]{0}', space=vmem, size = 0x1000, scoped, tag = 'output window, operand 0, single buffered']
    #allocation4 [shape = 's32[1]{0}', space=sflag, size = 0x4, scoped, tag = 'scoped memory for _mf_ranks_device.1']
    %7 = vsyncpa [#allocation4], 0
    // Predicated region
    $region2: #{_mf_ranks_device.1} parent=1 // pred_check
      _
    $region3: #{_mf_ranks_device.1} parent=1 // pred_check_branch
      %9 = sbr.rel (0) target = $region5
    $region4: #{_mf_ranks_device.1} parent=1 // pred_region
      _
    $region5: #{_mf_ranks_device.1} parent=1 // pred_fallthru
      _
    // Predicated region
    $region6: #{_mf_ranks_device.1} parent=1 // pred_check
      _
    $region7: #{_mf_ranks_device.1} parent=1 // pred_check_branch
      %11 = sbr.rel (0) target = $region9
    $region8: #{_mf_ranks_device.1} parent=1 // pred_region
      _
    $region9: #{_mf_ranks_device.1} parent=1 // pred_fallthru
      _
    %v12 = vld [vmem:[%s0] sm:$0xff]
    %v13 = vlaneseq
    %v14 = vand.u32 %v13, 127
    %15 = vset.pattern.permute.xlu0 0
    %16 = vperm.xlu0 %15, %v12
    %v17 = vpop.permute.xlu0 %16
    %vm18 = vcmp.lt.s32.totalorder %v14, %v17
    %v19 = vld [vmem:[%s1] sm:$0xff]
    %v20 = vsel %vm18, %v19, 3e+38
    %21 = vst [vmem:[#allocation2] sm:$0xff] %v20
    %v22 = vlaneseq
    %v23 = vshrl.u32 %v22, 7
    %v24 = vsub.s32 0, %v23
    %v25 = vrot.slane %v20, %v24
    %27 = vbcast.lane.b32.xlu0 %v25, 256
    %v28 = vpop.permute.xlu0 %27
    %s30 = sor.u32 256, 8
    %31 = vbcast.lane.b32.xlu0 %v25, %s30
    %v32 = vpop.permute.xlu0 %31
    %s34 = sor.u32 256, 16
    %35 = vbcast.lane.b32.xlu0 %v25, %s34
    %v36 = vpop.permute.xlu0 %35
    %s38 = sor.u32 256, 24
    %39 = vbcast.lane.b32.xlu0 %v25, %s38
    %v40 = vpop.permute.xlu0 %39
    %s42 = sor.u32 256, 32
    %43 = vbcast.lane.b32.xlu0 %v25, %s42
    %v44 = vpop.permute.xlu0 %43
    %s46 = sor.u32 256, 40
    %47 = vbcast.lane.b32.xlu0 %v25, %s46
    %v48 = vpop.permute.xlu0 %47
    %s50 = sor.u32 256, 48
    %51 = vbcast.lane.b32.xlu0 %v25, %s50
    %v52 = vpop.permute.xlu0 %51
    %s54 = sor.u32 256, 56
    %55 = vbcast.lane.b32.xlu0 %v25, %s54
    %v56 = vpop.permute.xlu0 %55
    %s58 = sor.u32 256, 64
    %59 = vbcast.lane.b32.xlu0 %v25, %s58
    %v60 = vpop.permute.xlu0 %59
    %s62 = sor.u32 256, 72
    %63 = vbcast.lane.b32.xlu0 %v25, %s62
    %v64 = vpop.permute.xlu0 %63
    %s66 = sor.u32 256, 80
    %67 = vbcast.lane.b32.xlu0 %v25, %s66
    %v68 = vpop.permute.xlu0 %67
    %s70 = sor.u32 256, 88
    %71 = vbcast.lane.b32.xlu0 %v25, %s70
    %v72 = vpop.permute.xlu0 %71
    %s74 = sor.u32 256, 96
    %75 = vbcast.lane.b32.xlu0 %v25, %s74
    %v76 = vpop.permute.xlu0 %75
    %s78 = sor.u32 256, 104
    %79 = vbcast.lane.b32.xlu0 %v25, %s78
    %v80 = vpop.permute.xlu0 %79
    %s82 = sor.u32 256, 112
    %83 = vbcast.lane.b32.xlu0 %v25, %s82
    %v84 = vpop.permute.xlu0 %83
    %s86 = sor.u32 256, 120
    %87 = vbcast.lane.b32.xlu0 %v25, %s86
    %v88 = vpop.permute.xlu0 %87
    %v89 = vlaneseq
    %v90 = vshrl.u32 %v89, 7
    %v91 = vsub.s32 1, %v90
    %v92 = vrot.slane %v20, %v91
    %94 = vbcast.lane.b32.xlu0 %v92, 256
    %v95 = vpop.permute.xlu0 %94
    %s97 = sor.u32 256, 8
    %98 = vbcast.lane.b32.xlu0 %v92, %s97
    %v99 = vpop.permute.xlu0 %98
    %s101 = sor.u32 256, 16
    %102 = vbcast.lane.b32.xlu0 %v92, %s101
    %v103 = vpop.permute.xlu0 %102
    %s105 = sor.u32 256, 24
    %106 = vbcast.lane.b32.xlu0 %v92, %s105
    %v107 = vpop.permute.xlu0 %106
    %s109 = sor.u32 256, 32
    %110 = vbcast.lane.b32.xlu0 %v92, %s109
    %v111 = vpop.permute.xlu0 %110
    %s113 = sor.u32 256, 40
    %114 = vbcast.lane.b32.xlu0 %v92, %s113
    %v115 = vpop.permute.xlu0 %114
    %s117 = sor.u32 256, 48
    %118 = vbcast.lane.b32.xlu0 %v92, %s117
    %v119 = vpop.permute.xlu0 %118
    %s121 = sor.u32 256, 56
    %122 = vbcast.lane.b32.xlu0 %v92, %s121
    %v123 = vpop.permute.xlu0 %122
    %s125 = sor.u32 256, 64
    %126 = vbcast.lane.b32.xlu0 %v92, %s125
    %v127 = vpop.permute.xlu0 %126
    %s129 = sor.u32 256, 72
    %130 = vbcast.lane.b32.xlu0 %v92, %s129
    %v131 = vpop.permute.xlu0 %130
    %s133 = sor.u32 256, 80
    %134 = vbcast.lane.b32.xlu0 %v92, %s133
    %v135 = vpop.permute.xlu0 %134
    %s137 = sor.u32 256, 88
    %138 = vbcast.lane.b32.xlu0 %v92, %s137
    %v139 = vpop.permute.xlu0 %138
    %s141 = sor.u32 256, 96
    %142 = vbcast.lane.b32.xlu0 %v92, %s141
    %v143 = vpop.permute.xlu0 %142
    %s145 = sor.u32 256, 104
    %146 = vbcast.lane.b32.xlu0 %v92, %s145
    %v147 = vpop.permute.xlu0 %146
    %s149 = sor.u32 256, 112
    %150 = vbcast.lane.b32.xlu0 %v92, %s149
    %v151 = vpop.permute.xlu0 %150
    %s153 = sor.u32 256, 120
    %154 = vbcast.lane.b32.xlu0 %v92, %s153
    %v155 = vpop.permute.xlu0 %154
    %v156 = vlaneseq
    %v157 = vshrl.u32 %v156, 7
    %v158 = vsub.s32 2, %v157
    %v159 = vrot.slane %v20, %v158
    %161 = vbcast.lane.b32.xlu0 %v159, 256
    %v162 = vpop.permute.xlu0 %161
    %s164 = sor.u32 256, 8
    %165 = vbcast.lane.b32.xlu0 %v159, %s164
    %v166 = vpop.permute.xlu0 %165
    %s168 = sor.u32 256, 16
    %169 = vbcast.lane.b32.xlu0 %v159, %s168
    %v170 = vpop.permute.xlu0 %169
    %s172 = sor.u32 256, 24
    %173 = vbcast.lane.b32.xlu0 %v159, %s172
    %v174 = vpop.permute.xlu0 %173
    %s176 = sor.u32 256, 32
    %177 = vbcast.lane.b32.xlu0 %v159, %s176
    %v178 = vpop.permute.xlu0 %177
    %s180 = sor.u32 256, 40
    %181 = vbcast.lane.b32.xlu0 %v159, %s180
    %v182 = vpop.permute.xlu0 %181
    %s184 = sor.u32 256, 48
    %185 = vbcast.lane.b32.xlu0 %v159, %s184
    %v186 = vpop.permute.xlu0 %185
    %s188 = sor.u32 256, 56
    %189 = vbcast.lane.b32.xlu0 %v159, %s188
    %v190 = vpop.permute.xlu0 %189
    %s192 = sor.u32 256, 64
    %193 = vbcast.lane.b32.xlu0 %v159, %s192
    %v194 = vpop.permute.xlu0 %193
    %s196 = sor.u32 256, 72
    %197 = vbcast.lane.b32.xlu0 %v159, %s196
    %v198 = vpop.permute.xlu0 %197
    %s200 = sor.u32 256, 80
    %201 = vbcast.lane.b32.xlu0 %v159, %s200
    %v202 = vpop.permute.xlu0 %201
    %s204 = sor.u32 256, 88
    %205 = vbcast.lane.b32.xlu0 %v159, %s204
    %v206 = vpop.permute.xlu0 %205
    %s208 = sor.u32 256, 96
    %209 = vbcast.lane.b32.xlu0 %v159, %s208
    %v210 = vpop.permute.xlu0 %209
    %s212 = sor.u32 256, 104
    %213 = vbcast.lane.b32.xlu0 %v159, %s212
    %v214 = vpop.permute.xlu0 %213
    %s216 = sor.u32 256, 112
    %217 = vbcast.lane.b32.xlu0 %v159, %s216
    %v218 = vpop.permute.xlu0 %217
    %s220 = sor.u32 256, 120
    %221 = vbcast.lane.b32.xlu0 %v159, %s220
    %v222 = vpop.permute.xlu0 %221
    %v223 = vlaneseq
    %v224 = vshrl.u32 %v223, 7
    %v225 = vsub.s32 3, %v224
    %v226 = vrot.slane %v20, %v225
    %228 = vbcast.lane.b32.xlu0 %v226, 256
    %v229 = vpop.permute.xlu0 %228
    %s231 = sor.u32 256, 8
    %232 = vbcast.lane.b32.xlu0 %v226, %s231
    %v233 = vpop.permute.xlu0 %232
    %s235 = sor.u32 256, 16
    %236 = vbcast.lane.b32.xlu0 %v226, %s235
    %v237 = vpop.permute.xlu0 %236
    %s239 = sor.u32 256, 24
    %240 = vbcast.lane.b32.xlu0 %v226, %s239
    %v241 = vpop.permute.xlu0 %240
    %s243 = sor.u32 256, 32
    %244 = vbcast.lane.b32.xlu0 %v226, %s243
    %v245 = vpop.permute.xlu0 %244
    %s247 = sor.u32 256, 40
    %248 = vbcast.lane.b32.xlu0 %v226, %s247
    %v249 = vpop.permute.xlu0 %248
    %s251 = sor.u32 256, 48
    %252 = vbcast.lane.b32.xlu0 %v226, %s251
    %v253 = vpop.permute.xlu0 %252
    %s255 = sor.u32 256, 56
    %256 = vbcast.lane.b32.xlu0 %v226, %s255
    %v257 = vpop.permute.xlu0 %256
    %s259 = sor.u32 256, 64
    %260 = vbcast.lane.b32.xlu0 %v226, %s259
    %v261 = vpop.permute.xlu0 %260
    %s263 = sor.u32 256, 72
    %264 = vbcast.lane.b32.xlu0 %v226, %s263
    %v265 = vpop.permute.xlu0 %264
    %s267 = sor.u32 256, 80
    %268 = vbcast.lane.b32.xlu0 %v226, %s267
    %v269 = vpop.permute.xlu0 %268
    %s271 = sor.u32 256, 88
    %272 = vbcast.lane.b32.xlu0 %v226, %s271
    %v273 = vpop.permute.xlu0 %272
    %s275 = sor.u32 256, 96
    %276 = vbcast.lane.b32.xlu0 %v226, %s275
    %v277 = vpop.permute.xlu0 %276
    %s279 = sor.u32 256, 104
    %280 = vbcast.lane.b32.xlu0 %v226, %s279
    %v281 = vpop.permute.xlu0 %280
    %s283 = sor.u32 256, 112
    %284 = vbcast.lane.b32.xlu0 %v226, %s283
    %v285 = vpop.permute.xlu0 %284
    %s287 = sor.u32 256, 120
    %288 = vbcast.lane.b32.xlu0 %v226, %s287
    %v289 = vpop.permute.xlu0 %288
    %v290 = vlaneseq
    %v291 = vshrl.u32 %v290, 7
    %v292 = vsub.s32 4, %v291
    %v293 = vrot.slane %v20, %v292
    %295 = vbcast.lane.b32.xlu0 %v293, 256
    %v296 = vpop.permute.xlu0 %295
    %s298 = sor.u32 256, 8
    %299 = vbcast.lane.b32.xlu0 %v293, %s298
    %v300 = vpop.permute.xlu0 %299
    %s302 = sor.u32 256, 16
    %303 = vbcast.lane.b32.xlu0 %v293, %s302
    %v304 = vpop.permute.xlu0 %303
    %s306 = sor.u32 256, 24
    %307 = vbcast.lane.b32.xlu0 %v293, %s306
    %v308 = vpop.permute.xlu0 %307
    %s310 = sor.u32 256, 32
    %311 = vbcast.lane.b32.xlu0 %v293, %s310
    %v312 = vpop.permute.xlu0 %311
    %s314 = sor.u32 256, 40
    %315 = vbcast.lane.b32.xlu0 %v293, %s314
    %v316 = vpop.permute.xlu0 %315
    %s318 = sor.u32 256, 48
    %319 = vbcast.lane.b32.xlu0 %v293, %s318
    %v320 = vpop.permute.xlu0 %319
    %s322 = sor.u32 256, 56
    %323 = vbcast.lane.b32.xlu0 %v293, %s322
    %v324 = vpop.permute.xlu0 %323
    %s326 = sor.u32 256, 64
    %327 = vbcast.lane.b32.xlu0 %v293, %s326
    %v328 = vpop.permute.xlu0 %327
    %s330 = sor.u32 256, 72
    %331 = vbcast.lane.b32.xlu0 %v293, %s330
    %v332 = vpop.permute.xlu0 %331
    %s334 = sor.u32 256, 80
    %335 = vbcast.lane.b32.xlu0 %v293, %s334
    %v336 = vpop.permute.xlu0 %335
    %s338 = sor.u32 256, 88
    %339 = vbcast.lane.b32.xlu0 %v293, %s338
    %v340 = vpop.permute.xlu0 %339
    %s342 = sor.u32 256, 96
    %343 = vbcast.lane.b32.xlu0 %v293, %s342
    %v344 = vpop.permute.xlu0 %343
    %s346 = sor.u32 256, 104
    %347 = vbcast.lane.b32.xlu0 %v293, %s346
    %v348 = vpop.permute.xlu0 %347
    %s350 = sor.u32 256, 112
    %351 = vbcast.lane.b32.xlu0 %v293, %s350
    %v352 = vpop.permute.xlu0 %351
    %s354 = sor.u32 256, 120
    %355 = vbcast.lane.b32.xlu0 %v293, %s354
    %v356 = vpop.permute.xlu0 %355
    %v357 = vlaneseq
    %v358 = vshrl.u32 %v357, 7
    %v359 = vsub.s32 5, %v358
    %v360 = vrot.slane %v20, %v359
    %362 = vbcast.lane.b32.xlu0 %v360, 256
    %v363 = vpop.permute.xlu0 %362
    %s365 = sor.u32 256, 8
    %366 = vbcast.lane.b32.xlu0 %v360, %s365
    %v367 = vpop.permute.xlu0 %366
    %s369 = sor.u32 256, 16
    %370 = vbcast.lane.b32.xlu0 %v360, %s369
    %v371 = vpop.permute.xlu0 %370
    %s373 = sor.u32 256, 24
    %374 = vbcast.lane.b32.xlu0 %v360, %s373
    %v375 = vpop.permute.xlu0 %374
    %s377 = sor.u32 256, 32
    %378 = vbcast.lane.b32.xlu0 %v360, %s377
    %v379 = vpop.permute.xlu0 %378
    %s381 = sor.u32 256, 40
    %382 = vbcast.lane.b32.xlu0 %v360, %s381
    %v383 = vpop.permute.xlu0 %382
    %s385 = sor.u32 256, 48
    %386 = vbcast.lane.b32.xlu0 %v360, %s385
    %v387 = vpop.permute.xlu0 %386
    %s389 = sor.u32 256, 56
    %390 = vbcast.lane.b32.xlu0 %v360, %s389
    %v391 = vpop.permute.xlu0 %390
    %s393 = sor.u32 256, 64
    %394 = vbcast.lane.b32.xlu0 %v360, %s393
    %v395 = vpop.permute.xlu0 %394
    %s397 = sor.u32 256, 72
    %398 = vbcast.lane.b32.xlu0 %v360, %s397
    %v399 = vpop.permute.xlu0 %398
    %s401 = sor.u32 256, 80
    %402 = vbcast.lane.b32.xlu0 %v360, %s401
    %v403 = vpop.permute.xlu0 %402
    %s405 = sor.u32 256, 88
    %406 = vbcast.lane.b32.xlu0 %v360, %s405
    %v407 = vpop.permute.xlu0 %406
    %s409 = sor.u32 256, 96
    %410 = vbcast.lane.b32.xlu0 %v360, %s409
    %v411 = vpop.permute.xlu0 %410
    %s413 = sor.u32 256, 104
    %414 = vbcast.lane.b32.xlu0 %v360, %s413
    %v415 = vpop.permute.xlu0 %414
    %s417 = sor.u32 256, 112
    %418 = vbcast.lane.b32.xlu0 %v360, %s417
    %v419 = vpop.permute.xlu0 %418
    %s421 = sor.u32 256, 120
    %422 = vbcast.lane.b32.xlu0 %v360, %s421
    %v423 = vpop.permute.xlu0 %422
    %v424 = vlaneseq
    %v425 = vshrl.u32 %v424, 7
    %v426 = vsub.s32 6, %v425
    %v427 = vrot.slane %v20, %v426
    %429 = vbcast.lane.b32.xlu0 %v427, 256
    %v430 = vpop.permute.xlu0 %429
    %s432 = sor.u32 256, 8
    %433 = vbcast.lane.b32.xlu0 %v427, %s432
    %v434 = vpop.permute.xlu0 %433
    %s436 = sor.u32 256, 16
    %437 = vbcast.lane.b32.xlu0 %v427, %s436
    %v438 = vpop.permute.xlu0 %437
    %s440 = sor.u32 256, 24
    %441 = vbcast.lane.b32.xlu0 %v427, %s440
    %v442 = vpop.permute.xlu0 %441
    %s444 = sor.u32 256, 32
    %445 = vbcast.lane.b32.xlu0 %v427, %s444
    %v446 = vpop.permute.xlu0 %445
    %s448 = sor.u32 256, 40
    %449 = vbcast.lane.b32.xlu0 %v427, %s448
    %v450 = vpop.permute.xlu0 %449
    %s452 = sor.u32 256, 48
    %453 = vbcast.lane.b32.xlu0 %v427, %s452
    %v454 = vpop.permute.xlu0 %453
    %s456 = sor.u32 256, 56
    %457 = vbcast.lane.b32.xlu0 %v427, %s456
    %v458 = vpop.permute.xlu0 %457
    %s460 = sor.u32 256, 64
    %461 = vbcast.lane.b32.xlu0 %v427, %s460
    %v462 = vpop.permute.xlu0 %461
    %s464 = sor.u32 256, 72
    %465 = vbcast.lane.b32.xlu0 %v427, %s464
    %v466 = vpop.permute.xlu0 %465
    %s468 = sor.u32 256, 80
    %469 = vbcast.lane.b32.xlu0 %v427, %s468
    %v470 = vpop.permute.xlu0 %469
    %s472 = sor.u32 256, 88
    %473 = vbcast.lane.b32.xlu0 %v427, %s472
    %v474 = vpop.permute.xlu0 %473
    %s476 = sor.u32 256, 96
    %477 = vbcast.lane.b32.xlu0 %v427, %s476
    %v478 = vpop.permute.xlu0 %477
    %s480 = sor.u32 256, 104
    %481 = vbcast.lane.b32.xlu0 %v427, %s480
    %v482 = vpop.permute.xlu0 %481
    %s484 = sor.u32 256, 112
    %485 = vbcast.lane.b32.xlu0 %v427, %s484
    %v486 = vpop.permute.xlu0 %485
    %s488 = sor.u32 256, 120
    %489 = vbcast.lane.b32.xlu0 %v427, %s488
    %v490 = vpop.permute.xlu0 %489
    %v491 = vlaneseq
    %v492 = vshrl.u32 %v491, 7
    %v493 = vsub.s32 7, %v492
    %v494 = vrot.slane %v20, %v493
    %496 = vbcast.lane.b32.xlu0 %v494, 256
    %v497 = vpop.permute.xlu0 %496
    %s499 = sor.u32 256, 8
    %500 = vbcast.lane.b32.xlu0 %v494, %s499
    %v501 = vpop.permute.xlu0 %500
    %s503 = sor.u32 256, 16
    %504 = vbcast.lane.b32.xlu0 %v494, %s503
    %v505 = vpop.permute.xlu0 %504
    %s507 = sor.u32 256, 24
    %508 = vbcast.lane.b32.xlu0 %v494, %s507
    %v509 = vpop.permute.xlu0 %508
    %s511 = sor.u32 256, 32
    %512 = vbcast.lane.b32.xlu0 %v494, %s511
    %v513 = vpop.permute.xlu0 %512
    %s515 = sor.u32 256, 40
    %516 = vbcast.lane.b32.xlu0 %v494, %s515
    %v517 = vpop.permute.xlu0 %516
    %s519 = sor.u32 256, 48
    %520 = vbcast.lane.b32.xlu0 %v494, %s519
    %v521 = vpop.permute.xlu0 %520
    %s523 = sor.u32 256, 56
    %524 = vbcast.lane.b32.xlu0 %v494, %s523
    %v525 = vpop.permute.xlu0 %524
    %s527 = sor.u32 256, 64
    %528 = vbcast.lane.b32.xlu0 %v494, %s527
    %v529 = vpop.permute.xlu0 %528
    %s531 = sor.u32 256, 72
    %532 = vbcast.lane.b32.xlu0 %v494, %s531
    %v533 = vpop.permute.xlu0 %532
    %s535 = sor.u32 256, 80
    %536 = vbcast.lane.b32.xlu0 %v494, %s535
    %v537 = vpop.permute.xlu0 %536
    %s539 = sor.u32 256, 88
    %540 = vbcast.lane.b32.xlu0 %v494, %s539
    %v541 = vpop.permute.xlu0 %540
    %s543 = sor.u32 256, 96
    %544 = vbcast.lane.b32.xlu0 %v494, %s543
    %v545 = vpop.permute.xlu0 %544
    %s547 = sor.u32 256, 104
    %548 = vbcast.lane.b32.xlu0 %v494, %s547
    %v549 = vpop.permute.xlu0 %548
    %s551 = sor.u32 256, 112
    %552 = vbcast.lane.b32.xlu0 %v494, %s551
    %v553 = vpop.permute.xlu0 %552
    %s555 = sor.u32 256, 120
    %556 = vbcast.lane.b32.xlu0 %v494, %s555
    %v557 = vpop.permute.xlu0 %556
    %559 = vbcast.lane.b32.xlu0 %v14, 256
    %v560 = vpop.permute.xlu0 %559
    %s562 = sor.u32 256, 8
    %563 = vbcast.lane.b32.xlu0 %v14, %s562
    %v564 = vpop.permute.xlu0 %563
    %s566 = sor.u32 256, 16
    %567 = vbcast.lane.b32.xlu0 %v14, %s566
    %v568 = vpop.permute.xlu0 %567
    %s570 = sor.u32 256, 24
    %571 = vbcast.lane.b32.xlu0 %v14, %s570
    %v572 = vpop.permute.xlu0 %571
    %s574 = sor.u32 256, 32
    %575 = vbcast.lane.b32.xlu0 %v14, %s574
    %v576 = vpop.permute.xlu0 %575
    %s578 = sor.u32 256, 40
    %579 = vbcast.lane.b32.xlu0 %v14, %s578
    %v580 = vpop.permute.xlu0 %579
    %s582 = sor.u32 256, 48
    %583 = vbcast.lane.b32.xlu0 %v14, %s582
    %v584 = vpop.permute.xlu0 %583
    %s586 = sor.u32 256, 56
    %587 = vbcast.lane.b32.xlu0 %v14, %s586
    %v588 = vpop.permute.xlu0 %587
    %s590 = sor.u32 256, 64
    %591 = vbcast.lane.b32.xlu0 %v14, %s590
    %v592 = vpop.permute.xlu0 %591
    %s594 = sor.u32 256, 72
    %595 = vbcast.lane.b32.xlu0 %v14, %s594
    %v596 = vpop.permute.xlu0 %595
    %s598 = sor.u32 256, 80
    %599 = vbcast.lane.b32.xlu0 %v14, %s598
    %v600 = vpop.permute.xlu0 %599
    %s602 = sor.u32 256, 88
    %603 = vbcast.lane.b32.xlu0 %v14, %s602
    %v604 = vpop.permute.xlu0 %603
    %s606 = sor.u32 256, 96
    %607 = vbcast.lane.b32.xlu0 %v14, %s606
    %v608 = vpop.permute.xlu0 %607
    %s610 = sor.u32 256, 104
    %611 = vbcast.lane.b32.xlu0 %v14, %s610
    %v612 = vpop.permute.xlu0 %611
    %s614 = sor.u32 256, 112
    %615 = vbcast.lane.b32.xlu0 %v14, %s614
    %v616 = vpop.permute.xlu0 %615
    %s618 = sor.u32 256, 120
    %619 = vbcast.lane.b32.xlu0 %v14, %s618
    %v620 = vpop.permute.xlu0 %619
    %v621 = vld [vmem:[#allocation2] sm:$0xff]
    %v623 = vcombine.high %v621, %v621
    %v625 = vunpack.c.l.s4 1966171168
    %v626 = vunpack.c.0.s8 %v625
    %v627 = vlaneseq
    %v628 = vshrl.u32 %v627, 7
    %v629 = vsub.s32 %v626, %v628
    %v630 = vrot.slane %v621, %v629
    %v632 = vunpack.c.l.s4 1966171168
    %v633 = vunpack.c.0.s8 %v632
    %v634 = vlaneseq
    %v635 = vshrl.u32 %v634, 7
    %v636 = vsub.s32 %v633, %v635
    %v637 = vrot.slane %v623, %v636
    %v638 = vcombine.high %v630, %v630
    %v639 = vcombine.high %v637, %v637
    %v641 = vunpack.c.l.s4 1966171168
    %v642 = vunpack.c.0.s8 %v641
    %v643 = vlaneseq
    %v644 = vshrl.u32 %v643, 7
    %v645 = vsub.s32 %v642, %v644
    %v646 = vrot.slane %v630, %v645
    %v648 = vunpack.c.l.s4 1966171168
    %v649 = vunpack.c.0.s8 %v648
    %v650 = vlaneseq
    %v651 = vshrl.u32 %v650, 7
    %v652 = vsub.s32 %v649, %v651
    %v653 = vrot.slane %v637, %v652
    %v655 = vunpack.c.l.s4 1966171168
    %v656 = vunpack.c.0.s8 %v655
    %v657 = vlaneseq
    %v658 = vshrl.u32 %v657, 7
    %v659 = vsub.s32 %v656, %v658
    %v660 = vrot.slane %v638, %v659
    %v662 = vunpack.c.l.s4 1966171168
    %v663 = vunpack.c.0.s8 %v662
    %v664 = vlaneseq
    %v665 = vshrl.u32 %v664, 7
    %v666 = vsub.s32 %v663, %v665
    %v667 = vrot.slane %v639, %v666
    %v668 = vcombine.high %v646, %v646
    %v669 = vcombine.high %v653, %v653
    %v670 = vcombine.high %v660, %v660
    %v671 = vcombine.high %v667, %v667
    %v672 = vstv 0
    %v673 = vadd.s32 %v14, %v672
    %v674 = vlaneseq
    %v675 = vshrl.u32 %v674, 7
    %v676 = vsub.s32 0, %v675
    %v677 = vrot.slane %v646, %v676
    %v678 = vlaneseq
    %v679 = vshrl.u32 %v678, 7
    %v680 = vsub.s32 0, %v679
    %v681 = vrot.slane %v660, %v680
    %v682 = vlaneseq
    %v683 = vshrl.u32 %v682, 7
    %v684 = vsub.s32 0, %v683
    %v685 = vrot.slane %v668, %v684
    %v686 = vlaneseq
    %v687 = vshrl.u32 %v686, 7
    %v688 = vsub.s32 0, %v687
    %v689 = vrot.slane %v670, %v688
    %v690 = vlaneseq
    %v691 = vshrl.u32 %v690, 7
    %v692 = vsub.s32 0, %v691
    %v693 = vrot.slane %v653, %v692
    %v694 = vlaneseq
    %v695 = vshrl.u32 %v694, 7
    %v696 = vsub.s32 0, %v695
    %v697 = vrot.slane %v667, %v696
    %v698 = vlaneseq
    %v699 = vshrl.u32 %v698, 7
    %v700 = vsub.s32 0, %v699
    %v701 = vrot.slane %v669, %v700
    %v702 = vlaneseq
    %v703 = vshrl.u32 %v702, 7
    %v704 = vsub.s32 0, %v703
    %v705 = vrot.slane %v671, %v704
    %vm714 = vcmp.lt.f32.partialorder %v677, %v28
    %vm715 = vcmp.lt.f32.partialorder %v677, %v32
    %vm716 = vcmp.lt.f32.partialorder %v677, %v36
    %vm717 = vcmp.lt.f32.partialorder %v677, %v40
    %vm718 = vcmp.lt.f32.partialorder %v677, %v44
    %vm719 = vcmp.lt.f32.partialorder %v677, %v48
    %vm720 = vcmp.lt.f32.partialorder %v677, %v52
    %vm721 = vcmp.lt.f32.partialorder %v677, %v56
    %vm722 = vcmp.lt.f32.partialorder %v677, %v60
    %vm723 = vcmp.lt.f32.partialorder %v677, %v64
    %vm724 = vcmp.lt.f32.partialorder %v677, %v68
    %vm725 = vcmp.lt.f32.partialorder %v677, %v72
    %vm726 = vcmp.lt.f32.partialorder %v677, %v76
    %vm727 = vcmp.lt.f32.partialorder %v677, %v80
    %vm728 = vcmp.lt.f32.partialorder %v677, %v84
    %vm729 = vcmp.lt.f32.partialorder %v677, %v88
    %vm730 = vcmp.lt.f32.partialorder %v681, %v95
    %vm731 = vcmp.lt.f32.partialorder %v681, %v99
    %vm732 = vcmp.lt.f32.partialorder %v681, %v103
    %vm733 = vcmp.lt.f32.partialorder %v681, %v107
    %vm734 = vcmp.lt.f32.partialorder %v681, %v111
    %vm735 = vcmp.lt.f32.partialorder %v681, %v115
    %vm736 = vcmp.lt.f32.partialorder %v681, %v119
    %vm737 = vcmp.lt.f32.partialorder %v681, %v123
    %vm738 = vcmp.lt.f32.partialorder %v681, %v127
    %vm739 = vcmp.lt.f32.partialorder %v681, %v131
    %vm740 = vcmp.lt.f32.partialorder %v681, %v135
    %vm741 = vcmp.lt.f32.partialorder %v681, %v139
    %vm742 = vcmp.lt.f32.partialorder %v681, %v143
    %vm743 = vcmp.lt.f32.partialorder %v681, %v147
    %vm744 = vcmp.lt.f32.partialorder %v681, %v151
    %vm745 = vcmp.lt.f32.partialorder %v681, %v155
    %vm746 = vcmp.lt.f32.partialorder %v685, %v162
    %vm747 = vcmp.lt.f32.partialorder %v685, %v166
    %vm748 = vcmp.lt.f32.partialorder %v685, %v170
    %vm749 = vcmp.lt.f32.partialorder %v685, %v174
    %vm750 = vcmp.lt.f32.partialorder %v685, %v178
    %vm751 = vcmp.lt.f32.partialorder %v685, %v182
    %vm752 = vcmp.lt.f32.partialorder %v685, %v186
    %vm753 = vcmp.lt.f32.partialorder %v685, %v190
    %vm754 = vcmp.lt.f32.partialorder %v685, %v194
    %vm755 = vcmp.lt.f32.partialorder %v685, %v198
    %vm756 = vcmp.lt.f32.partialorder %v685, %v202
    %vm757 = vcmp.lt.f32.partialorder %v685, %v206
    %vm758 = vcmp.lt.f32.partialorder %v685, %v210
    %vm759 = vcmp.lt.f32.partialorder %v685, %v214
    %vm760 = vcmp.lt.f32.partialorder %v685, %v218
    %vm761 = vcmp.lt.f32.partialorder %v685, %v222
    %vm762 = vcmp.lt.f32.partialorder %v689, %v229
    %vm763 = vcmp.lt.f32.partialorder %v689, %v233
    %vm764 = vcmp.lt.f32.partialorder %v689, %v237
    %vm765 = vcmp.lt.f32.partialorder %v689, %v241
    %vm766 = vcmp.lt.f32.partialorder %v689, %v245
    %vm767 = vcmp.lt.f32.partialorder %v689, %v249
    %vm768 = vcmp.lt.f32.partialorder %v689, %v253
    %vm769 = vcmp.lt.f32.partialorder %v689, %v257
    %vm770 = vcmp.lt.f32.partialorder %v689, %v261
    %vm771 = vcmp.lt.f32.partialorder %v689, %v265
    %vm772 = vcmp.lt.f32.partialorder %v689, %v269
    %vm773 = vcmp.lt.f32.partialorder %v689, %v273
    %vm774 = vcmp.lt.f32.partialorder %v689, %v277
    %vm775 = vcmp.lt.f32.partialorder %v689, %v281
    %vm776 = vcmp.lt.f32.partialorder %v689, %v285
    %vm777 = vcmp.lt.f32.partialorder %v689, %v289
    %vm778 = vcmp.lt.f32.partialorder %v693, %v296
    %vm779 = vcmp.lt.f32.partialorder %v693, %v300
    %vm780 = vcmp.lt.f32.partialorder %v693, %v304
    %vm781 = vcmp.lt.f32.partialorder %v693, %v308
    %vm782 = vcmp.lt.f32.partialorder %v693, %v312
    %vm783 = vcmp.lt.f32.partialorder %v693, %v316
    %vm784 = vcmp.lt.f32.partialorder %v693, %v320
    %vm785 = vcmp.lt.f32.partialorder %v693, %v324
    %vm786 = vcmp.lt.f32.partialorder %v693, %v328
    %vm787 = vcmp.lt.f32.partialorder %v693, %v332
    %vm788 = vcmp.lt.f32.partialorder %v693, %v336
    %vm789 = vcmp.lt.f32.partialorder %v693, %v340
    %vm790 = vcmp.lt.f32.partialorder %v693, %v344
    %vm791 = vcmp.lt.f32.partialorder %v693, %v348
    %vm792 = vcmp.lt.f32.partialorder %v693, %v352
    %vm793 = vcmp.lt.f32.partialorder %v693, %v356
    %vm794 = vcmp.lt.f32.partialorder %v697, %v363
    %vm795 = vcmp.lt.f32.partialorder %v697, %v367
    %vm796 = vcmp.lt.f32.partialorder %v697, %v371
    %vm797 = vcmp.lt.f32.partialorder %v697, %v375
    %vm798 = vcmp.lt.f32.partialorder %v697, %v379
    %vm799 = vcmp.lt.f32.partialorder %v697, %v383
    %vm800 = vcmp.lt.f32.partialorder %v697, %v387
    %vm801 = vcmp.lt.f32.partialorder %v697, %v391
    %vm802 = vcmp.lt.f32.partialorder %v697, %v395
    %vm803 = vcmp.lt.f32.partialorder %v697, %v399
    %vm804 = vcmp.lt.f32.partialorder %v697, %v403
    %vm805 = vcmp.lt.f32.partialorder %v697, %v407
    %vm806 = vcmp.lt.f32.partialorder %v697, %v411
    %vm807 = vcmp.lt.f32.partialorder %v697, %v415
    %vm808 = vcmp.lt.f32.partialorder %v697, %v419
    %vm809 = vcmp.lt.f32.partialorder %v697, %v423
    %vm810 = vcmp.lt.f32.partialorder %v701, %v430
    %vm811 = vcmp.lt.f32.partialorder %v701, %v434
    %vm812 = vcmp.lt.f32.partialorder %v701, %v438
    %vm813 = vcmp.lt.f32.partialorder %v701, %v442
    %vm814 = vcmp.lt.f32.partialorder %v701, %v446
    %vm815 = vcmp.lt.f32.partialorder %v701, %v450
    %vm816 = vcmp.lt.f32.partialorder %v701, %v454
    %vm817 = vcmp.lt.f32.partialorder %v701, %v458
    %vm818 = vcmp.lt.f32.partialorder %v701, %v462
    %vm819 = vcmp.lt.f32.partialorder %v701, %v466
    %vm820 = vcmp.lt.f32.partialorder %v701, %v470
    %vm821 = vcmp.lt.f32.partialorder %v701, %v474
    %vm822 = vcmp.lt.f32.partialorder %v701, %v478
    %vm823 = vcmp.lt.f32.partialorder %v701, %v482
    %vm824 = vcmp.lt.f32.partialorder %v701, %v486
    %vm825 = vcmp.lt.f32.partialorder %v701, %v490
    %vm826 = vcmp.lt.f32.partialorder %v705, %v497
    %vm827 = vcmp.lt.f32.partialorder %v705, %v501
    %vm828 = vcmp.lt.f32.partialorder %v705, %v505
    %vm829 = vcmp.lt.f32.partialorder %v705, %v509
    %vm830 = vcmp.lt.f32.partialorder %v705, %v513
    %vm831 = vcmp.lt.f32.partialorder %v705, %v517
    %vm832 = vcmp.lt.f32.partialorder %v705, %v521
    %vm833 = vcmp.lt.f32.partialorder %v705, %v525
    %vm834 = vcmp.lt.f32.partialorder %v705, %v529
    %vm835 = vcmp.lt.f32.partialorder %v705, %v533
    %vm836 = vcmp.lt.f32.partialorder %v705, %v537
    %vm837 = vcmp.lt.f32.partialorder %v705, %v541
    %vm838 = vcmp.lt.f32.partialorder %v705, %v545
    %vm839 = vcmp.lt.f32.partialorder %v705, %v549
    %vm840 = vcmp.lt.f32.partialorder %v705, %v553
    %vm841 = vcmp.lt.f32.partialorder %v705, %v557
    %vm842 = vcmp.eq.f32.partialorder %v677, %v28
    %vm843 = vcmp.eq.f32.partialorder %v677, %v32
    %vm844 = vcmp.eq.f32.partialorder %v677, %v36
    %vm845 = vcmp.eq.f32.partialorder %v677, %v40
    %vm846 = vcmp.eq.f32.partialorder %v677, %v44
    %vm847 = vcmp.eq.f32.partialorder %v677, %v48
    %vm848 = vcmp.eq.f32.partialorder %v677, %v52
    %vm849 = vcmp.eq.f32.partialorder %v677, %v56
    %vm850 = vcmp.eq.f32.partialorder %v677, %v60
    %vm851 = vcmp.eq.f32.partialorder %v677, %v64
    %vm852 = vcmp.eq.f32.partialorder %v677, %v68
    %vm853 = vcmp.eq.f32.partialorder %v677, %v72
    %vm854 = vcmp.eq.f32.partialorder %v677, %v76
    %vm855 = vcmp.eq.f32.partialorder %v677, %v80
    %vm856 = vcmp.eq.f32.partialorder %v677, %v84
    %vm857 = vcmp.eq.f32.partialorder %v677, %v88
    %vm858 = vcmp.eq.f32.partialorder %v681, %v95
    %vm859 = vcmp.eq.f32.partialorder %v681, %v99
    %vm860 = vcmp.eq.f32.partialorder %v681, %v103
    %vm861 = vcmp.eq.f32.partialorder %v681, %v107
    %vm862 = vcmp.eq.f32.partialorder %v681, %v111
    %vm863 = vcmp.eq.f32.partialorder %v681, %v115
    %vm864 = vcmp.eq.f32.partialorder %v681, %v119
    %vm865 = vcmp.eq.f32.partialorder %v681, %v123
    %vm866 = vcmp.eq.f32.partialorder %v681, %v127
    %vm867 = vcmp.eq.f32.partialorder %v681, %v131
    %vm868 = vcmp.eq.f32.partialorder %v681, %v135
    %vm869 = vcmp.eq.f32.partialorder %v681, %v139
    %vm870 = vcmp.eq.f32.partialorder %v681, %v143
    %vm871 = vcmp.eq.f32.partialorder %v681, %v147
    %vm872 = vcmp.eq.f32.partialorder %v681, %v151
    %vm873 = vcmp.eq.f32.partialorder %v681, %v155
    %vm874 = vcmp.eq.f32.partialorder %v685, %v162
    %vm875 = vcmp.eq.f32.partialorder %v685, %v166
    %vm876 = vcmp.eq.f32.partialorder %v685, %v170
    %vm877 = vcmp.eq.f32.partialorder %v685, %v174
    %vm878 = vcmp.eq.f32.partialorder %v685, %v178
    %vm879 = vcmp.eq.f32.partialorder %v685, %v182
    %vm880 = vcmp.eq.f32.partialorder %v685, %v186
    %vm881 = vcmp.eq.f32.partialorder %v685, %v190
    %vm882 = vcmp.eq.f32.partialorder %v685, %v194
    %vm883 = vcmp.eq.f32.partialorder %v685, %v198
    %vm884 = vcmp.eq.f32.partialorder %v685, %v202
    %vm885 = vcmp.eq.f32.partialorder %v685, %v206
    %vm886 = vcmp.eq.f32.partialorder %v685, %v210
    %vm887 = vcmp.eq.f32.partialorder %v685, %v214
    %vm888 = vcmp.eq.f32.partialorder %v685, %v218
    %vm889 = vcmp.eq.f32.partialorder %v685, %v222
    %vm890 = vcmp.eq.f32.partialorder %v689, %v229
    %vm891 = vcmp.eq.f32.partialorder %v689, %v233
    %vm892 = vcmp.eq.f32.partialorder %v689, %v237
    %vm893 = vcmp.eq.f32.partialorder %v689, %v241
    %vm894 = vcmp.eq.f32.partialorder %v689, %v245
    %vm895 = vcmp.eq.f32.partialorder %v689, %v249
    %vm896 = vcmp.eq.f32.partialorder %v689, %v253
    %vm897 = vcmp.eq.f32.partialorder %v689, %v257
    %vm898 = vcmp.eq.f32.partialorder %v689, %v261
    %vm899 = vcmp.eq.f32.partialorder %v689, %v265
    %vm900 = vcmp.eq.f32.partialorder %v689, %v269
    %vm901 = vcmp.eq.f32.partialorder %v689, %v273
    %vm902 = vcmp.eq.f32.partialorder %v689, %v277
    %vm903 = vcmp.eq.f32.partialorder %v689, %v281
    %vm904 = vcmp.eq.f32.partialorder %v689, %v285
    %vm905 = vcmp.eq.f32.partialorder %v689, %v289
    %vm906 = vcmp.eq.f32.partialorder %v693, %v296
    %vm907 = vcmp.eq.f32.partialorder %v693, %v300
    %vm908 = vcmp.eq.f32.partialorder %v693, %v304
    %vm909 = vcmp.eq.f32.partialorder %v693, %v308
    %vm910 = vcmp.eq.f32.partialorder %v693, %v312
    %vm911 = vcmp.eq.f32.partialorder %v693, %v316
    %vm912 = vcmp.eq.f32.partialorder %v693, %v320
    %vm913 = vcmp.eq.f32.partialorder %v693, %v324
    %vm914 = vcmp.eq.f32.partialorder %v693, %v328
    %vm915 = vcmp.eq.f32.partialorder %v693, %v332
    %vm916 = vcmp.eq.f32.partialorder %v693, %v336
    %vm917 = vcmp.eq.f32.partialorder %v693, %v340
    %vm918 = vcmp.eq.f32.partialorder %v693, %v344
    %vm919 = vcmp.eq.f32.partialorder %v693, %v348
    %vm920 = vcmp.eq.f32.partialorder %v693, %v352
    %vm921 = vcmp.eq.f32.partialorder %v693, %v356
    %vm922 = vcmp.eq.f32.partialorder %v697, %v363
    %vm923 = vcmp.eq.f32.partialorder %v697, %v367
    %vm924 = vcmp.eq.f32.partialorder %v697, %v371
    %vm925 = vcmp.eq.f32.partialorder %v697, %v375
    %vm926 = vcmp.eq.f32.partialorder %v697, %v379
    %vm927 = vcmp.eq.f32.partialorder %v697, %v383
    %vm928 = vcmp.eq.f32.partialorder %v697, %v387
    %vm929 = vcmp.eq.f32.partialorder %v697, %v391
    %vm930 = vcmp.eq.f32.partialorder %v697, %v395
    %vm931 = vcmp.eq.f32.partialorder %v697, %v399
    %vm932 = vcmp.eq.f32.partialorder %v697, %v403
    %vm933 = vcmp.eq.f32.partialorder %v697, %v407
    %vm934 = vcmp.eq.f32.partialorder %v697, %v411
    %vm935 = vcmp.eq.f32.partialorder %v697, %v415
    %vm936 = vcmp.eq.f32.partialorder %v697, %v419
    %vm937 = vcmp.eq.f32.partialorder %v697, %v423
    %vm938 = vcmp.eq.f32.partialorder %v701, %v430
    %vm939 = vcmp.eq.f32.partialorder %v701, %v434
    %vm940 = vcmp.eq.f32.partialorder %v701, %v438
    %vm941 = vcmp.eq.f32.partialorder %v701, %v442
    %vm942 = vcmp.eq.f32.partialorder %v701, %v446
    %vm943 = vcmp.eq.f32.partialorder %v701, %v450
    %vm944 = vcmp.eq.f32.partialorder %v701, %v454
    %vm945 = vcmp.eq.f32.partialorder %v701, %v458
    %vm946 = vcmp.eq.f32.partialorder %v701, %v462
    %vm947 = vcmp.eq.f32.partialorder %v701, %v466
    %vm948 = vcmp.eq.f32.partialorder %v701, %v470
    %vm949 = vcmp.eq.f32.partialorder %v701, %v474
    %vm950 = vcmp.eq.f32.partialorder %v701, %v478
    %vm951 = vcmp.eq.f32.partialorder %v701, %v482
    %vm952 = vcmp.eq.f32.partialorder %v701, %v486
    %vm953 = vcmp.eq.f32.partialorder %v701, %v490
    %vm954 = vcmp.eq.f32.partialorder %v705, %v497
    %vm955 = vcmp.eq.f32.partialorder %v705, %v501
    %vm956 = vcmp.eq.f32.partialorder %v705, %v505
    %vm957 = vcmp.eq.f32.partialorder %v705, %v509
    %vm958 = vcmp.eq.f32.partialorder %v705, %v513
    %vm959 = vcmp.eq.f32.partialorder %v705, %v517
    %vm960 = vcmp.eq.f32.partialorder %v705, %v521
    %vm961 = vcmp.eq.f32.partialorder %v705, %v525
    %vm962 = vcmp.eq.f32.partialorder %v705, %v529
    %vm963 = vcmp.eq.f32.partialorder %v705, %v533
    %vm964 = vcmp.eq.f32.partialorder %v705, %v537
    %vm965 = vcmp.eq.f32.partialorder %v705, %v541
    %vm966 = vcmp.eq.f32.partialorder %v705, %v545
    %vm967 = vcmp.eq.f32.partialorder %v705, %v549
    %vm968 = vcmp.eq.f32.partialorder %v705, %v553
    %vm969 = vcmp.eq.f32.partialorder %v705, %v557
    %vm970 = vcmp.lt.s32.totalorder %v673, %v560
    %vm971 = vcmp.lt.s32.totalorder %v673, %v564
    %vm972 = vcmp.lt.s32.totalorder %v673, %v568
    %vm973 = vcmp.lt.s32.totalorder %v673, %v572
    %vm974 = vcmp.lt.s32.totalorder %v673, %v576
    %vm975 = vcmp.lt.s32.totalorder %v673, %v580
    %vm976 = vcmp.lt.s32.totalorder %v673, %v584
    %vm977 = vcmp.lt.s32.totalorder %v673, %v588
    %vm978 = vcmp.lt.s32.totalorder %v673, %v592
    %vm979 = vcmp.lt.s32.totalorder %v673, %v596
    %vm980 = vcmp.lt.s32.totalorder %v673, %v600
    %vm981 = vcmp.lt.s32.totalorder %v673, %v604
    %vm982 = vcmp.lt.s32.totalorder %v673, %v608
    %vm983 = vcmp.lt.s32.totalorder %v673, %v612
    %vm984 = vcmp.lt.s32.totalorder %v673, %v616
    %vm985 = vcmp.lt.s32.totalorder %v673, %v620
    %vm986 = vmand %vm842, %vm970
    %vm987 = vmand %vm843, %vm971
    %vm988 = vmand %vm844, %vm972
    %vm989 = vmand %vm845, %vm973
    %vm990 = vmand %vm846, %vm974
    %vm991 = vmand %vm847, %vm975
    %vm992 = vmand %vm848, %vm976
    %vm993 = vmand %vm849, %vm977
    %vm994 = vmand %vm850, %vm978
    %vm995 = vmand %vm851, %vm979
    %vm996 = vmand %vm852, %vm980
    %vm997 = vmand %vm853, %vm981
    %vm998 = vmand %vm854, %vm982
    %vm999 = vmand %vm855, %vm983
    %vm1000 = vmand %vm856, %vm984
    %vm1001 = vmand %vm857, %vm985
    %vm1002 = vmand %vm858, %vm970
    %vm1003 = vmand %vm859, %vm971
    %vm1004 = vmand %vm860, %vm972
    %vm1005 = vmand %vm861, %vm973
    %vm1006 = vmand %vm862, %vm974
    %vm1007 = vmand %vm863, %vm975
    %vm1008 = vmand %vm864, %vm976
    %vm1009 = vmand %vm865, %vm977
    %vm1010 = vmand %vm866, %vm978
    %vm1011 = vmand %vm867, %vm979
    %vm1012 = vmand %vm868, %vm980
    %vm1013 = vmand %vm869, %vm981
    %vm1014 = vmand %vm870, %vm982
    %vm1015 = vmand %vm871, %vm983
    %vm1016 = vmand %vm872, %vm984
    %vm1017 = vmand %vm873, %vm985
    %vm1018 = vmand %vm874, %vm970
    %vm1019 = vmand %vm875, %vm971
    %vm1020 = vmand %vm876, %vm972
    %vm1021 = vmand %vm877, %vm973
    %vm1022 = vmand %vm878, %vm974
    %vm1023 = vmand %vm879, %vm975
    %vm1024 = vmand %vm880, %vm976
    %vm1025 = vmand %vm881, %vm977
    %vm1026 = vmand %vm882, %vm978
    %vm1027 = vmand %vm883, %vm979
    %vm1028 = vmand %vm884, %vm980
    %vm1029 = vmand %vm885, %vm981
    %vm1030 = vmand %vm886, %vm982
    %vm1031 = vmand %vm887, %vm983
    %vm1032 = vmand %vm888, %vm984
    %vm1033 = vmand %vm889, %vm985
    %vm1034 = vmand %vm890, %vm970
    %vm1035 = vmand %vm891, %vm971
    %vm1036 = vmand %vm892, %vm972
    %vm1037 = vmand %vm893, %vm973
    %vm1038 = vmand %vm894, %vm974
    %vm1039 = vmand %vm895, %vm975
    %vm1040 = vmand %vm896, %vm976
    %vm1041 = vmand %vm897, %vm977
    %vm1042 = vmand %vm898, %vm978
    %vm1043 = vmand %vm899, %vm979
    %vm1044 = vmand %vm900, %vm980
    %vm1045 = vmand %vm901, %vm981
    %vm1046 = vmand %vm902, %vm982
    %vm1047 = vmand %vm903, %vm983
    %vm1048 = vmand %vm904, %vm984
    %vm1049 = vmand %vm905, %vm985
    %vm1050 = vmand %vm906, %vm970
    %vm1051 = vmand %vm907, %vm971
    %vm1052 = vmand %vm908, %vm972
    %vm1053 = vmand %vm909, %vm973
    %vm1054 = vmand %vm910, %vm974
    %vm1055 = vmand %vm911, %vm975
    %vm1056 = vmand %vm912, %vm976
    %vm1057 = vmand %vm913, %vm977
    %vm1058 = vmand %vm914, %vm978
    %vm1059 = vmand %vm915, %vm979
    %vm1060 = vmand %vm916, %vm980
    %vm1061 = vmand %vm917, %vm981
    %vm1062 = vmand %vm918, %vm982
    %vm1063 = vmand %vm919, %vm983
    %vm1064 = vmand %vm920, %vm984
    %vm1065 = vmand %vm921, %vm985
    %vm1066 = vmand %vm922, %vm970
    %vm1067 = vmand %vm923, %vm971
    %vm1068 = vmand %vm924, %vm972
    %vm1069 = vmand %vm925, %vm973
    %vm1070 = vmand %vm926, %vm974
    %vm1071 = vmand %vm927, %vm975
    %vm1072 = vmand %vm928, %vm976
    %vm1073 = vmand %vm929, %vm977
    %vm1074 = vmand %vm930, %vm978
    %vm1075 = vmand %vm931, %vm979
    %vm1076 = vmand %vm932, %vm980
    %vm1077 = vmand %vm933, %vm981
    %vm1078 = vmand %vm934, %vm982
    %vm1079 = vmand %vm935, %vm983
    %vm1080 = vmand %vm936, %vm984
    %vm1081 = vmand %vm937, %vm985
    %vm1082 = vmand %vm938, %vm970
    %vm1083 = vmand %vm939, %vm971
    %vm1084 = vmand %vm940, %vm972
    %vm1085 = vmand %vm941, %vm973
    %vm1086 = vmand %vm942, %vm974
    %vm1087 = vmand %vm943, %vm975
    %vm1088 = vmand %vm944, %vm976
    %vm1089 = vmand %vm945, %vm977
    %vm1090 = vmand %vm946, %vm978
    %vm1091 = vmand %vm947, %vm979
    %vm1092 = vmand %vm948, %vm980
    %vm1093 = vmand %vm949, %vm981
    %vm1094 = vmand %vm950, %vm982
    %vm1095 = vmand %vm951, %vm983
    %vm1096 = vmand %vm952, %vm984
    %vm1097 = vmand %vm953, %vm985
    %vm1098 = vmand %vm954, %vm970
    %vm1099 = vmand %vm955, %vm971
    %vm1100 = vmand %vm956, %vm972
    %vm1101 = vmand %vm957, %vm973
    %vm1102 = vmand %vm958, %vm974
    %vm1103 = vmand %vm959, %vm975
    %vm1104 = vmand %vm960, %vm976
    %vm1105 = vmand %vm961, %vm977
    %vm1106 = vmand %vm962, %vm978
    %vm1107 = vmand %vm963, %vm979
    %vm1108 = vmand %vm964, %vm980
    %vm1109 = vmand %vm965, %vm981
    %vm1110 = vmand %vm966, %vm982
    %vm1111 = vmand %vm967, %vm983
    %vm1112 = vmand %vm968, %vm984
    %vm1113 = vmand %vm969, %vm985
    %vm1114 = vmor %vm714, %vm986
    %vm1115 = vmor %vm715, %vm987
    %vm1116 = vmor %vm716, %vm988
    %vm1117 = vmor %vm717, %vm989
    %vm1118 = vmor %vm718, %vm990
    %vm1119 = vmor %vm719, %vm991
    %vm1120 = vmor %vm720, %vm992
    %vm1121 = vmor %vm721, %vm993
    %vm1122 = vmor %vm722, %vm994
    %vm1123 = vmor %vm723, %vm995
    %vm1124 = vmor %vm724, %vm996
    %vm1125 = vmor %vm725, %vm997
    %vm1126 = vmor %vm726, %vm998
    %vm1127 = vmor %vm727, %vm999
    %vm1128 = vmor %vm728, %vm1000
    %vm1129 = vmor %vm729, %vm1001
    %vm1130 = vmor %vm730, %vm1002
    %vm1131 = vmor %vm731, %vm1003
    %vm1132 = vmor %vm732, %vm1004
    %vm1133 = vmor %vm733, %vm1005
    %vm1134 = vmor %vm734, %vm1006
    %vm1135 = vmor %vm735, %vm1007
    %vm1136 = vmor %vm736, %vm1008
    %vm1137 = vmor %vm737, %vm1009
    %vm1138 = vmor %vm738, %vm1010
    %vm1139 = vmor %vm739, %vm1011
    %vm1140 = vmor %vm740, %vm1012
    %vm1141 = vmor %vm741, %vm1013
    %vm1142 = vmor %vm742, %vm1014
    %vm1143 = vmor %vm743, %vm1015
    %vm1144 = vmor %vm744, %vm1016
    %vm1145 = vmor %vm745, %vm1017
    %vm1146 = vmor %vm746, %vm1018
    %vm1147 = vmor %vm747, %vm1019
    %vm1148 = vmor %vm748, %vm1020
    %vm1149 = vmor %vm749, %vm1021
    %vm1150 = vmor %vm750, %vm1022
    %vm1151 = vmor %vm751, %vm1023
    %vm1152 = vmor %vm752, %vm1024
    %vm1153 = vmor %vm753, %vm1025
    %vm1154 = vmor %vm754, %vm1026
    %vm1155 = vmor %vm755, %vm1027
    %vm1156 = vmor %vm756, %vm1028
    %vm1157 = vmor %vm757, %vm1029
    %vm1158 = vmor %vm758, %vm1030
    %vm1159 = vmor %vm759, %vm1031
    %vm1160 = vmor %vm760, %vm1032
    %vm1161 = vmor %vm761, %vm1033
    %vm1162 = vmor %vm762, %vm1034
    %vm1163 = vmor %vm763, %vm1035
    %vm1164 = vmor %vm764, %vm1036
    %vm1165 = vmor %vm765, %vm1037
    %vm1166 = vmor %vm766, %vm1038
    %vm1167 = vmor %vm767, %vm1039
    %vm1168 = vmor %vm768, %vm1040
    %vm1169 = vmor %vm769, %vm1041
    %vm1170 = vmor %vm770, %vm1042
    %vm1171 = vmor %vm771, %vm1043
    %vm1172 = vmor %vm772, %vm1044
    %vm1173 = vmor %vm773, %vm1045
    %vm1174 = vmor %vm774, %vm1046
    %vm1175 = vmor %vm775, %vm1047
    %vm1176 = vmor %vm776, %vm1048
    %vm1177 = vmor %vm777, %vm1049
    %vm1178 = vmor %vm778, %vm1050
    %vm1179 = vmor %vm779, %vm1051
    %vm1180 = vmor %vm780, %vm1052
    %vm1181 = vmor %vm781, %vm1053
    %vm1182 = vmor %vm782, %vm1054
    %vm1183 = vmor %vm783, %vm1055
    %vm1184 = vmor %vm784, %vm1056
    %vm1185 = vmor %vm785, %vm1057
    %vm1186 = vmor %vm786, %vm1058
    %vm1187 = vmor %vm787, %vm1059
    %vm1188 = vmor %vm788, %vm1060
    %vm1189 = vmor %vm789, %vm1061
    %vm1190 = vmor %vm790, %vm1062
    %vm1191 = vmor %vm791, %vm1063
    %vm1192 = vmor %vm792, %vm1064
    %vm1193 = vmor %vm793, %vm1065
    %vm1194 = vmor %vm794, %vm1066
    %vm1195 = vmor %vm795, %vm1067
    %vm1196 = vmor %vm796, %vm1068
    %vm1197 = vmor %vm797, %vm1069
    %vm1198 = vmor %vm798, %vm1070
    %vm1199 = vmor %vm799, %vm1071
    %vm1200 = vmor %vm800, %vm1072
    %vm1201 = vmor %vm801, %vm1073
    %vm1202 = vmor %vm802, %vm1074
    %vm1203 = vmor %vm803, %vm1075
    %vm1204 = vmor %vm804, %vm1076
    %vm1205 = vmor %vm805, %vm1077
    %vm1206 = vmor %vm806, %vm1078
    %vm1207 = vmor %vm807, %vm1079
    %vm1208 = vmor %vm808, %vm1080
    %vm1209 = vmor %vm809, %vm1081
    %vm1210 = vmor %vm810, %vm1082
    %vm1211 = vmor %vm811, %vm1083
    %vm1212 = vmor %vm812, %vm1084
    %vm1213 = vmor %vm813, %vm1085
    %vm1214 = vmor %vm814, %vm1086
    %vm1215 = vmor %vm815, %vm1087
    %vm1216 = vmor %vm816, %vm1088
    %vm1217 = vmor %vm817, %vm1089
    %vm1218 = vmor %vm818, %vm1090
    %vm1219 = vmor %vm819, %vm1091
    %vm1220 = vmor %vm820, %vm1092
    %vm1221 = vmor %vm821, %vm1093
    %vm1222 = vmor %vm822, %vm1094
    %vm1223 = vmor %vm823, %vm1095
    %vm1224 = vmor %vm824, %vm1096
    %vm1225 = vmor %vm825, %vm1097
    %vm1226 = vmor %vm826, %vm1098
    %vm1227 = vmor %vm827, %vm1099
    %vm1228 = vmor %vm828, %vm1100
    %vm1229 = vmor %vm829, %vm1101
    %vm1230 = vmor %vm830, %vm1102
    %vm1231 = vmor %vm831, %vm1103
    %vm1232 = vmor %vm832, %vm1104
    %vm1233 = vmor %vm833, %vm1105
    %vm1234 = vmor %vm834, %vm1106
    %vm1235 = vmor %vm835, %vm1107
    %vm1236 = vmor %vm836, %vm1108
    %vm1237 = vmor %vm837, %vm1109
    %vm1238 = vmor %vm838, %vm1110
    %vm1239 = vmor %vm839, %vm1111
    %vm1240 = vmor %vm840, %vm1112
    %vm1241 = vmor %vm841, %vm1113
    %v1242 = vsel %vm1114, 1, 0
    %v1243 = vsel %vm1115, 1, 0
    %v1244 = vsel %vm1116, 1, 0
    %v1245 = vsel %vm1117, 1, 0
    %v1246 = vsel %vm1118, 1, 0
    %v1247 = vsel %vm1119, 1, 0
    %v1248 = vsel %vm1120, 1, 0
    %v1249 = vsel %vm1121, 1, 0
    %v1250 = vsel %vm1122, 1, 0
    %v1251 = vsel %vm1123, 1, 0
    %v1252 = vsel %vm1124, 1, 0
    %v1253 = vsel %vm1125, 1, 0
    %v1254 = vsel %vm1126, 1, 0
    %v1255 = vsel %vm1127, 1, 0
    %v1256 = vsel %vm1128, 1, 0
    %v1257 = vsel %vm1129, 1, 0
    %v1258 = vsel %vm1130, 1, 0
    %v1259 = vsel %vm1131, 1, 0
    %v1260 = vsel %vm1132, 1, 0
    %v1261 = vsel %vm1133, 1, 0
    %v1262 = vsel %vm1134, 1, 0
    %v1263 = vsel %vm1135, 1, 0
    %v1264 = vsel %vm1136, 1, 0
    %v1265 = vsel %vm1137, 1, 0
    %v1266 = vsel %vm1138, 1, 0
    %v1267 = vsel %vm1139, 1, 0
    %v1268 = vsel %vm1140, 1, 0
    %v1269 = vsel %vm1141, 1, 0
    %v1270 = vsel %vm1142, 1, 0
    %v1271 = vsel %vm1143, 1, 0
    %v1272 = vsel %vm1144, 1, 0
    %v1273 = vsel %vm1145, 1, 0
    %v1274 = vsel %vm1146, 1, 0
    %v1275 = vsel %vm1147, 1, 0
    %v1276 = vsel %vm1148, 1, 0
    %v1277 = vsel %vm1149, 1, 0
    %v1278 = vsel %vm1150, 1, 0
    %v1279 = vsel %vm1151, 1, 0
    %v1280 = vsel %vm1152, 1, 0
    %v1281 = vsel %vm1153, 1, 0
    %v1282 = vsel %vm1154, 1, 0
    %v1283 = vsel %vm1155, 1, 0
    %v1284 = vsel %vm1156, 1, 0
    %v1285 = vsel %vm1157, 1, 0
    %v1286 = vsel %vm1158, 1, 0
    %v1287 = vsel %vm1159, 1, 0
    %v1288 = vsel %vm1160, 1, 0
    %v1289 = vsel %vm1161, 1, 0
    %v1290 = vsel %vm1162, 1, 0
    %v1291 = vsel %vm1163, 1, 0
    %v1292 = vsel %vm1164, 1, 0
    %v1293 = vsel %vm1165, 1, 0
    %v1294 = vsel %vm1166, 1, 0
    %v1295 = vsel %vm1167, 1, 0
    %v1296 = vsel %vm1168, 1, 0
    %v1297 = vsel %vm1169, 1, 0
    %v1298 = vsel %vm1170, 1, 0
    %v1299 = vsel %vm1171, 1, 0
    %v1300 = vsel %vm1172, 1, 0
    %v1301 = vsel %vm1173, 1, 0
    %v1302 = vsel %vm1174, 1, 0
    %v1303 = vsel %vm1175, 1, 0
    %v1304 = vsel %vm1176, 1, 0
    %v1305 = vsel %vm1177, 1, 0
    %v1306 = vsel %vm1178, 1, 0
    %v1307 = vsel %vm1179, 1, 0
    %v1308 = vsel %vm1180, 1, 0
    %v1309 = vsel %vm1181, 1, 0
    %v1310 = vsel %vm1182, 1, 0
    %v1311 = vsel %vm1183, 1, 0
    %v1312 = vsel %vm1184, 1, 0
    %v1313 = vsel %vm1185, 1, 0
    %v1314 = vsel %vm1186, 1, 0
    %v1315 = vsel %vm1187, 1, 0
    %v1316 = vsel %vm1188, 1, 0
    %v1317 = vsel %vm1189, 1, 0
    %v1318 = vsel %vm1190, 1, 0
    %v1319 = vsel %vm1191, 1, 0
    %v1320 = vsel %vm1192, 1, 0
    %v1321 = vsel %vm1193, 1, 0
    %v1322 = vsel %vm1194, 1, 0
    %v1323 = vsel %vm1195, 1, 0
    %v1324 = vsel %vm1196, 1, 0
    %v1325 = vsel %vm1197, 1, 0
    %v1326 = vsel %vm1198, 1, 0
    %v1327 = vsel %vm1199, 1, 0
    %v1328 = vsel %vm1200, 1, 0
    %v1329 = vsel %vm1201, 1, 0
    %v1330 = vsel %vm1202, 1, 0
    %v1331 = vsel %vm1203, 1, 0
    %v1332 = vsel %vm1204, 1, 0
    %v1333 = vsel %vm1205, 1, 0
    %v1334 = vsel %vm1206, 1, 0
    %v1335 = vsel %vm1207, 1, 0
    %v1336 = vsel %vm1208, 1, 0
    %v1337 = vsel %vm1209, 1, 0
    %v1338 = vsel %vm1210, 1, 0
    %v1339 = vsel %vm1211, 1, 0
    %v1340 = vsel %vm1212, 1, 0
    %v1341 = vsel %vm1213, 1, 0
    %v1342 = vsel %vm1214, 1, 0
    %v1343 = vsel %vm1215, 1, 0
    %v1344 = vsel %vm1216, 1, 0
    %v1345 = vsel %vm1217, 1, 0
    %v1346 = vsel %vm1218, 1, 0
    %v1347 = vsel %vm1219, 1, 0
    %v1348 = vsel %vm1220, 1, 0
    %v1349 = vsel %vm1221, 1, 0
    %v1350 = vsel %vm1222, 1, 0
    %v1351 = vsel %vm1223, 1, 0
    %v1352 = vsel %vm1224, 1, 0
    %v1353 = vsel %vm1225, 1, 0
    %v1354 = vsel %vm1226, 1, 0
    %v1355 = vsel %vm1227, 1, 0
    %v1356 = vsel %vm1228, 1, 0
    %v1357 = vsel %vm1229, 1, 0
    %v1358 = vsel %vm1230, 1, 0
    %v1359 = vsel %vm1231, 1, 0
    %v1360 = vsel %vm1232, 1, 0
    %v1361 = vsel %vm1233, 1, 0
    %v1362 = vsel %vm1234, 1, 0
    %v1363 = vsel %vm1235, 1, 0
    %v1364 = vsel %vm1236, 1, 0
    %v1365 = vsel %vm1237, 1, 0
    %v1366 = vsel %vm1238, 1, 0
    %v1367 = vsel %vm1239, 1, 0
    %v1368 = vsel %vm1240, 1, 0
    %v1369 = vsel %vm1241, 1, 0
    %v1370 = vand.u32 %v1242, 65535
    %v1371 = vshrl.u32 %v1242, 16
    %v1372 = vcvt.s32.f32 %v1370
    %v1373 = vcvt.s32.f32 %v1371
    %1374 = vadd.xlane.f32.xlu0 %v1372
    %v1375 = vpop.xlane.xlu0 %1374
    %1376 = vadd.xlane.f32.xlu0 %v1373
    %v1377 = vpop.xlane.xlu0 %1376
    %v1378 = vcvt.f32.s32 %v1375
    %v1379 = vcvt.f32.s32 %v1377
    %v1380 = vshll.u32 %v1379, 16
    %v1381 = vadd.s32 %v1380, %v1378
    %v1382 = vand.u32 %v1243, 65535
    %v1383 = vshrl.u32 %v1243, 16
    %v1384 = vcvt.s32.f32 %v1382
    %v1385 = vcvt.s32.f32 %v1383
    %1386 = vadd.xlane.f32.xlu0 %v1384
    %v1387 = vpop.xlane.xlu0 %1386
    %1388 = vadd.xlane.f32.xlu0 %v1385
    %v1389 = vpop.xlane.xlu0 %1388
    %v1390 = vcvt.f32.s32 %v1387
    %v1391 = vcvt.f32.s32 %v1389
    %v1392 = vshll.u32 %v1391, 16
    %v1393 = vadd.s32 %v1392, %v1390
    %v1394 = vand.u32 %v1244, 65535
    %v1395 = vshrl.u32 %v1244, 16
    %v1396 = vcvt.s32.f32 %v1394
    %v1397 = vcvt.s32.f32 %v1395
    %1398 = vadd.xlane.f32.xlu0 %v1396
    %v1399 = vpop.xlane.xlu0 %1398
    %1400 = vadd.xlane.f32.xlu0 %v1397
    %v1401 = vpop.xlane.xlu0 %1400
    %v1402 = vcvt.f32.s32 %v1399
    %v1403 = vcvt.f32.s32 %v1401
    %v1404 = vshll.u32 %v1403, 16
    %v1405 = vadd.s32 %v1404, %v1402
    %v1406 = vand.u32 %v1245, 65535
    %v1407 = vshrl.u32 %v1245, 16
    %v1408 = vcvt.s32.f32 %v1406
    %v1409 = vcvt.s32.f32 %v1407
    %1410 = vadd.xlane.f32.xlu0 %v1408
    %v1411 = vpop.xlane.xlu0 %1410
    %1412 = vadd.xlane.f32.xlu0 %v1409
    %v1413 = vpop.xlane.xlu0 %1412
    %v1414 = vcvt.f32.s32 %v1411
    %v1415 = vcvt.f32.s32 %v1413
    %v1416 = vshll.u32 %v1415, 16
    %v1417 = vadd.s32 %v1416, %v1414
    %v1418 = vand.u32 %v1246, 65535
    %v1419 = vshrl.u32 %v1246, 16
    %v1420 = vcvt.s32.f32 %v1418
    %v1421 = vcvt.s32.f32 %v1419
    %1422 = vadd.xlane.f32.xlu0 %v1420
    %v1423 = vpop.xlane.xlu0 %1422
    %1424 = vadd.xlane.f32.xlu0 %v1421
    %v1425 = vpop.xlane.xlu0 %1424
    %v1426 = vcvt.f32.s32 %v1423
    %v1427 = vcvt.f32.s32 %v1425
    %v1428 = vshll.u32 %v1427, 16
    %v1429 = vadd.s32 %v1428, %v1426
    %v1430 = vand.u32 %v1247, 65535
    %v1431 = vshrl.u32 %v1247, 16
    %v1432 = vcvt.s32.f32 %v1430
    %v1433 = vcvt.s32.f32 %v1431
    %1434 = vadd.xlane.f32.xlu0 %v1432
    %v1435 = vpop.xlane.xlu0 %1434
    %1436 = vadd.xlane.f32.xlu0 %v1433
    %v1437 = vpop.xlane.xlu0 %1436
    %v1438 = vcvt.f32.s32 %v1435
    %v1439 = vcvt.f32.s32 %v1437
    %v1440 = vshll.u32 %v1439, 16
    %v1441 = vadd.s32 %v1440, %v1438
    %v1442 = vand.u32 %v1248, 65535
    %v1443 = vshrl.u32 %v1248, 16
    %v1444 = vcvt.s32.f32 %v1442
    %v1445 = vcvt.s32.f32 %v1443
    %1446 = vadd.xlane.f32.xlu0 %v1444
    %v1447 = vpop.xlane.xlu0 %1446
    %1448 = vadd.xlane.f32.xlu0 %v1445
    %v1449 = vpop.xlane.xlu0 %1448
    %v1450 = vcvt.f32.s32 %v1447
    %v1451 = vcvt.f32.s32 %v1449
    %v1452 = vshll.u32 %v1451, 16
    %v1453 = vadd.s32 %v1452, %v1450
    %v1454 = vand.u32 %v1249, 65535
    %v1455 = vshrl.u32 %v1249, 16
    %v1456 = vcvt.s32.f32 %v1454
    %v1457 = vcvt.s32.f32 %v1455
    %1458 = vadd.xlane.f32.xlu0 %v1456
    %v1459 = vpop.xlane.xlu0 %1458
    %1460 = vadd.xlane.f32.xlu0 %v1457
    %v1461 = vpop.xlane.xlu0 %1460
    %v1462 = vcvt.f32.s32 %v1459
    %v1463 = vcvt.f32.s32 %v1461
    %v1464 = vshll.u32 %v1463, 16
    %v1465 = vadd.s32 %v1464, %v1462
    %v1466 = vand.u32 %v1250, 65535
    %v1467 = vshrl.u32 %v1250, 16
    %v1468 = vcvt.s32.f32 %v1466
    %v1469 = vcvt.s32.f32 %v1467
    %1470 = vadd.xlane.f32.xlu0 %v1468
    %v1471 = vpop.xlane.xlu0 %1470
    %1472 = vadd.xlane.f32.xlu0 %v1469
    %v1473 = vpop.xlane.xlu0 %1472
    %v1474 = vcvt.f32.s32 %v1471
    %v1475 = vcvt.f32.s32 %v1473
    %v1476 = vshll.u32 %v1475, 16
    %v1477 = vadd.s32 %v1476, %v1474
    %v1478 = vand.u32 %v1251, 65535
    %v1479 = vshrl.u32 %v1251, 16
    %v1480 = vcvt.s32.f32 %v1478
    %v1481 = vcvt.s32.f32 %v1479
    %1482 = vadd.xlane.f32.xlu0 %v1480
    %v1483 = vpop.xlane.xlu0 %1482
    %1484 = vadd.xlane.f32.xlu0 %v1481
    %v1485 = vpop.xlane.xlu0 %1484
    %v1486 = vcvt.f32.s32 %v1483
    %v1487 = vcvt.f32.s32 %v1485
    %v1488 = vshll.u32 %v1487, 16
    %v1489 = vadd.s32 %v1488, %v1486
    %v1490 = vand.u32 %v1252, 65535
    %v1491 = vshrl.u32 %v1252, 16
    %v1492 = vcvt.s32.f32 %v1490
    %v1493 = vcvt.s32.f32 %v1491
    %1494 = vadd.xlane.f32.xlu0 %v1492
    %v1495 = vpop.xlane.xlu0 %1494
    %1496 = vadd.xlane.f32.xlu0 %v1493
    %v1497 = vpop.xlane.xlu0 %1496
    %v1498 = vcvt.f32.s32 %v1495
    %v1499 = vcvt.f32.s32 %v1497
    %v1500 = vshll.u32 %v1499, 16
    %v1501 = vadd.s32 %v1500, %v1498
    %v1502 = vand.u32 %v1253, 65535
    %v1503 = vshrl.u32 %v1253, 16
    %v1504 = vcvt.s32.f32 %v1502
    %v1505 = vcvt.s32.f32 %v1503
    %1506 = vadd.xlane.f32.xlu0 %v1504
    %v1507 = vpop.xlane.xlu0 %1506
    %1508 = vadd.xlane.f32.xlu0 %v1505
    %v1509 = vpop.xlane.xlu0 %1508
    %v1510 = vcvt.f32.s32 %v1507
    %v1511 = vcvt.f32.s32 %v1509
    %v1512 = vshll.u32 %v1511, 16
    %v1513 = vadd.s32 %v1512, %v1510
    %v1514 = vand.u32 %v1254, 65535
    %v1515 = vshrl.u32 %v1254, 16
    %v1516 = vcvt.s32.f32 %v1514
    %v1517 = vcvt.s32.f32 %v1515
    %1518 = vadd.xlane.f32.xlu0 %v1516
    %v1519 = vpop.xlane.xlu0 %1518
    %1520 = vadd.xlane.f32.xlu0 %v1517
    %v1521 = vpop.xlane.xlu0 %1520
    %v1522 = vcvt.f32.s32 %v1519
    %v1523 = vcvt.f32.s32 %v1521
    %v1524 = vshll.u32 %v1523, 16
    %v1525 = vadd.s32 %v1524, %v1522
    %v1526 = vand.u32 %v1255, 65535
    %v1527 = vshrl.u32 %v1255, 16
    %v1528 = vcvt.s32.f32 %v1526
    %v1529 = vcvt.s32.f32 %v1527
    %1530 = vadd.xlane.f32.xlu0 %v1528
    %v1531 = vpop.xlane.xlu0 %1530
    %1532 = vadd.xlane.f32.xlu0 %v1529
    %v1533 = vpop.xlane.xlu0 %1532
    %v1534 = vcvt.f32.s32 %v1531
    %v1535 = vcvt.f32.s32 %v1533
    %v1536 = vshll.u32 %v1535, 16
    %v1537 = vadd.s32 %v1536, %v1534
    %v1538 = vand.u32 %v1256, 65535
    %v1539 = vshrl.u32 %v1256, 16
    %v1540 = vcvt.s32.f32 %v1538
    %v1541 = vcvt.s32.f32 %v1539
    %1542 = vadd.xlane.f32.xlu0 %v1540
    %v1543 = vpop.xlane.xlu0 %1542
    %1544 = vadd.xlane.f32.xlu0 %v1541
    %v1545 = vpop.xlane.xlu0 %1544
    %v1546 = vcvt.f32.s32 %v1543
    %v1547 = vcvt.f32.s32 %v1545
    %v1548 = vshll.u32 %v1547, 16
    %v1549 = vadd.s32 %v1548, %v1546
    %v1550 = vand.u32 %v1257, 65535
    %v1551 = vshrl.u32 %v1257, 16
    %v1552 = vcvt.s32.f32 %v1550
    %v1553 = vcvt.s32.f32 %v1551
    %1554 = vadd.xlane.f32.xlu0 %v1552
    %v1555 = vpop.xlane.xlu0 %1554
    %1556 = vadd.xlane.f32.xlu0 %v1553
    %v1557 = vpop.xlane.xlu0 %1556
    %v1558 = vcvt.f32.s32 %v1555
    %v1559 = vcvt.f32.s32 %v1557
    %v1560 = vshll.u32 %v1559, 16
    %v1561 = vadd.s32 %v1560, %v1558
    %v1562 = vand.u32 %v1258, 65535
    %v1563 = vshrl.u32 %v1258, 16
    %v1564 = vcvt.s32.f32 %v1562
    %v1565 = vcvt.s32.f32 %v1563
    %1566 = vadd.xlane.f32.xlu0 %v1564
    %v1567 = vpop.xlane.xlu0 %1566
    %1568 = vadd.xlane.f32.xlu0 %v1565
    %v1569 = vpop.xlane.xlu0 %1568
    %v1570 = vcvt.f32.s32 %v1567
    %v1571 = vcvt.f32.s32 %v1569
    %v1572 = vshll.u32 %v1571, 16
    %v1573 = vadd.s32 %v1572, %v1570
    %v1574 = vand.u32 %v1259, 65535
    %v1575 = vshrl.u32 %v1259, 16
    %v1576 = vcvt.s32.f32 %v1574
    %v1577 = vcvt.s32.f32 %v1575
    %1578 = vadd.xlane.f32.xlu0 %v1576
    %v1579 = vpop.xlane.xlu0 %1578
    %1580 = vadd.xlane.f32.xlu0 %v1577
    %v1581 = vpop.xlane.xlu0 %1580
    %v1582 = vcvt.f32.s32 %v1579
    %v1583 = vcvt.f32.s32 %v1581
    %v1584 = vshll.u32 %v1583, 16
    %v1585 = vadd.s32 %v1584, %v1582
    %v1586 = vand.u32 %v1260, 65535
    %v1587 = vshrl.u32 %v1260, 16
    %v1588 = vcvt.s32.f32 %v1586
    %v1589 = vcvt.s32.f32 %v1587
    %1590 = vadd.xlane.f32.xlu0 %v1588
    %v1591 = vpop.xlane.xlu0 %1590
    %1592 = vadd.xlane.f32.xlu0 %v1589
    %v1593 = vpop.xlane.xlu0 %1592
    %v1594 = vcvt.f32.s32 %v1591
    %v1595 = vcvt.f32.s32 %v1593
    %v1596 = vshll.u32 %v1595, 16
    %v1597 = vadd.s32 %v1596, %v1594
    %v1598 = vand.u32 %v1261, 65535
    %v1599 = vshrl.u32 %v1261, 16
    %v1600 = vcvt.s32.f32 %v1598
    %v1601 = vcvt.s32.f32 %v1599
    %1602 = vadd.xlane.f32.xlu0 %v1600
    %v1603 = vpop.xlane.xlu0 %1602
    %1604 = vadd.xlane.f32.xlu0 %v1601
    %v1605 = vpop.xlane.xlu0 %1604
    %v1606 = vcvt.f32.s32 %v1603
    %v1607 = vcvt.f32.s32 %v1605
    %v1608 = vshll.u32 %v1607, 16
    %v1609 = vadd.s32 %v1608, %v1606
    %v1610 = vand.u32 %v1262, 65535
    %v1611 = vshrl.u32 %v1262, 16
    %v1612 = vcvt.s32.f32 %v1610
    %v1613 = vcvt.s32.f32 %v1611
    %1614 = vadd.xlane.f32.xlu0 %v1612
    %v1615 = vpop.xlane.xlu0 %1614
    %1616 = vadd.xlane.f32.xlu0 %v1613
    %v1617 = vpop.xlane.xlu0 %1616
    %v1618 = vcvt.f32.s32 %v1615
    %v1619 = vcvt.f32.s32 %v1617
    %v1620 = vshll.u32 %v1619, 16
    %v1621 = vadd.s32 %v1620, %v1618
    %v1622 = vand.u32 %v1263, 65535
    %v1623 = vshrl.u32 %v1263, 16
    %v1624 = vcvt.s32.f32 %v1622
    %v1625 = vcvt.s32.f32 %v1623
    %1626 = vadd.xlane.f32.xlu0 %v1624
    %v1627 = vpop.xlane.xlu0 %1626
    %1628 = vadd.xlane.f32.xlu0 %v1625
    %v1629 = vpop.xlane.xlu0 %1628
    %v1630 = vcvt.f32.s32 %v1627
    %v1631 = vcvt.f32.s32 %v1629
    %v1632 = vshll.u32 %v1631, 16
    %v1633 = vadd.s32 %v1632, %v1630
    %v1634 = vand.u32 %v1264, 65535
    %v1635 = vshrl.u32 %v1264, 16
    %v1636 = vcvt.s32.f32 %v1634
    %v1637 = vcvt.s32.f32 %v1635
    %1638 = vadd.xlane.f32.xlu0 %v1636
    %v1639 = vpop.xlane.xlu0 %1638
    %1640 = vadd.xlane.f32.xlu0 %v1637
    %v1641 = vpop.xlane.xlu0 %1640
    %v1642 = vcvt.f32.s32 %v1639
    %v1643 = vcvt.f32.s32 %v1641
    %v1644 = vshll.u32 %v1643, 16
    %v1645 = vadd.s32 %v1644, %v1642
    %v1646 = vand.u32 %v1265, 65535
    %v1647 = vshrl.u32 %v1265, 16
    %v1648 = vcvt.s32.f32 %v1646
    %v1649 = vcvt.s32.f32 %v1647
    %1650 = vadd.xlane.f32.xlu0 %v1648
    %v1651 = vpop.xlane.xlu0 %1650
    %1652 = vadd.xlane.f32.xlu0 %v1649
    %v1653 = vpop.xlane.xlu0 %1652
    %v1654 = vcvt.f32.s32 %v1651
    %v1655 = vcvt.f32.s32 %v1653
    %v1656 = vshll.u32 %v1655, 16
    %v1657 = vadd.s32 %v1656, %v1654
    %v1658 = vand.u32 %v1266, 65535
    %v1659 = vshrl.u32 %v1266, 16
    %v1660 = vcvt.s32.f32 %v1658
    %v1661 = vcvt.s32.f32 %v1659
    %1662 = vadd.xlane.f32.xlu0 %v1660
    %v1663 = vpop.xlane.xlu0 %1662
    %1664 = vadd.xlane.f32.xlu0 %v1661
    %v1665 = vpop.xlane.xlu0 %1664
    %v1666 = vcvt.f32.s32 %v1663
    %v1667 = vcvt.f32.s32 %v1665
    %v1668 = vshll.u32 %v1667, 16
    %v1669 = vadd.s32 %v1668, %v1666
    %v1670 = vand.u32 %v1267, 65535
    %v1671 = vshrl.u32 %v1267, 16
    %v1672 = vcvt.s32.f32 %v1670
    %v1673 = vcvt.s32.f32 %v1671
    %1674 = vadd.xlane.f32.xlu0 %v1672
    %v1675 = vpop.xlane.xlu0 %1674
    %1676 = vadd.xlane.f32.xlu0 %v1673
    %v1677 = vpop.xlane.xlu0 %1676
    %v1678 = vcvt.f32.s32 %v1675
    %v1679 = vcvt.f32.s32 %v1677
    %v1680 = vshll.u32 %v1679, 16
    %v1681 = vadd.s32 %v1680, %v1678
    %v1682 = vand.u32 %v1268, 65535
    %v1683 = vshrl.u32 %v1268, 16
    %v1684 = vcvt.s32.f32 %v1682
    %v1685 = vcvt.s32.f32 %v1683
    %1686 = vadd.xlane.f32.xlu0 %v1684
    %v1687 = vpop.xlane.xlu0 %1686
    %1688 = vadd.xlane.f32.xlu0 %v1685
    %v1689 = vpop.xlane.xlu0 %1688
    %v1690 = vcvt.f32.s32 %v1687
    %v1691 = vcvt.f32.s32 %v1689
    %v1692 = vshll.u32 %v1691, 16
    %v1693 = vadd.s32 %v1692, %v1690
    %v1694 = vand.u32 %v1269, 65535
    %v1695 = vshrl.u32 %v1269, 16
    %v1696 = vcvt.s32.f32 %v1694
    %v1697 = vcvt.s32.f32 %v1695
    %1698 = vadd.xlane.f32.xlu0 %v1696
    %v1699 = vpop.xlane.xlu0 %1698
    %1700 = vadd.xlane.f32.xlu0 %v1697
    %v1701 = vpop.xlane.xlu0 %1700
    %v1702 = vcvt.f32.s32 %v1699
    %v1703 = vcvt.f32.s32 %v1701
    %v1704 = vshll.u32 %v1703, 16
    %v1705 = vadd.s32 %v1704, %v1702
    %v1706 = vand.u32 %v1270, 65535
    %v1707 = vshrl.u32 %v1270, 16
    %v1708 = vcvt.s32.f32 %v1706
    %v1709 = vcvt.s32.f32 %v1707
    %1710 = vadd.xlane.f32.xlu0 %v1708
    %v1711 = vpop.xlane.xlu0 %1710
    %1712 = vadd.xlane.f32.xlu0 %v1709
    %v1713 = vpop.xlane.xlu0 %1712
    %v1714 = vcvt.f32.s32 %v1711
    %v1715 = vcvt.f32.s32 %v1713
    %v1716 = vshll.u32 %v1715, 16
    %v1717 = vadd.s32 %v1716, %v1714
    %v1718 = vand.u32 %v1271, 65535
    %v1719 = vshrl.u32 %v1271, 16
    %v1720 = vcvt.s32.f32 %v1718
    %v1721 = vcvt.s32.f32 %v1719
    %1722 = vadd.xlane.f32.xlu0 %v1720
    %v1723 = vpop.xlane.xlu0 %1722
    %1724 = vadd.xlane.f32.xlu0 %v1721
    %v1725 = vpop.xlane.xlu0 %1724
    %v1726 = vcvt.f32.s32 %v1723
    %v1727 = vcvt.f32.s32 %v1725
    %v1728 = vshll.u32 %v1727, 16
    %v1729 = vadd.s32 %v1728, %v1726
    %v1730 = vand.u32 %v1272, 65535
    %v1731 = vshrl.u32 %v1272, 16
    %v1732 = vcvt.s32.f32 %v1730
    %v1733 = vcvt.s32.f32 %v1731
    %1734 = vadd.xlane.f32.xlu0 %v1732
    %v1735 = vpop.xlane.xlu0 %1734
    %1736 = vadd.xlane.f32.xlu0 %v1733
    %v1737 = vpop.xlane.xlu0 %1736
    %v1738 = vcvt.f32.s32 %v1735
    %v1739 = vcvt.f32.s32 %v1737
    %v1740 = vshll.u32 %v1739, 16
    %v1741 = vadd.s32 %v1740, %v1738
    %v1742 = vand.u32 %v1273, 65535
    %v1743 = vshrl.u32 %v1273, 16
    %v1744 = vcvt.s32.f32 %v1742
    %v1745 = vcvt.s32.f32 %v1743
    %1746 = vadd.xlane.f32.xlu0 %v1744
    %v1747 = vpop.xlane.xlu0 %1746
    %1748 = vadd.xlane.f32.xlu0 %v1745
    %v1749 = vpop.xlane.xlu0 %1748
    %v1750 = vcvt.f32.s32 %v1747
    %v1751 = vcvt.f32.s32 %v1749
    %v1752 = vshll.u32 %v1751, 16
    %v1753 = vadd.s32 %v1752, %v1750
    %v1754 = vand.u32 %v1274, 65535
    %v1755 = vshrl.u32 %v1274, 16
    %v1756 = vcvt.s32.f32 %v1754
    %v1757 = vcvt.s32.f32 %v1755
    %1758 = vadd.xlane.f32.xlu0 %v1756
    %v1759 = vpop.xlane.xlu0 %1758
    %1760 = vadd.xlane.f32.xlu0 %v1757
    %v1761 = vpop.xlane.xlu0 %1760
    %v1762 = vcvt.f32.s32 %v1759
    %v1763 = vcvt.f32.s32 %v1761
    %v1764 = vshll.u32 %v1763, 16
    %v1765 = vadd.s32 %v1764, %v1762
    %v1766 = vand.u32 %v1275, 65535
    %v1767 = vshrl.u32 %v1275, 16
    %v1768 = vcvt.s32.f32 %v1766
    %v1769 = vcvt.s32.f32 %v1767
    %1770 = vadd.xlane.f32.xlu0 %v1768
    %v1771 = vpop.xlane.xlu0 %1770
    %1772 = vadd.xlane.f32.xlu0 %v1769
    %v1773 = vpop.xlane.xlu0 %1772
    %v1774 = vcvt.f32.s32 %v1771
    %v1775 = vcvt.f32.s32 %v1773
    %v1776 = vshll.u32 %v1775, 16
    %v1777 = vadd.s32 %v1776, %v1774
    %v1778 = vand.u32 %v1276, 65535
    %v1779 = vshrl.u32 %v1276, 16
    %v1780 = vcvt.s32.f32 %v1778
    %v1781 = vcvt.s32.f32 %v1779
    %1782 = vadd.xlane.f32.xlu0 %v1780
    %v1783 = vpop.xlane.xlu0 %1782
    %1784 = vadd.xlane.f32.xlu0 %v1781
    %v1785 = vpop.xlane.xlu0 %1784
    %v1786 = vcvt.f32.s32 %v1783
    %v1787 = vcvt.f32.s32 %v1785
    %v1788 = vshll.u32 %v1787, 16
    %v1789 = vadd.s32 %v1788, %v1786
    %v1790 = vand.u32 %v1277, 65535
    %v1791 = vshrl.u32 %v1277, 16
    %v1792 = vcvt.s32.f32 %v1790
    %v1793 = vcvt.s32.f32 %v1791
    %1794 = vadd.xlane.f32.xlu0 %v1792
    %v1795 = vpop.xlane.xlu0 %1794
    %1796 = vadd.xlane.f32.xlu0 %v1793
    %v1797 = vpop.xlane.xlu0 %1796
    %v1798 = vcvt.f32.s32 %v1795
    %v1799 = vcvt.f32.s32 %v1797
    %v1800 = vshll.u32 %v1799, 16
    %v1801 = vadd.s32 %v1800, %v1798
    %v1802 = vand.u32 %v1278, 65535
    %v1803 = vshrl.u32 %v1278, 16
    %v1804 = vcvt.s32.f32 %v1802
    %v1805 = vcvt.s32.f32 %v1803
    %1806 = vadd.xlane.f32.xlu0 %v1804
    %v1807 = vpop.xlane.xlu0 %1806
    %1808 = vadd.xlane.f32.xlu0 %v1805
    %v1809 = vpop.xlane.xlu0 %1808
    %v1810 = vcvt.f32.s32 %v1807
    %v1811 = vcvt.f32.s32 %v1809
    %v1812 = vshll.u32 %v1811, 16
    %v1813 = vadd.s32 %v1812, %v1810
    %v1814 = vand.u32 %v1279, 65535
    %v1815 = vshrl.u32 %v1279, 16
    %v1816 = vcvt.s32.f32 %v1814
    %v1817 = vcvt.s32.f32 %v1815
    %1818 = vadd.xlane.f32.xlu0 %v1816
    %v1819 = vpop.xlane.xlu0 %1818
    %1820 = vadd.xlane.f32.xlu0 %v1817
    %v1821 = vpop.xlane.xlu0 %1820
    %v1822 = vcvt.f32.s32 %v1819
    %v1823 = vcvt.f32.s32 %v1821
    %v1824 = vshll.u32 %v1823, 16
    %v1825 = vadd.s32 %v1824, %v1822
    %v1826 = vand.u32 %v1280, 65535
    %v1827 = vshrl.u32 %v1280, 16
    %v1828 = vcvt.s32.f32 %v1826
    %v1829 = vcvt.s32.f32 %v1827
    %1830 = vadd.xlane.f32.xlu0 %v1828
    %v1831 = vpop.xlane.xlu0 %1830
    %1832 = vadd.xlane.f32.xlu0 %v1829
    %v1833 = vpop.xlane.xlu0 %1832
    %v1834 = vcvt.f32.s32 %v1831
    %v1835 = vcvt.f32.s32 %v1833
    %v1836 = vshll.u32 %v1835, 16
    %v1837 = vadd.s32 %v1836, %v1834
    %v1838 = vand.u32 %v1281, 65535
    %v1839 = vshrl.u32 %v1281, 16
    %v1840 = vcvt.s32.f32 %v1838
    %v1841 = vcvt.s32.f32 %v1839
    %1842 = vadd.xlane.f32.xlu0 %v1840
    %v1843 = vpop.xlane.xlu0 %1842
    %1844 = vadd.xlane.f32.xlu0 %v1841
    %v1845 = vpop.xlane.xlu0 %1844
    %v1846 = vcvt.f32.s32 %v1843
    %v1847 = vcvt.f32.s32 %v1845
    %v1848 = vshll.u32 %v1847, 16
    %v1849 = vadd.s32 %v1848, %v1846
    %v1850 = vand.u32 %v1282, 65535
    %v1851 = vshrl.u32 %v1282, 16
    %v1852 = vcvt.s32.f32 %v1850
    %v1853 = vcvt.s32.f32 %v1851
    %1854 = vadd.xlane.f32.xlu0 %v1852
    %v1855 = vpop.xlane.xlu0 %1854
    %1856 = vadd.xlane.f32.xlu0 %v1853
    %v1857 = vpop.xlane.xlu0 %1856
    %v1858 = vcvt.f32.s32 %v1855
    %v1859 = vcvt.f32.s32 %v1857
    %v1860 = vshll.u32 %v1859, 16
    %v1861 = vadd.s32 %v1860, %v1858
    %v1862 = vand.u32 %v1283, 65535
    %v1863 = vshrl.u32 %v1283, 16
    %v1864 = vcvt.s32.f32 %v1862
    %v1865 = vcvt.s32.f32 %v1863
    %1866 = vadd.xlane.f32.xlu0 %v1864
    %v1867 = vpop.xlane.xlu0 %1866
    %1868 = vadd.xlane.f32.xlu0 %v1865
    %v1869 = vpop.xlane.xlu0 %1868
    %v1870 = vcvt.f32.s32 %v1867
    %v1871 = vcvt.f32.s32 %v1869
    %v1872 = vshll.u32 %v1871, 16
    %v1873 = vadd.s32 %v1872, %v1870
    %v1874 = vand.u32 %v1284, 65535
    %v1875 = vshrl.u32 %v1284, 16
    %v1876 = vcvt.s32.f32 %v1874
    %v1877 = vcvt.s32.f32 %v1875
    %1878 = vadd.xlane.f32.xlu0 %v1876
    %v1879 = vpop.xlane.xlu0 %1878
    %1880 = vadd.xlane.f32.xlu0 %v1877
    %v1881 = vpop.xlane.xlu0 %1880
    %v1882 = vcvt.f32.s32 %v1879
    %v1883 = vcvt.f32.s32 %v1881
    %v1884 = vshll.u32 %v1883, 16
    %v1885 = vadd.s32 %v1884, %v1882
    %v1886 = vand.u32 %v1285, 65535
    %v1887 = vshrl.u32 %v1285, 16
    %v1888 = vcvt.s32.f32 %v1886
    %v1889 = vcvt.s32.f32 %v1887
    %1890 = vadd.xlane.f32.xlu0 %v1888
    %v1891 = vpop.xlane.xlu0 %1890
    %1892 = vadd.xlane.f32.xlu0 %v1889
    %v1893 = vpop.xlane.xlu0 %1892
    %v1894 = vcvt.f32.s32 %v1891
    %v1895 = vcvt.f32.s32 %v1893
    %v1896 = vshll.u32 %v1895, 16
    %v1897 = vadd.s32 %v1896, %v1894
    %v1898 = vand.u32 %v1286, 65535
    %v1899 = vshrl.u32 %v1286, 16
    %v1900 = vcvt.s32.f32 %v1898
    %v1901 = vcvt.s32.f32 %v1899
    %1902 = vadd.xlane.f32.xlu0 %v1900
    %v1903 = vpop.xlane.xlu0 %1902
    %1904 = vadd.xlane.f32.xlu0 %v1901
    %v1905 = vpop.xlane.xlu0 %1904
    %v1906 = vcvt.f32.s32 %v1903
    %v1907 = vcvt.f32.s32 %v1905
    %v1908 = vshll.u32 %v1907, 16
    %v1909 = vadd.s32 %v1908, %v1906
    %v1910 = vand.u32 %v1287, 65535
    %v1911 = vshrl.u32 %v1287, 16
    %v1912 = vcvt.s32.f32 %v1910
    %v1913 = vcvt.s32.f32 %v1911
    %1914 = vadd.xlane.f32.xlu0 %v1912
    %v1915 = vpop.xlane.xlu0 %1914
    %1916 = vadd.xlane.f32.xlu0 %v1913
    %v1917 = vpop.xlane.xlu0 %1916
    %v1918 = vcvt.f32.s32 %v1915
    %v1919 = vcvt.f32.s32 %v1917
    %v1920 = vshll.u32 %v1919, 16
    %v1921 = vadd.s32 %v1920, %v1918
    %v1922 = vand.u32 %v1288, 65535
    %v1923 = vshrl.u32 %v1288, 16
    %v1924 = vcvt.s32.f32 %v1922
    %v1925 = vcvt.s32.f32 %v1923
    %1926 = vadd.xlane.f32.xlu0 %v1924
    %v1927 = vpop.xlane.xlu0 %1926
    %1928 = vadd.xlane.f32.xlu0 %v1925
    %v1929 = vpop.xlane.xlu0 %1928
    %v1930 = vcvt.f32.s32 %v1927
    %v1931 = vcvt.f32.s32 %v1929
    %v1932 = vshll.u32 %v1931, 16
    %v1933 = vadd.s32 %v1932, %v1930
    %v1934 = vand.u32 %v1289, 65535
    %v1935 = vshrl.u32 %v1289, 16
    %v1936 = vcvt.s32.f32 %v1934
    %v1937 = vcvt.s32.f32 %v1935
    %1938 = vadd.xlane.f32.xlu0 %v1936
    %v1939 = vpop.xlane.xlu0 %1938
    %1940 = vadd.xlane.f32.xlu0 %v1937
    %v1941 = vpop.xlane.xlu0 %1940
    %v1942 = vcvt.f32.s32 %v1939
    %v1943 = vcvt.f32.s32 %v1941
    %v1944 = vshll.u32 %v1943, 16
    %v1945 = vadd.s32 %v1944, %v1942
    %v1946 = vand.u32 %v1290, 65535
    %v1947 = vshrl.u32 %v1290, 16
    %v1948 = vcvt.s32.f32 %v1946
    %v1949 = vcvt.s32.f32 %v1947
    %1950 = vadd.xlane.f32.xlu0 %v1948
    %v1951 = vpop.xlane.xlu0 %1950
    %1952 = vadd.xlane.f32.xlu0 %v1949
    %v1953 = vpop.xlane.xlu0 %1952
    %v1954 = vcvt.f32.s32 %v1951
    %v1955 = vcvt.f32.s32 %v1953
    %v1956 = vshll.u32 %v1955, 16
    %v1957 = vadd.s32 %v1956, %v1954
    %v1958 = vand.u32 %v1291, 65535
    %v1959 = vshrl.u32 %v1291, 16
    %v1960 = vcvt.s32.f32 %v1958
    %v1961 = vcvt.s32.f32 %v1959
    %1962 = vadd.xlane.f32.xlu0 %v1960
    %v1963 = vpop.xlane.xlu0 %1962
    %1964 = vadd.xlane.f32.xlu0 %v1961
    %v1965 = vpop.xlane.xlu0 %1964
    %v1966 = vcvt.f32.s32 %v1963
    %v1967 = vcvt.f32.s32 %v1965
    %v1968 = vshll.u32 %v1967, 16
    %v1969 = vadd.s32 %v1968, %v1966
    %v1970 = vand.u32 %v1292, 65535
    %v1971 = vshrl.u32 %v1292, 16
    %v1972 = vcvt.s32.f32 %v1970
    %v1973 = vcvt.s32.f32 %v1971
    %1974 = vadd.xlane.f32.xlu0 %v1972
    %v1975 = vpop.xlane.xlu0 %1974
    %1976 = vadd.xlane.f32.xlu0 %v1973
    %v1977 = vpop.xlane.xlu0 %1976
    %v1978 = vcvt.f32.s32 %v1975
    %v1979 = vcvt.f32.s32 %v1977
    %v1980 = vshll.u32 %v1979, 16
    %v1981 = vadd.s32 %v1980, %v1978
    %v1982 = vand.u32 %v1293, 65535
    %v1983 = vshrl.u32 %v1293, 16
    %v1984 = vcvt.s32.f32 %v1982
    %v1985 = vcvt.s32.f32 %v1983
    %1986 = vadd.xlane.f32.xlu0 %v1984
    %v1987 = vpop.xlane.xlu0 %1986
    %1988 = vadd.xlane.f32.xlu0 %v1985
    %v1989 = vpop.xlane.xlu0 %1988
    %v1990 = vcvt.f32.s32 %v1987
    %v1991 = vcvt.f32.s32 %v1989
    %v1992 = vshll.u32 %v1991, 16
    %v1993 = vadd.s32 %v1992, %v1990
    %v1994 = vand.u32 %v1294, 65535
    %v1995 = vshrl.u32 %v1294, 16
    %v1996 = vcvt.s32.f32 %v1994
    %v1997 = vcvt.s32.f32 %v1995
    %1998 = vadd.xlane.f32.xlu0 %v1996
    %v1999 = vpop.xlane.xlu0 %1998
    %2000 = vadd.xlane.f32.xlu0 %v1997
    %v2001 = vpop.xlane.xlu0 %2000
    %v2002 = vcvt.f32.s32 %v1999
    %v2003 = vcvt.f32.s32 %v2001
    %v2004 = vshll.u32 %v2003, 16
    %v2005 = vadd.s32 %v2004, %v2002
    %v2006 = vand.u32 %v1295, 65535
    %v2007 = vshrl.u32 %v1295, 16
    %v2008 = vcvt.s32.f32 %v2006
    %v2009 = vcvt.s32.f32 %v2007
    %2010 = vadd.xlane.f32.xlu0 %v2008
    %v2011 = vpop.xlane.xlu0 %2010
    %2012 = vadd.xlane.f32.xlu0 %v2009
    %v2013 = vpop.xlane.xlu0 %2012
    %v2014 = vcvt.f32.s32 %v2011
    %v2015 = vcvt.f32.s32 %v2013
    %v2016 = vshll.u32 %v2015, 16
    %v2017 = vadd.s32 %v2016, %v2014
    %v2018 = vand.u32 %v1296, 65535
    %v2019 = vshrl.u32 %v1296, 16
    %v2020 = vcvt.s32.f32 %v2018
    %v2021 = vcvt.s32.f32 %v2019
    %2022 = vadd.xlane.f32.xlu0 %v2020
    %v2023 = vpop.xlane.xlu0 %2022
    %2024 = vadd.xlane.f32.xlu0 %v2021
    %v2025 = vpop.xlane.xlu0 %2024
    %v2026 = vcvt.f32.s32 %v2023
    %v2027 = vcvt.f32.s32 %v2025
    %v2028 = vshll.u32 %v2027, 16
    %v2029 = vadd.s32 %v2028, %v2026
    %v2030 = vand.u32 %v1297, 65535
    %v2031 = vshrl.u32 %v1297, 16
    %v2032 = vcvt.s32.f32 %v2030
    %v2033 = vcvt.s32.f32 %v2031
    %2034 = vadd.xlane.f32.xlu0 %v2032
    %v2035 = vpop.xlane.xlu0 %2034
    %2036 = vadd.xlane.f32.xlu0 %v2033
    %v2037 = vpop.xlane.xlu0 %2036
    %v2038 = vcvt.f32.s32 %v2035
    %v2039 = vcvt.f32.s32 %v2037
    %v2040 = vshll.u32 %v2039, 16
    %v2041 = vadd.s32 %v2040, %v2038
    %v2042 = vand.u32 %v1298, 65535
    %v2043 = vshrl.u32 %v1298, 16
    %v2044 = vcvt.s32.f32 %v2042
    %v2045 = vcvt.s32.f32 %v2043
    %2046 = vadd.xlane.f32.xlu0 %v2044
    %v2047 = vpop.xlane.xlu0 %2046
    %2048 = vadd.xlane.f32.xlu0 %v2045
    %v2049 = vpop.xlane.xlu0 %2048
    %v2050 = vcvt.f32.s32 %v2047
    %v2051 = vcvt.f32.s32 %v2049
    %v2052 = vshll.u32 %v2051, 16
    %v2053 = vadd.s32 %v2052, %v2050
    %v2054 = vand.u32 %v1299, 65535
    %v2055 = vshrl.u32 %v1299, 16
    %v2056 = vcvt.s32.f32 %v2054
    %v2057 = vcvt.s32.f32 %v2055
    %2058 = vadd.xlane.f32.xlu0 %v2056
    %v2059 = vpop.xlane.xlu0 %2058
    %2060 = vadd.xlane.f32.xlu0 %v2057
    %v2061 = vpop.xlane.xlu0 %2060
    %v2062 = vcvt.f32.s32 %v2059
    %v2063 = vcvt.f32.s32 %v2061
    %v2064 = vshll.u32 %v2063, 16
    %v2065 = vadd.s32 %v2064, %v2062
    %v2066 = vand.u32 %v1300, 65535
    %v2067 = vshrl.u32 %v1300, 16
    %v2068 = vcvt.s32.f32 %v2066
    %v2069 = vcvt.s32.f32 %v2067
    %2070 = vadd.xlane.f32.xlu0 %v2068
    %v2071 = vpop.xlane.xlu0 %2070
    %2072 = vadd.xlane.f32.xlu0 %v2069
    %v2073 = vpop.xlane.xlu0 %2072
    %v2074 = vcvt.f32.s32 %v2071
    %v2075 = vcvt.f32.s32 %v2073
    %v2076 = vshll.u32 %v2075, 16
    %v2077 = vadd.s32 %v2076, %v2074
    %v2078 = vand.u32 %v1301, 65535
    %v2079 = vshrl.u32 %v1301, 16
    %v2080 = vcvt.s32.f32 %v2078
    %v2081 = vcvt.s32.f32 %v2079
    %2082 = vadd.xlane.f32.xlu0 %v2080
    %v2083 = vpop.xlane.xlu0 %2082
    %2084 = vadd.xlane.f32.xlu0 %v2081
    %v2085 = vpop.xlane.xlu0 %2084
    %v2086 = vcvt.f32.s32 %v2083
    %v2087 = vcvt.f32.s32 %v2085
    %v2088 = vshll.u32 %v2087, 16
    %v2089 = vadd.s32 %v2088, %v2086
    %v2090 = vand.u32 %v1302, 65535
    %v2091 = vshrl.u32 %v1302, 16
    %v2092 = vcvt.s32.f32 %v2090
    %v2093 = vcvt.s32.f32 %v2091
    %2094 = vadd.xlane.f32.xlu0 %v2092
    %v2095 = vpop.xlane.xlu0 %2094
    %2096 = vadd.xlane.f32.xlu0 %v2093
    %v2097 = vpop.xlane.xlu0 %2096
    %v2098 = vcvt.f32.s32 %v2095
    %v2099 = vcvt.f32.s32 %v2097
    %v2100 = vshll.u32 %v2099, 16
    %v2101 = vadd.s32 %v2100, %v2098
    %v2102 = vand.u32 %v1303, 65535
    %v2103 = vshrl.u32 %v1303, 16
    %v2104 = vcvt.s32.f32 %v2102
    %v2105 = vcvt.s32.f32 %v2103
    %2106 = vadd.xlane.f32.xlu0 %v2104
    %v2107 = vpop.xlane.xlu0 %2106
    %2108 = vadd.xlane.f32.xlu0 %v2105
    %v2109 = vpop.xlane.xlu0 %2108
    %v2110 = vcvt.f32.s32 %v2107
    %v2111 = vcvt.f32.s32 %v2109
    %v2112 = vshll.u32 %v2111, 16
    %v2113 = vadd.s32 %v2112, %v2110
    %v2114 = vand.u32 %v1304, 65535
    %v2115 = vshrl.u32 %v1304, 16
    %v2116 = vcvt.s32.f32 %v2114
    %v2117 = vcvt.s32.f32 %v2115
    %2118 = vadd.xlane.f32.xlu0 %v2116
    %v2119 = vpop.xlane.xlu0 %2118
    %2120 = vadd.xlane.f32.xlu0 %v2117
    %v2121 = vpop.xlane.xlu0 %2120
    %v2122 = vcvt.f32.s32 %v2119
    %v2123 = vcvt.f32.s32 %v2121
    %v2124 = vshll.u32 %v2123, 16
    %v2125 = vadd.s32 %v2124, %v2122
    %v2126 = vand.u32 %v1305, 65535
    %v2127 = vshrl.u32 %v1305, 16
    %v2128 = vcvt.s32.f32 %v2126
    %v2129 = vcvt.s32.f32 %v2127
    %2130 = vadd.xlane.f32.xlu0 %v2128
    %v2131 = vpop.xlane.xlu0 %2130
    %2132 = vadd.xlane.f32.xlu0 %v2129
    %v2133 = vpop.xlane.xlu0 %2132
    %v2134 = vcvt.f32.s32 %v2131
    %v2135 = vcvt.f32.s32 %v2133
    %v2136 = vshll.u32 %v2135, 16
    %v2137 = vadd.s32 %v2136, %v2134
    %v2138 = vand.u32 %v1306, 65535
    %v2139 = vshrl.u32 %v1306, 16
    %v2140 = vcvt.s32.f32 %v2138
    %v2141 = vcvt.s32.f32 %v2139
    %2142 = vadd.xlane.f32.xlu0 %v2140
    %v2143 = vpop.xlane.xlu0 %2142
    %2144 = vadd.xlane.f32.xlu0 %v2141
    %v2145 = vpop.xlane.xlu0 %2144
    %v2146 = vcvt.f32.s32 %v2143
    %v2147 = vcvt.f32.s32 %v2145
    %v2148 = vshll.u32 %v2147, 16
    %v2149 = vadd.s32 %v2148, %v2146
    %v2150 = vand.u32 %v1307, 65535
    %v2151 = vshrl.u32 %v1307, 16
    %v2152 = vcvt.s32.f32 %v2150
    %v2153 = vcvt.s32.f32 %v2151
    %2154 = vadd.xlane.f32.xlu0 %v2152
    %v2155 = vpop.xlane.xlu0 %2154
    %2156 = vadd.xlane.f32.xlu0 %v2153
    %v2157 = vpop.xlane.xlu0 %2156
    %v2158 = vcvt.f32.s32 %v2155
    %v2159 = vcvt.f32.s32 %v2157
    %v2160 = vshll.u32 %v2159, 16
    %v2161 = vadd.s32 %v2160, %v2158
    %v2162 = vand.u32 %v1308, 65535
    %v2163 = vshrl.u32 %v1308, 16
    %v2164 = vcvt.s32.f32 %v2162
    %v2165 = vcvt.s32.f32 %v2163
    %2166 = vadd.xlane.f32.xlu0 %v2164
    %v2167 = vpop.xlane.xlu0 %2166
    %2168 = vadd.xlane.f32.xlu0 %v2165
    %v2169 = vpop.xlane.xlu0 %2168
    %v2170 = vcvt.f32.s32 %v2167
    %v2171 = vcvt.f32.s32 %v2169
    %v2172 = vshll.u32 %v2171, 16
    %v2173 = vadd.s32 %v2172, %v2170
    %v2174 = vand.u32 %v1309, 65535
    %v2175 = vshrl.u32 %v1309, 16
    %v2176 = vcvt.s32.f32 %v2174
    %v2177 = vcvt.s32.f32 %v2175
    %2178 = vadd.xlane.f32.xlu0 %v2176
    %v2179 = vpop.xlane.xlu0 %2178
    %2180 = vadd.xlane.f32.xlu0 %v2177
    %v2181 = vpop.xlane.xlu0 %2180
    %v2182 = vcvt.f32.s32 %v2179
    %v2183 = vcvt.f32.s32 %v2181
    %v2184 = vshll.u32 %v2183, 16
    %v2185 = vadd.s32 %v2184, %v2182
    %v2186 = vand.u32 %v1310, 65535
    %v2187 = vshrl.u32 %v1310, 16
    %v2188 = vcvt.s32.f32 %v2186
    %v2189 = vcvt.s32.f32 %v2187
    %2190 = vadd.xlane.f32.xlu0 %v2188
    %v2191 = vpop.xlane.xlu0 %2190
    %2192 = vadd.xlane.f32.xlu0 %v2189
    %v2193 = vpop.xlane.xlu0 %2192
    %v2194 = vcvt.f32.s32 %v2191
    %v2195 = vcvt.f32.s32 %v2193
    %v2196 = vshll.u32 %v2195, 16
    %v2197 = vadd.s32 %v2196, %v2194
    %v2198 = vand.u32 %v1311, 65535
    %v2199 = vshrl.u32 %v1311, 16
    %v2200 = vcvt.s32.f32 %v2198
    %v2201 = vcvt.s32.f32 %v2199
    %2202 = vadd.xlane.f32.xlu0 %v2200
    %v2203 = vpop.xlane.xlu0 %2202
    %2204 = vadd.xlane.f32.xlu0 %v2201
    %v2205 = vpop.xlane.xlu0 %2204
    %v2206 = vcvt.f32.s32 %v2203
    %v2207 = vcvt.f32.s32 %v2205
    %v2208 = vshll.u32 %v2207, 16
    %v2209 = vadd.s32 %v2208, %v2206
    %v2210 = vand.u32 %v1312, 65535
    %v2211 = vshrl.u32 %v1312, 16
    %v2212 = vcvt.s32.f32 %v2210
    %v2213 = vcvt.s32.f32 %v2211
    %2214 = vadd.xlane.f32.xlu0 %v2212
    %v2215 = vpop.xlane.xlu0 %2214
    %2216 = vadd.xlane.f32.xlu0 %v2213
    %v2217 = vpop.xlane.xlu0 %2216
    %v2218 = vcvt.f32.s32 %v2215
    %v2219 = vcvt.f32.s32 %v2217
    %v2220 = vshll.u32 %v2219, 16
    %v2221 = vadd.s32 %v2220, %v2218
    %v2222 = vand.u32 %v1313, 65535
    %v2223 = vshrl.u32 %v1313, 16
    %v2224 = vcvt.s32.f32 %v2222
    %v2225 = vcvt.s32.f32 %v2223
    %2226 = vadd.xlane.f32.xlu0 %v2224
    %v2227 = vpop.xlane.xlu0 %2226
    %2228 = vadd.xlane.f32.xlu0 %v2225
    %v2229 = vpop.xlane.xlu0 %2228
    %v2230 = vcvt.f32.s32 %v2227
    %v2231 = vcvt.f32.s32 %v2229
    %v2232 = vshll.u32 %v2231, 16
    %v2233 = vadd.s32 %v2232, %v2230
    %v2234 = vand.u32 %v1314, 65535
    %v2235 = vshrl.u32 %v1314, 16
    %v2236 = vcvt.s32.f32 %v2234
    %v2237 = vcvt.s32.f32 %v2235
    %2238 = vadd.xlane.f32.xlu0 %v2236
    %v2239 = vpop.xlane.xlu0 %2238
    %2240 = vadd.xlane.f32.xlu0 %v2237
    %v2241 = vpop.xlane.xlu0 %2240
    %v2242 = vcvt.f32.s32 %v2239
    %v2243 = vcvt.f32.s32 %v2241
    %v2244 = vshll.u32 %v2243, 16
    %v2245 = vadd.s32 %v2244, %v2242
    %v2246 = vand.u32 %v1315, 65535
    %v2247 = vshrl.u32 %v1315, 16
    %v2248 = vcvt.s32.f32 %v2246
    %v2249 = vcvt.s32.f32 %v2247
    %2250 = vadd.xlane.f32.xlu0 %v2248
    %v2251 = vpop.xlane.xlu0 %2250
    %2252 = vadd.xlane.f32.xlu0 %v2249
    %v2253 = vpop.xlane.xlu0 %2252
    %v2254 = vcvt.f32.s32 %v2251
    %v2255 = vcvt.f32.s32 %v2253
    %v2256 = vshll.u32 %v2255, 16
    %v2257 = vadd.s32 %v2256, %v2254
    %v2258 = vand.u32 %v1316, 65535
    %v2259 = vshrl.u32 %v1316, 16
    %v2260 = vcvt.s32.f32 %v2258
    %v2261 = vcvt.s32.f32 %v2259
    %2262 = vadd.xlane.f32.xlu0 %v2260
    %v2263 = vpop.xlane.xlu0 %2262
    %2264 = vadd.xlane.f32.xlu0 %v2261
    %v2265 = vpop.xlane.xlu0 %2264
    %v2266 = vcvt.f32.s32 %v2263
    %v2267 = vcvt.f32.s32 %v2265
    %v2268 = vshll.u32 %v2267, 16
    %v2269 = vadd.s32 %v2268, %v2266
    %v2270 = vand.u32 %v1317, 65535
    %v2271 = vshrl.u32 %v1317, 16
    %v2272 = vcvt.s32.f32 %v2270
    %v2273 = vcvt.s32.f32 %v2271
    %2274 = vadd.xlane.f32.xlu0 %v2272
    %v2275 = vpop.xlane.xlu0 %2274
    %2276 = vadd.xlane.f32.xlu0 %v2273
    %v2277 = vpop.xlane.xlu0 %2276
    %v2278 = vcvt.f32.s32 %v2275
    %v2279 = vcvt.f32.s32 %v2277
    %v2280 = vshll.u32 %v2279, 16
    %v2281 = vadd.s32 %v2280, %v2278
    %v2282 = vand.u32 %v1318, 65535
    %v2283 = vshrl.u32 %v1318, 16
    %v2284 = vcvt.s32.f32 %v2282
    %v2285 = vcvt.s32.f32 %v2283
    %2286 = vadd.xlane.f32.xlu0 %v2284
    %v2287 = vpop.xlane.xlu0 %2286
    %2288 = vadd.xlane.f32.xlu0 %v2285
    %v2289 = vpop.xlane.xlu0 %2288
    %v2290 = vcvt.f32.s32 %v2287
    %v2291 = vcvt.f32.s32 %v2289
    %v2292 = vshll.u32 %v2291, 16
    %v2293 = vadd.s32 %v2292, %v2290
    %v2294 = vand.u32 %v1319, 65535
    %v2295 = vshrl.u32 %v1319, 16
    %v2296 = vcvt.s32.f32 %v2294
    %v2297 = vcvt.s32.f32 %v2295
    %2298 = vadd.xlane.f32.xlu0 %v2296
    %v2299 = vpop.xlane.xlu0 %2298
    %2300 = vadd.xlane.f32.xlu0 %v2297
    %v2301 = vpop.xlane.xlu0 %2300
    %v2302 = vcvt.f32.s32 %v2299
    %v2303 = vcvt.f32.s32 %v2301
    %v2304 = vshll.u32 %v2303, 16
    %v2305 = vadd.s32 %v2304, %v2302
    %v2306 = vand.u32 %v1320, 65535
    %v2307 = vshrl.u32 %v1320, 16
    %v2308 = vcvt.s32.f32 %v2306
    %v2309 = vcvt.s32.f32 %v2307
    %2310 = vadd.xlane.f32.xlu0 %v2308
    %v2311 = vpop.xlane.xlu0 %2310
    %2312 = vadd.xlane.f32.xlu0 %v2309
    %v2313 = vpop.xlane.xlu0 %2312
    %v2314 = vcvt.f32.s32 %v2311
    %v2315 = vcvt.f32.s32 %v2313
    %v2316 = vshll.u32 %v2315, 16
    %v2317 = vadd.s32 %v2316, %v2314
    %v2318 = vand.u32 %v1321, 65535
    %v2319 = vshrl.u32 %v1321, 16
    %v2320 = vcvt.s32.f32 %v2318
    %v2321 = vcvt.s32.f32 %v2319
    %2322 = vadd.xlane.f32.xlu0 %v2320
    %v2323 = vpop.xlane.xlu0 %2322
    %2324 = vadd.xlane.f32.xlu0 %v2321
    %v2325 = vpop.xlane.xlu0 %2324
    %v2326 = vcvt.f32.s32 %v2323
    %v2327 = vcvt.f32.s32 %v2325
    %v2328 = vshll.u32 %v2327, 16
    %v2329 = vadd.s32 %v2328, %v2326
    %v2330 = vand.u32 %v1322, 65535
    %v2331 = vshrl.u32 %v1322, 16
    %v2332 = vcvt.s32.f32 %v2330
    %v2333 = vcvt.s32.f32 %v2331
    %2334 = vadd.xlane.f32.xlu0 %v2332
    %v2335 = vpop.xlane.xlu0 %2334
    %2336 = vadd.xlane.f32.xlu0 %v2333
    %v2337 = vpop.xlane.xlu0 %2336
    %v2338 = vcvt.f32.s32 %v2335
    %v2339 = vcvt.f32.s32 %v2337
    %v2340 = vshll.u32 %v2339, 16
    %v2341 = vadd.s32 %v2340, %v2338
    %v2342 = vand.u32 %v1323, 65535
    %v2343 = vshrl.u32 %v1323, 16
    %v2344 = vcvt.s32.f32 %v2342
    %v2345 = vcvt.s32.f32 %v2343
    %2346 = vadd.xlane.f32.xlu0 %v2344
    %v2347 = vpop.xlane.xlu0 %2346
    %2348 = vadd.xlane.f32.xlu0 %v2345
    %v2349 = vpop.xlane.xlu0 %2348
    %v2350 = vcvt.f32.s32 %v2347
    %v2351 = vcvt.f32.s32 %v2349
    %v2352 = vshll.u32 %v2351, 16
    %v2353 = vadd.s32 %v2352, %v2350
    %v2354 = vand.u32 %v1324, 65535
    %v2355 = vshrl.u32 %v1324, 16
    %v2356 = vcvt.s32.f32 %v2354
    %v2357 = vcvt.s32.f32 %v2355
    %2358 = vadd.xlane.f32.xlu0 %v2356
    %v2359 = vpop.xlane.xlu0 %2358
    %2360 = vadd.xlane.f32.xlu0 %v2357
    %v2361 = vpop.xlane.xlu0 %2360
    %v2362 = vcvt.f32.s32 %v2359
    %v2363 = vcvt.f32.s32 %v2361
    %v2364 = vshll.u32 %v2363, 16
    %v2365 = vadd.s32 %v2364, %v2362
    %v2366 = vand.u32 %v1325, 65535
    %v2367 = vshrl.u32 %v1325, 16
    %v2368 = vcvt.s32.f32 %v2366
    %v2369 = vcvt.s32.f32 %v2367
    %2370 = vadd.xlane.f32.xlu0 %v2368
    %v2371 = vpop.xlane.xlu0 %2370
    %2372 = vadd.xlane.f32.xlu0 %v2369
    %v2373 = vpop.xlane.xlu0 %2372
    %v2374 = vcvt.f32.s32 %v2371
    %v2375 = vcvt.f32.s32 %v2373
    %v2376 = vshll.u32 %v2375, 16
    %v2377 = vadd.s32 %v2376, %v2374
    %v2378 = vand.u32 %v1326, 65535
    %v2379 = vshrl.u32 %v1326, 16
    %v2380 = vcvt.s32.f32 %v2378
    %v2381 = vcvt.s32.f32 %v2379
    %2382 = vadd.xlane.f32.xlu0 %v2380
    %v2383 = vpop.xlane.xlu0 %2382
    %2384 = vadd.xlane.f32.xlu0 %v2381
    %v2385 = vpop.xlane.xlu0 %2384
    %v2386 = vcvt.f32.s32 %v2383
    %v2387 = vcvt.f32.s32 %v2385
    %v2388 = vshll.u32 %v2387, 16
    %v2389 = vadd.s32 %v2388, %v2386
    %v2390 = vand.u32 %v1327, 65535
    %v2391 = vshrl.u32 %v1327, 16
    %v2392 = vcvt.s32.f32 %v2390
    %v2393 = vcvt.s32.f32 %v2391
    %2394 = vadd.xlane.f32.xlu0 %v2392
    %v2395 = vpop.xlane.xlu0 %2394
    %2396 = vadd.xlane.f32.xlu0 %v2393
    %v2397 = vpop.xlane.xlu0 %2396
    %v2398 = vcvt.f32.s32 %v2395
    %v2399 = vcvt.f32.s32 %v2397
    %v2400 = vshll.u32 %v2399, 16
    %v2401 = vadd.s32 %v2400, %v2398
    %v2402 = vand.u32 %v1328, 65535
    %v2403 = vshrl.u32 %v1328, 16
    %v2404 = vcvt.s32.f32 %v2402
    %v2405 = vcvt.s32.f32 %v2403
    %2406 = vadd.xlane.f32.xlu0 %v2404
    %v2407 = vpop.xlane.xlu0 %2406
    %2408 = vadd.xlane.f32.xlu0 %v2405
    %v2409 = vpop.xlane.xlu0 %2408
    %v2410 = vcvt.f32.s32 %v2407
    %v2411 = vcvt.f32.s32 %v2409
    %v2412 = vshll.u32 %v2411, 16
    %v2413 = vadd.s32 %v2412, %v2410
    %v2414 = vand.u32 %v1329, 65535
    %v2415 = vshrl.u32 %v1329, 16
    %v2416 = vcvt.s32.f32 %v2414
    %v2417 = vcvt.s32.f32 %v2415
    %2418 = vadd.xlane.f32.xlu0 %v2416
    %v2419 = vpop.xlane.xlu0 %2418
    %2420 = vadd.xlane.f32.xlu0 %v2417
    %v2421 = vpop.xlane.xlu0 %2420
    %v2422 = vcvt.f32.s32 %v2419
    %v2423 = vcvt.f32.s32 %v2421
    %v2424 = vshll.u32 %v2423, 16
    %v2425 = vadd.s32 %v2424, %v2422
    %v2426 = vand.u32 %v1330, 65535
    %v2427 = vshrl.u32 %v1330, 16
    %v2428 = vcvt.s32.f32 %v2426
    %v2429 = vcvt.s32.f32 %v2427
    %2430 = vadd.xlane.f32.xlu0 %v2428
    %v2431 = vpop.xlane.xlu0 %2430
    %2432 = vadd.xlane.f32.xlu0 %v2429
    %v2433 = vpop.xlane.xlu0 %2432
    %v2434 = vcvt.f32.s32 %v2431
    %v2435 = vcvt.f32.s32 %v2433
    %v2436 = vshll.u32 %v2435, 16
    %v2437 = vadd.s32 %v2436, %v2434
    %v2438 = vand.u32 %v1331, 65535
    %v2439 = vshrl.u32 %v1331, 16
    %v2440 = vcvt.s32.f32 %v2438
    %v2441 = vcvt.s32.f32 %v2439
    %2442 = vadd.xlane.f32.xlu0 %v2440
    %v2443 = vpop.xlane.xlu0 %2442
    %2444 = vadd.xlane.f32.xlu0 %v2441
    %v2445 = vpop.xlane.xlu0 %2444
    %v2446 = vcvt.f32.s32 %v2443
    %v2447 = vcvt.f32.s32 %v2445
    %v2448 = vshll.u32 %v2447, 16
    %v2449 = vadd.s32 %v2448, %v2446
    %v2450 = vand.u32 %v1332, 65535
    %v2451 = vshrl.u32 %v1332, 16
    %v2452 = vcvt.s32.f32 %v2450
    %v2453 = vcvt.s32.f32 %v2451
    %2454 = vadd.xlane.f32.xlu0 %v2452
    %v2455 = vpop.xlane.xlu0 %2454
    %2456 = vadd.xlane.f32.xlu0 %v2453
    %v2457 = vpop.xlane.xlu0 %2456
    %v2458 = vcvt.f32.s32 %v2455
    %v2459 = vcvt.f32.s32 %v2457
    %v2460 = vshll.u32 %v2459, 16
    %v2461 = vadd.s32 %v2460, %v2458
    %v2462 = vand.u32 %v1333, 65535
    %v2463 = vshrl.u32 %v1333, 16
    %v2464 = vcvt.s32.f32 %v2462
    %v2465 = vcvt.s32.f32 %v2463
    %2466 = vadd.xlane.f32.xlu0 %v2464
    %v2467 = vpop.xlane.xlu0 %2466
    %2468 = vadd.xlane.f32.xlu0 %v2465
    %v2469 = vpop.xlane.xlu0 %2468
    %v2470 = vcvt.f32.s32 %v2467
    %v2471 = vcvt.f32.s32 %v2469
    %v2472 = vshll.u32 %v2471, 16
    %v2473 = vadd.s32 %v2472, %v2470
    %v2474 = vand.u32 %v1334, 65535
    %v2475 = vshrl.u32 %v1334, 16
    %v2476 = vcvt.s32.f32 %v2474
    %v2477 = vcvt.s32.f32 %v2475
    %2478 = vadd.xlane.f32.xlu0 %v2476
    %v2479 = vpop.xlane.xlu0 %2478
    %2480 = vadd.xlane.f32.xlu0 %v2477
    %v2481 = vpop.xlane.xlu0 %2480
    %v2482 = vcvt.f32.s32 %v2479
    %v2483 = vcvt.f32.s32 %v2481
    %v2484 = vshll.u32 %v2483, 16
    %v2485 = vadd.s32 %v2484, %v2482
    %v2486 = vand.u32 %v1335, 65535
    %v2487 = vshrl.u32 %v1335, 16
    %v2488 = vcvt.s32.f32 %v2486
    %v2489 = vcvt.s32.f32 %v2487
    %2490 = vadd.xlane.f32.xlu0 %v2488
    %v2491 = vpop.xlane.xlu0 %2490
    %2492 = vadd.xlane.f32.xlu0 %v2489
    %v2493 = vpop.xlane.xlu0 %2492
    %v2494 = vcvt.f32.s32 %v2491
    %v2495 = vcvt.f32.s32 %v2493
    %v2496 = vshll.u32 %v2495, 16
    %v2497 = vadd.s32 %v2496, %v2494
    %v2498 = vand.u32 %v1336, 65535
    %v2499 = vshrl.u32 %v1336, 16
    %v2500 = vcvt.s32.f32 %v2498
    %v2501 = vcvt.s32.f32 %v2499
    %2502 = vadd.xlane.f32.xlu0 %v2500
    %v2503 = vpop.xlane.xlu0 %2502
    %2504 = vadd.xlane.f32.xlu0 %v2501
    %v2505 = vpop.xlane.xlu0 %2504
    %v2506 = vcvt.f32.s32 %v2503
    %v2507 = vcvt.f32.s32 %v2505
    %v2508 = vshll.u32 %v2507, 16
    %v2509 = vadd.s32 %v2508, %v2506
    %v2510 = vand.u32 %v1337, 65535
    %v2511 = vshrl.u32 %v1337, 16
    %v2512 = vcvt.s32.f32 %v2510
    %v2513 = vcvt.s32.f32 %v2511
    %2514 = vadd.xlane.f32.xlu0 %v2512
    %v2515 = vpop.xlane.xlu0 %2514
    %2516 = vadd.xlane.f32.xlu0 %v2513
    %v2517 = vpop.xlane.xlu0 %2516
    %v2518 = vcvt.f32.s32 %v2515
    %v2519 = vcvt.f32.s32 %v2517
    %v2520 = vshll.u32 %v2519, 16
    %v2521 = vadd.s32 %v2520, %v2518
    %v2522 = vand.u32 %v1338, 65535
    %v2523 = vshrl.u32 %v1338, 16
    %v2524 = vcvt.s32.f32 %v2522
    %v2525 = vcvt.s32.f32 %v2523
    %2526 = vadd.xlane.f32.xlu0 %v2524
    %v2527 = vpop.xlane.xlu0 %2526
    %2528 = vadd.xlane.f32.xlu0 %v2525
    %v2529 = vpop.xlane.xlu0 %2528
    %v2530 = vcvt.f32.s32 %v2527
    %v2531 = vcvt.f32.s32 %v2529
    %v2532 = vshll.u32 %v2531, 16
    %v2533 = vadd.s32 %v2532, %v2530
    %v2534 = vand.u32 %v1339, 65535
    %v2535 = vshrl.u32 %v1339, 16
    %v2536 = vcvt.s32.f32 %v2534
    %v2537 = vcvt.s32.f32 %v2535
    %2538 = vadd.xlane.f32.xlu0 %v2536
    %v2539 = vpop.xlane.xlu0 %2538
    %2540 = vadd.xlane.f32.xlu0 %v2537
    %v2541 = vpop.xlane.xlu0 %2540
    %v2542 = vcvt.f32.s32 %v2539
    %v2543 = vcvt.f32.s32 %v2541
    %v2544 = vshll.u32 %v2543, 16
    %v2545 = vadd.s32 %v2544, %v2542
    %v2546 = vand.u32 %v1340, 65535
    %v2547 = vshrl.u32 %v1340, 16
    %v2548 = vcvt.s32.f32 %v2546
    %v2549 = vcvt.s32.f32 %v2547
    %2550 = vadd.xlane.f32.xlu0 %v2548
    %v2551 = vpop.xlane.xlu0 %2550
    %2552 = vadd.xlane.f32.xlu0 %v2549
    %v2553 = vpop.xlane.xlu0 %2552
    %v2554 = vcvt.f32.s32 %v2551
    %v2555 = vcvt.f32.s32 %v2553
    %v2556 = vshll.u32 %v2555, 16
    %v2557 = vadd.s32 %v2556, %v2554
    %v2558 = vand.u32 %v1341, 65535
    %v2559 = vshrl.u32 %v1341, 16
    %v2560 = vcvt.s32.f32 %v2558
    %v2561 = vcvt.s32.f32 %v2559
    %2562 = vadd.xlane.f32.xlu0 %v2560
    %v2563 = vpop.xlane.xlu0 %2562
    %2564 = vadd.xlane.f32.xlu0 %v2561
    %v2565 = vpop.xlane.xlu0 %2564
    %v2566 = vcvt.f32.s32 %v2563
    %v2567 = vcvt.f32.s32 %v2565
    %v2568 = vshll.u32 %v2567, 16
    %v2569 = vadd.s32 %v2568, %v2566
    %v2570 = vand.u32 %v1342, 65535
    %v2571 = vshrl.u32 %v1342, 16
    %v2572 = vcvt.s32.f32 %v2570
    %v2573 = vcvt.s32.f32 %v2571
    %2574 = vadd.xlane.f32.xlu0 %v2572
    %v2575 = vpop.xlane.xlu0 %2574
    %2576 = vadd.xlane.f32.xlu0 %v2573
    %v2577 = vpop.xlane.xlu0 %2576
    %v2578 = vcvt.f32.s32 %v2575
    %v2579 = vcvt.f32.s32 %v2577
    %v2580 = vshll.u32 %v2579, 16
    %v2581 = vadd.s32 %v2580, %v2578
    %v2582 = vand.u32 %v1343, 65535
    %v2583 = vshrl.u32 %v1343, 16
    %v2584 = vcvt.s32.f32 %v2582
    %v2585 = vcvt.s32.f32 %v2583
    %2586 = vadd.xlane.f32.xlu0 %v2584
    %v2587 = vpop.xlane.xlu0 %2586
    %2588 = vadd.xlane.f32.xlu0 %v2585
    %v2589 = vpop.xlane.xlu0 %2588
    %v2590 = vcvt.f32.s32 %v2587
    %v2591 = vcvt.f32.s32 %v2589
    %v2592 = vshll.u32 %v2591, 16
    %v2593 = vadd.s32 %v2592, %v2590
    %v2594 = vand.u32 %v1344, 65535
    %v2595 = vshrl.u32 %v1344, 16
    %v2596 = vcvt.s32.f32 %v2594
    %v2597 = vcvt.s32.f32 %v2595
    %2598 = vadd.xlane.f32.xlu0 %v2596
    %v2599 = vpop.xlane.xlu0 %2598
    %2600 = vadd.xlane.f32.xlu0 %v2597
    %v2601 = vpop.xlane.xlu0 %2600
    %v2602 = vcvt.f32.s32 %v2599
    %v2603 = vcvt.f32.s32 %v2601
    %v2604 = vshll.u32 %v2603, 16
    %v2605 = vadd.s32 %v2604, %v2602
    %v2606 = vand.u32 %v1345, 65535
    %v2607 = vshrl.u32 %v1345, 16
    %v2608 = vcvt.s32.f32 %v2606
    %v2609 = vcvt.s32.f32 %v2607
    %2610 = vadd.xlane.f32.xlu0 %v2608
    %v2611 = vpop.xlane.xlu0 %2610
    %2612 = vadd.xlane.f32.xlu0 %v2609
    %v2613 = vpop.xlane.xlu0 %2612
    %v2614 = vcvt.f32.s32 %v2611
    %v2615 = vcvt.f32.s32 %v2613
    %v2616 = vshll.u32 %v2615, 16
    %v2617 = vadd.s32 %v2616, %v2614
    %v2618 = vand.u32 %v1346, 65535
    %v2619 = vshrl.u32 %v1346, 16
    %v2620 = vcvt.s32.f32 %v2618
    %v2621 = vcvt.s32.f32 %v2619
    %2622 = vadd.xlane.f32.xlu0 %v2620
    %v2623 = vpop.xlane.xlu0 %2622
    %2624 = vadd.xlane.f32.xlu0 %v2621
    %v2625 = vpop.xlane.xlu0 %2624
    %v2626 = vcvt.f32.s32 %v2623
    %v2627 = vcvt.f32.s32 %v2625
    %v2628 = vshll.u32 %v2627, 16
    %v2629 = vadd.s32 %v2628, %v2626
    %v2630 = vand.u32 %v1347, 65535
    %v2631 = vshrl.u32 %v1347, 16
    %v2632 = vcvt.s32.f32 %v2630
    %v2633 = vcvt.s32.f32 %v2631
    %2634 = vadd.xlane.f32.xlu0 %v2632
    %v2635 = vpop.xlane.xlu0 %2634
    %2636 = vadd.xlane.f32.xlu0 %v2633
    %v2637 = vpop.xlane.xlu0 %2636
    %v2638 = vcvt.f32.s32 %v2635
    %v2639 = vcvt.f32.s32 %v2637
    %v2640 = vshll.u32 %v2639, 16
    %v2641 = vadd.s32 %v2640, %v2638
    %v2642 = vand.u32 %v1348, 65535
    %v2643 = vshrl.u32 %v1348, 16
    %v2644 = vcvt.s32.f32 %v2642
    %v2645 = vcvt.s32.f32 %v2643
    %2646 = vadd.xlane.f32.xlu0 %v2644
    %v2647 = vpop.xlane.xlu0 %2646
    %2648 = vadd.xlane.f32.xlu0 %v2645
    %v2649 = vpop.xlane.xlu0 %2648
    %v2650 = vcvt.f32.s32 %v2647
    %v2651 = vcvt.f32.s32 %v2649
    %v2652 = vshll.u32 %v2651, 16
    %v2653 = vadd.s32 %v2652, %v2650
    %v2654 = vand.u32 %v1349, 65535
    %v2655 = vshrl.u32 %v1349, 16
    %v2656 = vcvt.s32.f32 %v2654
    %v2657 = vcvt.s32.f32 %v2655
    %2658 = vadd.xlane.f32.xlu0 %v2656
    %v2659 = vpop.xlane.xlu0 %2658
    %2660 = vadd.xlane.f32.xlu0 %v2657
    %v2661 = vpop.xlane.xlu0 %2660
    %v2662 = vcvt.f32.s32 %v2659
    %v2663 = vcvt.f32.s32 %v2661
    %v2664 = vshll.u32 %v2663, 16
    %v2665 = vadd.s32 %v2664, %v2662
    %v2666 = vand.u32 %v1350, 65535
    %v2667 = vshrl.u32 %v1350, 16
    %v2668 = vcvt.s32.f32 %v2666
    %v2669 = vcvt.s32.f32 %v2667
    %2670 = vadd.xlane.f32.xlu0 %v2668
    %v2671 = vpop.xlane.xlu0 %2670
    %2672 = vadd.xlane.f32.xlu0 %v2669
    %v2673 = vpop.xlane.xlu0 %2672
    %v2674 = vcvt.f32.s32 %v2671
    %v2675 = vcvt.f32.s32 %v2673
    %v2676 = vshll.u32 %v2675, 16
    %v2677 = vadd.s32 %v2676, %v2674
    %v2678 = vand.u32 %v1351, 65535
    %v2679 = vshrl.u32 %v1351, 16
    %v2680 = vcvt.s32.f32 %v2678
    %v2681 = vcvt.s32.f32 %v2679
    %2682 = vadd.xlane.f32.xlu0 %v2680
    %v2683 = vpop.xlane.xlu0 %2682
    %2684 = vadd.xlane.f32.xlu0 %v2681
    %v2685 = vpop.xlane.xlu0 %2684
    %v2686 = vcvt.f32.s32 %v2683
    %v2687 = vcvt.f32.s32 %v2685
    %v2688 = vshll.u32 %v2687, 16
    %v2689 = vadd.s32 %v2688, %v2686
    %v2690 = vand.u32 %v1352, 65535
    %v2691 = vshrl.u32 %v1352, 16
    %v2692 = vcvt.s32.f32 %v2690
    %v2693 = vcvt.s32.f32 %v2691
    %2694 = vadd.xlane.f32.xlu0 %v2692
    %v2695 = vpop.xlane.xlu0 %2694
    %2696 = vadd.xlane.f32.xlu0 %v2693
    %v2697 = vpop.xlane.xlu0 %2696
    %v2698 = vcvt.f32.s32 %v2695
    %v2699 = vcvt.f32.s32 %v2697
    %v2700 = vshll.u32 %v2699, 16
    %v2701 = vadd.s32 %v2700, %v2698
    %v2702 = vand.u32 %v1353, 65535
    %v2703 = vshrl.u32 %v1353, 16
    %v2704 = vcvt.s32.f32 %v2702
    %v2705 = vcvt.s32.f32 %v2703
    %2706 = vadd.xlane.f32.xlu0 %v2704
    %v2707 = vpop.xlane.xlu0 %2706
    %2708 = vadd.xlane.f32.xlu0 %v2705
    %v2709 = vpop.xlane.xlu0 %2708
    %v2710 = vcvt.f32.s32 %v2707
    %v2711 = vcvt.f32.s32 %v2709
    %v2712 = vshll.u32 %v2711, 16
    %v2713 = vadd.s32 %v2712, %v2710
    %v2714 = vand.u32 %v1354, 65535
    %v2715 = vshrl.u32 %v1354, 16
    %v2716 = vcvt.s32.f32 %v2714
    %v2717 = vcvt.s32.f32 %v2715
    %2718 = vadd.xlane.f32.xlu0 %v2716
    %v2719 = vpop.xlane.xlu0 %2718
    %2720 = vadd.xlane.f32.xlu0 %v2717
    %v2721 = vpop.xlane.xlu0 %2720
    %v2722 = vcvt.f32.s32 %v2719
    %v2723 = vcvt.f32.s32 %v2721
    %v2724 = vshll.u32 %v2723, 16
    %v2725 = vadd.s32 %v2724, %v2722
    %v2726 = vand.u32 %v1355, 65535
    %v2727 = vshrl.u32 %v1355, 16
    %v2728 = vcvt.s32.f32 %v2726
    %v2729 = vcvt.s32.f32 %v2727
    %2730 = vadd.xlane.f32.xlu0 %v2728
    %v2731 = vpop.xlane.xlu0 %2730
    %2732 = vadd.xlane.f32.xlu0 %v2729
    %v2733 = vpop.xlane.xlu0 %2732
    %v2734 = vcvt.f32.s32 %v2731
    %v2735 = vcvt.f32.s32 %v2733
    %v2736 = vshll.u32 %v2735, 16
    %v2737 = vadd.s32 %v2736, %v2734
    %v2738 = vand.u32 %v1356, 65535
    %v2739 = vshrl.u32 %v1356, 16
    %v2740 = vcvt.s32.f32 %v2738
    %v2741 = vcvt.s32.f32 %v2739
    %2742 = vadd.xlane.f32.xlu0 %v2740
    %v2743 = vpop.xlane.xlu0 %2742
    %2744 = vadd.xlane.f32.xlu0 %v2741
    %v2745 = vpop.xlane.xlu0 %2744
    %v2746 = vcvt.f32.s32 %v2743
    %v2747 = vcvt.f32.s32 %v2745
    %v2748 = vshll.u32 %v2747, 16
    %v2749 = vadd.s32 %v2748, %v2746
    %v2750 = vand.u32 %v1357, 65535
    %v2751 = vshrl.u32 %v1357, 16
    %v2752 = vcvt.s32.f32 %v2750
    %v2753 = vcvt.s32.f32 %v2751
    %2754 = vadd.xlane.f32.xlu0 %v2752
    %v2755 = vpop.xlane.xlu0 %2754
    %2756 = vadd.xlane.f32.xlu0 %v2753
    %v2757 = vpop.xlane.xlu0 %2756
    %v2758 = vcvt.f32.s32 %v2755
    %v2759 = vcvt.f32.s32 %v2757
    %v2760 = vshll.u32 %v2759, 16
    %v2761 = vadd.s32 %v2760, %v2758
    %v2762 = vand.u32 %v1358, 65535
    %v2763 = vshrl.u32 %v1358, 16
    %v2764 = vcvt.s32.f32 %v2762
    %v2765 = vcvt.s32.f32 %v2763
    %2766 = vadd.xlane.f32.xlu0 %v2764
    %v2767 = vpop.xlane.xlu0 %2766
    %2768 = vadd.xlane.f32.xlu0 %v2765
    %v2769 = vpop.xlane.xlu0 %2768
    %v2770 = vcvt.f32.s32 %v2767
    %v2771 = vcvt.f32.s32 %v2769
    %v2772 = vshll.u32 %v2771, 16
    %v2773 = vadd.s32 %v2772, %v2770
    %v2774 = vand.u32 %v1359, 65535
    %v2775 = vshrl.u32 %v1359, 16
    %v2776 = vcvt.s32.f32 %v2774
    %v2777 = vcvt.s32.f32 %v2775
    %2778 = vadd.xlane.f32.xlu0 %v2776
    %v2779 = vpop.xlane.xlu0 %2778
    %2780 = vadd.xlane.f32.xlu0 %v2777
    %v2781 = vpop.xlane.xlu0 %2780
    %v2782 = vcvt.f32.s32 %v2779
    %v2783 = vcvt.f32.s32 %v2781
    %v2784 = vshll.u32 %v2783, 16
    %v2785 = vadd.s32 %v2784, %v2782
    %v2786 = vand.u32 %v1360, 65535
    %v2787 = vshrl.u32 %v1360, 16
    %v2788 = vcvt.s32.f32 %v2786
    %v2789 = vcvt.s32.f32 %v2787
    %2790 = vadd.xlane.f32.xlu0 %v2788
    %v2791 = vpop.xlane.xlu0 %2790
    %2792 = vadd.xlane.f32.xlu0 %v2789
    %v2793 = vpop.xlane.xlu0 %2792
    %v2794 = vcvt.f32.s32 %v2791
    %v2795 = vcvt.f32.s32 %v2793
    %v2796 = vshll.u32 %v2795, 16
    %v2797 = vadd.s32 %v2796, %v2794
    %v2798 = vand.u32 %v1361, 65535
    %v2799 = vshrl.u32 %v1361, 16
    %v2800 = vcvt.s32.f32 %v2798
    %v2801 = vcvt.s32.f32 %v2799
    %2802 = vadd.xlane.f32.xlu0 %v2800
    %v2803 = vpop.xlane.xlu0 %2802
    %2804 = vadd.xlane.f32.xlu0 %v2801
    %v2805 = vpop.xlane.xlu0 %2804
    %v2806 = vcvt.f32.s32 %v2803
    %v2807 = vcvt.f32.s32 %v2805
    %v2808 = vshll.u32 %v2807, 16
    %v2809 = vadd.s32 %v2808, %v2806
    %v2810 = vand.u32 %v1362, 65535
    %v2811 = vshrl.u32 %v1362, 16
    %v2812 = vcvt.s32.f32 %v2810
    %v2813 = vcvt.s32.f32 %v2811
    %2814 = vadd.xlane.f32.xlu0 %v2812
    %v2815 = vpop.xlane.xlu0 %2814
    %2816 = vadd.xlane.f32.xlu0 %v2813
    %v2817 = vpop.xlane.xlu0 %2816
    %v2818 = vcvt.f32.s32 %v2815
    %v2819 = vcvt.f32.s32 %v2817
    %v2820 = vshll.u32 %v2819, 16
    %v2821 = vadd.s32 %v2820, %v2818
    %v2822 = vand.u32 %v1363, 65535
    %v2823 = vshrl.u32 %v1363, 16
    %v2824 = vcvt.s32.f32 %v2822
    %v2825 = vcvt.s32.f32 %v2823
    %2826 = vadd.xlane.f32.xlu0 %v2824
    %v2827 = vpop.xlane.xlu0 %2826
    %2828 = vadd.xlane.f32.xlu0 %v2825
    %v2829 = vpop.xlane.xlu0 %2828
    %v2830 = vcvt.f32.s32 %v2827
    %v2831 = vcvt.f32.s32 %v2829
    %v2832 = vshll.u32 %v2831, 16
    %v2833 = vadd.s32 %v2832, %v2830
    %v2834 = vand.u32 %v1364, 65535
    %v2835 = vshrl.u32 %v1364, 16
    %v2836 = vcvt.s32.f32 %v2834
    %v2837 = vcvt.s32.f32 %v2835
    %2838 = vadd.xlane.f32.xlu0 %v2836
    %v2839 = vpop.xlane.xlu0 %2838
    %2840 = vadd.xlane.f32.xlu0 %v2837
    %v2841 = vpop.xlane.xlu0 %2840
    %v2842 = vcvt.f32.s32 %v2839
    %v2843 = vcvt.f32.s32 %v2841
    %v2844 = vshll.u32 %v2843, 16
    %v2845 = vadd.s32 %v2844, %v2842
    %v2846 = vand.u32 %v1365, 65535
    %v2847 = vshrl.u32 %v1365, 16
    %v2848 = vcvt.s32.f32 %v2846
    %v2849 = vcvt.s32.f32 %v2847
    %2850 = vadd.xlane.f32.xlu0 %v2848
    %v2851 = vpop.xlane.xlu0 %2850
    %2852 = vadd.xlane.f32.xlu0 %v2849
    %v2853 = vpop.xlane.xlu0 %2852
    %v2854 = vcvt.f32.s32 %v2851
    %v2855 = vcvt.f32.s32 %v2853
    %v2856 = vshll.u32 %v2855, 16
    %v2857 = vadd.s32 %v2856, %v2854
    %v2858 = vand.u32 %v1366, 65535
    %v2859 = vshrl.u32 %v1366, 16
    %v2860 = vcvt.s32.f32 %v2858
    %v2861 = vcvt.s32.f32 %v2859
    %2862 = vadd.xlane.f32.xlu0 %v2860
    %v2863 = vpop.xlane.xlu0 %2862
    %2864 = vadd.xlane.f32.xlu0 %v2861
    %v2865 = vpop.xlane.xlu0 %2864
    %v2866 = vcvt.f32.s32 %v2863
    %v2867 = vcvt.f32.s32 %v2865
    %v2868 = vshll.u32 %v2867, 16
    %v2869 = vadd.s32 %v2868, %v2866
    %v2870 = vand.u32 %v1367, 65535
    %v2871 = vshrl.u32 %v1367, 16
    %v2872 = vcvt.s32.f32 %v2870
    %v2873 = vcvt.s32.f32 %v2871
    %2874 = vadd.xlane.f32.xlu0 %v2872
    %v2875 = vpop.xlane.xlu0 %2874
    %2876 = vadd.xlane.f32.xlu0 %v2873
    %v2877 = vpop.xlane.xlu0 %2876
    %v2878 = vcvt.f32.s32 %v2875
    %v2879 = vcvt.f32.s32 %v2877
    %v2880 = vshll.u32 %v2879, 16
    %v2881 = vadd.s32 %v2880, %v2878
    %v2882 = vand.u32 %v1368, 65535
    %v2883 = vshrl.u32 %v1368, 16
    %v2884 = vcvt.s32.f32 %v2882
    %v2885 = vcvt.s32.f32 %v2883
    %2886 = vadd.xlane.f32.xlu0 %v2884
    %v2887 = vpop.xlane.xlu0 %2886
    %2888 = vadd.xlane.f32.xlu0 %v2885
    %v2889 = vpop.xlane.xlu0 %2888
    %v2890 = vcvt.f32.s32 %v2887
    %v2891 = vcvt.f32.s32 %v2889
    %v2892 = vshll.u32 %v2891, 16
    %v2893 = vadd.s32 %v2892, %v2890
    %v2894 = vand.u32 %v1369, 65535
    %v2895 = vshrl.u32 %v1369, 16
    %v2896 = vcvt.s32.f32 %v2894
    %v2897 = vcvt.s32.f32 %v2895
    %2898 = vadd.xlane.f32.xlu0 %v2896
    %v2899 = vpop.xlane.xlu0 %2898
    %2900 = vadd.xlane.f32.xlu0 %v2897
    %v2901 = vpop.xlane.xlu0 %2900
    %v2902 = vcvt.f32.s32 %v2899
    %v2903 = vcvt.f32.s32 %v2901
    %v2904 = vshll.u32 %v2903, 16
    %v2905 = vadd.s32 %v2904, %v2902
    %v2906 = vlaneseq
    %v2907 = vshrl.u32 %v2906, 7
    %v2908 = vsub.s32 %v14, %v2907
    %v2909 = vrot.slane %v1381, %v2908
    %v2910 = vadd.s32 %v14, 4294967288
    %v2911 = vlaneseq
    %v2912 = vshrl.u32 %v2911, 7
    %v2913 = vsub.s32 %v2910, %v2912
    %v2914 = vrot.slane %v1393, %v2913
    %vm2915 = vcmask 130112
    %v2916 = vsel %vm2915, %v2914, %v2909
    %v2917 = vadd.s32 %v14, 4294967280
    %v2918 = vlaneseq
    %v2919 = vshrl.u32 %v2918, 7
    %v2920 = vsub.s32 %v2917, %v2919
    %v2921 = vrot.slane %v1405, %v2920
    %vm2922 = vcmask 195712
    %v2923 = vsel %vm2922, %v2921, %v2916
    %v2924 = vadd.s32 %v14, 4294967272
    %v2925 = vlaneseq
    %v2926 = vshrl.u32 %v2925, 7
    %v2927 = vsub.s32 %v2924, %v2926
    %v2928 = vrot.slane %v1417, %v2927
    %vm2929 = vcmask 261312
    %v2930 = vsel %vm2929, %v2928, %v2923
    %v2931 = vadd.s32 %v14, 4294967264
    %v2932 = vlaneseq
    %v2933 = vshrl.u32 %v2932, 7
    %v2934 = vsub.s32 %v2931, %v2933
    %v2935 = vrot.slane %v1429, %v2934
    %vm2936 = vcmask 326912
    %v2937 = vsel %vm2936, %v2935, %v2930
    %v2938 = vadd.s32 %v14, 4294967256
    %v2939 = vlaneseq
    %v2940 = vshrl.u32 %v2939, 7
    %v2941 = vsub.s32 %v2938, %v2940
    %v2942 = vrot.slane %v1441, %v2941
    %vm2943 = vcmask 392512
    %v2944 = vsel %vm2943, %v2942, %v2937
    %v2945 = vadd.s32 %v14, 4294967248
    %v2946 = vlaneseq
    %v2947 = vshrl.u32 %v2946, 7
    %v2948 = vsub.s32 %v2945, %v2947
    %v2949 = vrot.slane %v1453, %v2948
    %vm2950 = vcmask 458112
    %v2951 = vsel %vm2950, %v2949, %v2944
    %v2952 = vadd.s32 %v14, 4294967240
    %v2953 = vlaneseq
    %v2954 = vshrl.u32 %v2953, 7
    %v2955 = vsub.s32 %v2952, %v2954
    %v2956 = vrot.slane %v1465, %v2955
    %vm2957 = vcmask 523712
    %v2958 = vsel %vm2957, %v2956, %v2951
    %v2959 = vadd.s32 %v14, 4294967232
    %v2960 = vlaneseq
    %v2961 = vshrl.u32 %v2960, 7
    %v2962 = vsub.s32 %v2959, %v2961
    %v2963 = vrot.slane %v1477, %v2962
    %vm2964 = vcmask 589312
    %v2965 = vsel %vm2964, %v2963, %v2958
    %v2966 = vadd.s32 %v14, 4294967224
    %v2967 = vlaneseq
    %v2968 = vshrl.u32 %v2967, 7
    %v2969 = vsub.s32 %v2966, %v2968
    %v2970 = vrot.slane %v1489, %v2969
    %vm2971 = vcmask 654912
    %v2972 = vsel %vm2971, %v2970, %v2965
    %v2973 = vadd.s32 %v14, 4294967216
    %v2974 = vlaneseq
    %v2975 = vshrl.u32 %v2974, 7
    %v2976 = vsub.s32 %v2973, %v2975
    %v2977 = vrot.slane %v1501, %v2976
    %vm2978 = vcmask 720512
    %v2979 = vsel %vm2978, %v2977, %v2972
    %v2980 = vadd.s32 %v14, 4294967208
    %v2981 = vlaneseq
    %v2982 = vshrl.u32 %v2981, 7
    %v2983 = vsub.s32 %v2980, %v2982
    %v2984 = vrot.slane %v1513, %v2983
    %vm2985 = vcmask 786112
    %v2986 = vsel %vm2985, %v2984, %v2979
    %v2987 = vadd.s32 %v14, 4294967200
    %v2988 = vlaneseq
    %v2989 = vshrl.u32 %v2988, 7
    %v2990 = vsub.s32 %v2987, %v2989
    %v2991 = vrot.slane %v1525, %v2990
    %vm2992 = vcmask 851712
    %v2993 = vsel %vm2992, %v2991, %v2986
    %v2994 = vadd.s32 %v14, 4294967192
    %v2995 = vlaneseq
    %v2996 = vshrl.u32 %v2995, 7
    %v2997 = vsub.s32 %v2994, %v2996
    %v2998 = vrot.slane %v1537, %v2997
    %vm2999 = vcmask 917312
    %v3000 = vsel %vm2999, %v2998, %v2993
    %v3001 = vadd.s32 %v14, 4294967184
    %v3002 = vlaneseq
    %v3003 = vshrl.u32 %v3002, 7
    %v3004 = vsub.s32 %v3001, %v3003
    %v3005 = vrot.slane %v1549, %v3004
    %vm3006 = vcmask 982912
    %v3007 = vsel %vm3006, %v3005, %v3000
    %v3008 = vadd.s32 %v14, 4294967176
    %v3009 = vlaneseq
    %v3010 = vshrl.u32 %v3009, 7
    %v3011 = vsub.s32 %v3008, %v3010
    %v3012 = vrot.slane %v1561, %v3011
    %vm3013 = vcmask 1048512
    %v3014 = vsel %vm3013, %v3012, %v3007
    %v3015 = vlaneseq
    %v3016 = vshrl.u32 %v3015, 7
    %v3017 = vsub.s32 %v14, %v3016
    %v3018 = vrot.slane %v1573, %v3017
    %v3019 = vlaneseq
    %v3020 = vshrl.u32 %v3019, 7
    %v3021 = vsub.s32 %v2910, %v3020
    %v3022 = vrot.slane %v1585, %v3021
    %v3023 = vsel %vm2915, %v3022, %v3018
    %v3024 = vlaneseq
    %v3025 = vshrl.u32 %v3024, 7
    %v3026 = vsub.s32 %v2917, %v3025
    %v3027 = vrot.slane %v1597, %v3026
    %v3028 = vsel %vm2922, %v3027, %v3023
    %v3029 = vlaneseq
    %v3030 = vshrl.u32 %v3029, 7
    %v3031 = vsub.s32 %v2924, %v3030
    %v3032 = vrot.slane %v1609, %v3031
    %v3033 = vsel %vm2929, %v3032, %v3028
    %v3034 = vlaneseq
    %v3035 = vshrl.u32 %v3034, 7
    %v3036 = vsub.s32 %v2931, %v3035
    %v3037 = vrot.slane %v1621, %v3036
    %v3038 = vsel %vm2936, %v3037, %v3033
    %v3039 = vlaneseq
    %v3040 = vshrl.u32 %v3039, 7
    %v3041 = vsub.s32 %v2938, %v3040
    %v3042 = vrot.slane %v1633, %v3041
    %v3043 = vsel %vm2943, %v3042, %v3038
    %v3044 = vlaneseq
    %v3045 = vshrl.u32 %v3044, 7
    %v3046 = vsub.s32 %v2945, %v3045
    %v3047 = vrot.slane %v1645, %v3046
    %v3048 = vsel %vm2950, %v3047, %v3043
    %v3049 = vlaneseq
    %v3050 = vshrl.u32 %v3049, 7
    %v3051 = vsub.s32 %v2952, %v3050
    %v3052 = vrot.slane %v1657, %v3051
    %v3053 = vsel %vm2957, %v3052, %v3048
    %v3054 = vlaneseq
    %v3055 = vshrl.u32 %v3054, 7
    %v3056 = vsub.s32 %v2959, %v3055
    %v3057 = vrot.slane %v1669, %v3056
    %v3058 = vsel %vm2964, %v3057, %v3053
    %v3059 = vlaneseq
    %v3060 = vshrl.u32 %v3059, 7
    %v3061 = vsub.s32 %v2966, %v3060
    %v3062 = vrot.slane %v1681, %v3061
    %v3063 = vsel %vm2971, %v3062, %v3058
    %v3064 = vlaneseq
    %v3065 = vshrl.u32 %v3064, 7
    %v3066 = vsub.s32 %v2973, %v3065
    %v3067 = vrot.slane %v1693, %v3066
    %v3068 = vsel %vm2978, %v3067, %v3063
    %v3069 = vlaneseq
    %v3070 = vshrl.u32 %v3069, 7
    %v3071 = vsub.s32 %v2980, %v3070
    %v3072 = vrot.slane %v1705, %v3071
    %v3073 = vsel %vm2985, %v3072, %v3068
    %v3074 = vlaneseq
    %v3075 = vshrl.u32 %v3074, 7
    %v3076 = vsub.s32 %v2987, %v3075
    %v3077 = vrot.slane %v1717, %v3076
    %v3078 = vsel %vm2992, %v3077, %v3073
    %v3079 = vlaneseq
    %v3080 = vshrl.u32 %v3079, 7
    %v3081 = vsub.s32 %v2994, %v3080
    %v3082 = vrot.slane %v1729, %v3081
    %v3083 = vsel %vm2999, %v3082, %v3078
    %v3084 = vlaneseq
    %v3085 = vshrl.u32 %v3084, 7
    %v3086 = vsub.s32 %v3001, %v3085
    %v3087 = vrot.slane %v1741, %v3086
    %v3088 = vsel %vm3006, %v3087, %v3083
    %v3089 = vlaneseq
    %v3090 = vshrl.u32 %v3089, 7
    %v3091 = vsub.s32 %v3008, %v3090
    %v3092 = vrot.slane %v1753, %v3091
    %v3093 = vsel %vm3013, %v3092, %v3088
    %v3094 = vlaneseq
    %v3095 = vshrl.u32 %v3094, 7
    %v3096 = vsub.s32 %v14, %v3095
    %v3097 = vrot.slane %v1765, %v3096
    %v3098 = vlaneseq
    %v3099 = vshrl.u32 %v3098, 7
    %v3100 = vsub.s32 %v2910, %v3099
    %v3101 = vrot.slane %v1777, %v3100
    %v3102 = vsel %vm2915, %v3101, %v3097
    %v3103 = vlaneseq
    %v3104 = vshrl.u32 %v3103, 7
    %v3105 = vsub.s32 %v2917, %v3104
    %v3106 = vrot.slane %v1789, %v3105
    %v3107 = vsel %vm2922, %v3106, %v3102
    %v3108 = vlaneseq
    %v3109 = vshrl.u32 %v3108, 7
    %v3110 = vsub.s32 %v2924, %v3109
    %v3111 = vrot.slane %v1801, %v3110
    %v3112 = vsel %vm2929, %v3111, %v3107
    %v3113 = vlaneseq
    %v3114 = vshrl.u32 %v3113, 7
    %v3115 = vsub.s32 %v2931, %v3114
    %v3116 = vrot.slane %v1813, %v3115
    %v3117 = vsel %vm2936, %v3116, %v3112
    %v3118 = vlaneseq
    %v3119 = vshrl.u32 %v3118, 7
    %v3120 = vsub.s32 %v2938, %v3119
    %v3121 = vrot.slane %v1825, %v3120
    %v3122 = vsel %vm2943, %v3121, %v3117
    %v3123 = vlaneseq
    %v3124 = vshrl.u32 %v3123, 7
    %v3125 = vsub.s32 %v2945, %v3124
    %v3126 = vrot.slane %v1837, %v3125
    %v3127 = vsel %vm2950, %v3126, %v3122
    %v3128 = vlaneseq
    %v3129 = vshrl.u32 %v3128, 7
    %v3130 = vsub.s32 %v2952, %v3129
    %v3131 = vrot.slane %v1849, %v3130
    %v3132 = vsel %vm2957, %v3131, %v3127
    %v3133 = vlaneseq
    %v3134 = vshrl.u32 %v3133, 7
    %v3135 = vsub.s32 %v2959, %v3134
    %v3136 = vrot.slane %v1861, %v3135
    %v3137 = vsel %vm2964, %v3136, %v3132
    %v3138 = vlaneseq
    %v3139 = vshrl.u32 %v3138, 7
    %v3140 = vsub.s32 %v2966, %v3139
    %v3141 = vrot.slane %v1873, %v3140
    %v3142 = vsel %vm2971, %v3141, %v3137
    %v3143 = vlaneseq
    %v3144 = vshrl.u32 %v3143, 7
    %v3145 = vsub.s32 %v2973, %v3144
    %v3146 = vrot.slane %v1885, %v3145
    %v3147 = vsel %vm2978, %v3146, %v3142
    %v3148 = vlaneseq
    %v3149 = vshrl.u32 %v3148, 7
    %v3150 = vsub.s32 %v2980, %v3149
    %v3151 = vrot.slane %v1897, %v3150
    %v3152 = vsel %vm2985, %v3151, %v3147
    %v3153 = vlaneseq
    %v3154 = vshrl.u32 %v3153, 7
    %v3155 = vsub.s32 %v2987, %v3154
    %v3156 = vrot.slane %v1909, %v3155
    %v3157 = vsel %vm2992, %v3156, %v3152
    %v3158 = vlaneseq
    %v3159 = vshrl.u32 %v3158, 7
    %v3160 = vsub.s32 %v2994, %v3159
    %v3161 = vrot.slane %v1921, %v3160
    %v3162 = vsel %vm2999, %v3161, %v3157
    %v3163 = vlaneseq
    %v3164 = vshrl.u32 %v3163, 7
    %v3165 = vsub.s32 %v3001, %v3164
    %v3166 = vrot.slane %v1933, %v3165
    %v3167 = vsel %vm3006, %v3166, %v3162
    %v3168 = vlaneseq
    %v3169 = vshrl.u32 %v3168, 7
    %v3170 = vsub.s32 %v3008, %v3169
    %v3171 = vrot.slane %v1945, %v3170
    %v3172 = vsel %vm3013, %v3171, %v3167
    %v3173 = vlaneseq
    %v3174 = vshrl.u32 %v3173, 7
    %v3175 = vsub.s32 %v14, %v3174
    %v3176 = vrot.slane %v1957, %v3175
    %v3177 = vlaneseq
    %v3178 = vshrl.u32 %v3177, 7
    %v3179 = vsub.s32 %v2910, %v3178
    %v3180 = vrot.slane %v1969, %v3179
    %v3181 = vsel %vm2915, %v3180, %v3176
    %v3182 = vlaneseq
    %v3183 = vshrl.u32 %v3182, 7
    %v3184 = vsub.s32 %v2917, %v3183
    %v3185 = vrot.slane %v1981, %v3184
    %v3186 = vsel %vm2922, %v3185, %v3181
    %v3187 = vlaneseq
    %v3188 = vshrl.u32 %v3187, 7
    %v3189 = vsub.s32 %v2924, %v3188
    %v3190 = vrot.slane %v1993, %v3189
    %v3191 = vsel %vm2929, %v3190, %v3186
    %v3192 = vlaneseq
    %v3193 = vshrl.u32 %v3192, 7
    %v3194 = vsub.s32 %v2931, %v3193
    %v3195 = vrot.slane %v2005, %v3194
    %v3196 = vsel %vm2936, %v3195, %v3191
    %v3197 = vlaneseq
    %v3198 = vshrl.u32 %v3197, 7
    %v3199 = vsub.s32 %v2938, %v3198
    %v3200 = vrot.slane %v2017, %v3199
    %v3201 = vsel %vm2943, %v3200, %v3196
    %v3202 = vlaneseq
    %v3203 = vshrl.u32 %v3202, 7
    %v3204 = vsub.s32 %v2945, %v3203
    %v3205 = vrot.slane %v2029, %v3204
    %v3206 = vsel %vm2950, %v3205, %v3201
    %v3207 = vlaneseq
    %v3208 = vshrl.u32 %v3207, 7
    %v3209 = vsub.s32 %v2952, %v3208
    %v3210 = vrot.slane %v2041, %v3209
    %v3211 = vsel %vm2957, %v3210, %v3206
    %v3212 = vlaneseq
    %v3213 = vshrl.u32 %v3212, 7
    %v3214 = vsub.s32 %v2959, %v3213
    %v3215 = vrot.slane %v2053, %v3214
    %v3216 = vsel %vm2964, %v3215, %v3211
    %v3217 = vlaneseq
    %v3218 = vshrl.u32 %v3217, 7
    %v3219 = vsub.s32 %v2966, %v3218
    %v3220 = vrot.slane %v2065, %v3219
    %v3221 = vsel %vm2971, %v3220, %v3216
    %v3222 = vlaneseq
    %v3223 = vshrl.u32 %v3222, 7
    %v3224 = vsub.s32 %v2973, %v3223
    %v3225 = vrot.slane %v2077, %v3224
    %v3226 = vsel %vm2978, %v3225, %v3221
    %v3227 = vlaneseq
    %v3228 = vshrl.u32 %v3227, 7
    %v3229 = vsub.s32 %v2980, %v3228
    %v3230 = vrot.slane %v2089, %v3229
    %v3231 = vsel %vm2985, %v3230, %v3226
    %v3232 = vlaneseq
    %v3233 = vshrl.u32 %v3232, 7
    %v3234 = vsub.s32 %v2987, %v3233
    %v3235 = vrot.slane %v2101, %v3234
    %v3236 = vsel %vm2992, %v3235, %v3231
    %v3237 = vlaneseq
    %v3238 = vshrl.u32 %v3237, 7
    %v3239 = vsub.s32 %v2994, %v3238
    %v3240 = vrot.slane %v2113, %v3239
    %v3241 = vsel %vm2999, %v3240, %v3236
    %v3242 = vlaneseq
    %v3243 = vshrl.u32 %v3242, 7
    %v3244 = vsub.s32 %v3001, %v3243
    %v3245 = vrot.slane %v2125, %v3244
    %v3246 = vsel %vm3006, %v3245, %v3241
    %v3247 = vlaneseq
    %v3248 = vshrl.u32 %v3247, 7
    %v3249 = vsub.s32 %v3008, %v3248
    %v3250 = vrot.slane %v2137, %v3249
    %v3251 = vsel %vm3013, %v3250, %v3246
    %v3252 = vlaneseq
    %v3253 = vshrl.u32 %v3252, 7
    %v3254 = vsub.s32 %v14, %v3253
    %v3255 = vrot.slane %v2149, %v3254
    %v3256 = vlaneseq
    %v3257 = vshrl.u32 %v3256, 7
    %v3258 = vsub.s32 %v2910, %v3257
    %v3259 = vrot.slane %v2161, %v3258
    %v3260 = vsel %vm2915, %v3259, %v3255
    %v3261 = vlaneseq
    %v3262 = vshrl.u32 %v3261, 7
    %v3263 = vsub.s32 %v2917, %v3262
    %v3264 = vrot.slane %v2173, %v3263
    %v3265 = vsel %vm2922, %v3264, %v3260
    %v3266 = vlaneseq
    %v3267 = vshrl.u32 %v3266, 7
    %v3268 = vsub.s32 %v2924, %v3267
    %v3269 = vrot.slane %v2185, %v3268
    %v3270 = vsel %vm2929, %v3269, %v3265
    %v3271 = vlaneseq
    %v3272 = vshrl.u32 %v3271, 7
    %v3273 = vsub.s32 %v2931, %v3272
    %v3274 = vrot.slane %v2197, %v3273
    %v3275 = vsel %vm2936, %v3274, %v3270
    %v3276 = vlaneseq
    %v3277 = vshrl.u32 %v3276, 7
    %v3278 = vsub.s32 %v2938, %v3277
    %v3279 = vrot.slane %v2209, %v3278
    %v3280 = vsel %vm2943, %v3279, %v3275
    %v3281 = vlaneseq
    %v3282 = vshrl.u32 %v3281, 7
    %v3283 = vsub.s32 %v2945, %v3282
    %v3284 = vrot.slane %v2221, %v3283
    %v3285 = vsel %vm2950, %v3284, %v3280
    %v3286 = vlaneseq
    %v3287 = vshrl.u32 %v3286, 7
    %v3288 = vsub.s32 %v2952, %v3287
    %v3289 = vrot.slane %v2233, %v3288
    %v3290 = vsel %vm2957, %v3289, %v3285
    %v3291 = vlaneseq
    %v3292 = vshrl.u32 %v3291, 7
    %v3293 = vsub.s32 %v2959, %v3292
    %v3294 = vrot.slane %v2245, %v3293
    %v3295 = vsel %vm2964, %v3294, %v3290
    %v3296 = vlaneseq
    %v3297 = vshrl.u32 %v3296, 7
    %v3298 = vsub.s32 %v2966, %v3297
    %v3299 = vrot.slane %v2257, %v3298
    %v3300 = vsel %vm2971, %v3299, %v3295
    %v3301 = vlaneseq
    %v3302 = vshrl.u32 %v3301, 7
    %v3303 = vsub.s32 %v2973, %v3302
    %v3304 = vrot.slane %v2269, %v3303
    %v3305 = vsel %vm2978, %v3304, %v3300
    %v3306 = vlaneseq
    %v3307 = vshrl.u32 %v3306, 7
    %v3308 = vsub.s32 %v2980, %v3307
    %v3309 = vrot.slane %v2281, %v3308
    %v3310 = vsel %vm2985, %v3309, %v3305
    %v3311 = vlaneseq
    %v3312 = vshrl.u32 %v3311, 7
    %v3313 = vsub.s32 %v2987, %v3312
    %v3314 = vrot.slane %v2293, %v3313
    %v3315 = vsel %vm2992, %v3314, %v3310
    %v3316 = vlaneseq
    %v3317 = vshrl.u32 %v3316, 7
    %v3318 = vsub.s32 %v2994, %v3317
    %v3319 = vrot.slane %v2305, %v3318
    %v3320 = vsel %vm2999, %v3319, %v3315
    %v3321 = vlaneseq
    %v3322 = vshrl.u32 %v3321, 7
    %v3323 = vsub.s32 %v3001, %v3322
    %v3324 = vrot.slane %v2317, %v3323
    %v3325 = vsel %vm3006, %v3324, %v3320
    %v3326 = vlaneseq
    %v3327 = vshrl.u32 %v3326, 7
    %v3328 = vsub.s32 %v3008, %v3327
    %v3329 = vrot.slane %v2329, %v3328
    %v3330 = vsel %vm3013, %v3329, %v3325
    %v3331 = vlaneseq
    %v3332 = vshrl.u32 %v3331, 7
    %v3333 = vsub.s32 %v14, %v3332
    %v3334 = vrot.slane %v2341, %v3333
    %v3335 = vlaneseq
    %v3336 = vshrl.u32 %v3335, 7
    %v3337 = vsub.s32 %v2910, %v3336
    %v3338 = vrot.slane %v2353, %v3337
    %v3339 = vsel %vm2915, %v3338, %v3334
    %v3340 = vlaneseq
    %v3341 = vshrl.u32 %v3340, 7
    %v3342 = vsub.s32 %v2917, %v3341
    %v3343 = vrot.slane %v2365, %v3342
    %v3344 = vsel %vm2922, %v3343, %v3339
    %v3345 = vlaneseq
    %v3346 = vshrl.u32 %v3345, 7
    %v3347 = vsub.s32 %v2924, %v3346
    %v3348 = vrot.slane %v2377, %v3347
    %v3349 = vsel %vm2929, %v3348, %v3344
    %v3350 = vlaneseq
    %v3351 = vshrl.u32 %v3350, 7
    %v3352 = vsub.s32 %v2931, %v3351
    %v3353 = vrot.slane %v2389, %v3352
    %v3354 = vsel %vm2936, %v3353, %v3349
    %v3355 = vlaneseq
    %v3356 = vshrl.u32 %v3355, 7
    %v3357 = vsub.s32 %v2938, %v3356
    %v3358 = vrot.slane %v2401, %v3357
    %v3359 = vsel %vm2943, %v3358, %v3354
    %v3360 = vlaneseq
    %v3361 = vshrl.u32 %v3360, 7
    %v3362 = vsub.s32 %v2945, %v3361
    %v3363 = vrot.slane %v2413, %v3362
    %v3364 = vsel %vm2950, %v3363, %v3359
    %v3365 = vlaneseq
    %v3366 = vshrl.u32 %v3365, 7
    %v3367 = vsub.s32 %v2952, %v3366
    %v3368 = vrot.slane %v2425, %v3367
    %v3369 = vsel %vm2957, %v3368, %v3364
    %v3370 = vlaneseq
    %v3371 = vshrl.u32 %v3370, 7
    %v3372 = vsub.s32 %v2959, %v3371
    %v3373 = vrot.slane %v2437, %v3372
    %v3374 = vsel %vm2964, %v3373, %v3369
    %v3375 = vlaneseq
    %v3376 = vshrl.u32 %v3375, 7
    %v3377 = vsub.s32 %v2966, %v3376
    %v3378 = vrot.slane %v2449, %v3377
    %v3379 = vsel %vm2971, %v3378, %v3374
    %v3380 = vlaneseq
    %v3381 = vshrl.u32 %v3380, 7
    %v3382 = vsub.s32 %v2973, %v3381
    %v3383 = vrot.slane %v2461, %v3382
    %v3384 = vsel %vm2978, %v3383, %v3379
    %v3385 = vlaneseq
    %v3386 = vshrl.u32 %v3385, 7
    %v3387 = vsub.s32 %v2980, %v3386
    %v3388 = vrot.slane %v2473, %v3387
    %v3389 = vsel %vm2985, %v3388, %v3384
    %v3390 = vlaneseq
    %v3391 = vshrl.u32 %v3390, 7
    %v3392 = vsub.s32 %v2987, %v3391
    %v3393 = vrot.slane %v2485, %v3392
    %v3394 = vsel %vm2992, %v3393, %v3389
    %v3395 = vlaneseq
    %v3396 = vshrl.u32 %v3395, 7
    %v3397 = vsub.s32 %v2994, %v3396
    %v3398 = vrot.slane %v2497, %v3397
    %v3399 = vsel %vm2999, %v3398, %v3394
    %v3400 = vlaneseq
    %v3401 = vshrl.u32 %v3400, 7
    %v3402 = vsub.s32 %v3001, %v3401
    %v3403 = vrot.slane %v2509, %v3402
    %v3404 = vsel %vm3006, %v3403, %v3399
    %v3405 = vlaneseq
    %v3406 = vshrl.u32 %v3405, 7
    %v3407 = vsub.s32 %v3008, %v3406
    %v3408 = vrot.slane %v2521, %v3407
    %v3409 = vsel %vm3013, %v3408, %v3404
    %v3410 = vlaneseq
    %v3411 = vshrl.u32 %v3410, 7
    %v3412 = vsub.s32 %v14, %v3411
    %v3413 = vrot.slane %v2533, %v3412
    %v3414 = vlaneseq
    %v3415 = vshrl.u32 %v3414, 7
    %v3416 = vsub.s32 %v2910, %v3415
    %v3417 = vrot.slane %v2545, %v3416
    %v3418 = vsel %vm2915, %v3417, %v3413
    %v3419 = vlaneseq
    %v3420 = vshrl.u32 %v3419, 7
    %v3421 = vsub.s32 %v2917, %v3420
    %v3422 = vrot.slane %v2557, %v3421
    %v3423 = vsel %vm2922, %v3422, %v3418
    %v3424 = vlaneseq
    %v3425 = vshrl.u32 %v3424, 7
    %v3426 = vsub.s32 %v2924, %v3425
    %v3427 = vrot.slane %v2569, %v3426
    %v3428 = vsel %vm2929, %v3427, %v3423
    %v3429 = vlaneseq
    %v3430 = vshrl.u32 %v3429, 7
    %v3431 = vsub.s32 %v2931, %v3430
    %v3432 = vrot.slane %v2581, %v3431
    %v3433 = vsel %vm2936, %v3432, %v3428
    %v3434 = vlaneseq
    %v3435 = vshrl.u32 %v3434, 7
    %v3436 = vsub.s32 %v2938, %v3435
    %v3437 = vrot.slane %v2593, %v3436
    %v3438 = vsel %vm2943, %v3437, %v3433
    %v3439 = vlaneseq
    %v3440 = vshrl.u32 %v3439, 7
    %v3441 = vsub.s32 %v2945, %v3440
    %v3442 = vrot.slane %v2605, %v3441
    %v3443 = vsel %vm2950, %v3442, %v3438
    %v3444 = vlaneseq
    %v3445 = vshrl.u32 %v3444, 7
    %v3446 = vsub.s32 %v2952, %v3445
    %v3447 = vrot.slane %v2617, %v3446
    %v3448 = vsel %vm2957, %v3447, %v3443
    %v3449 = vlaneseq
    %v3450 = vshrl.u32 %v3449, 7
    %v3451 = vsub.s32 %v2959, %v3450
    %v3452 = vrot.slane %v2629, %v3451
    %v3453 = vsel %vm2964, %v3452, %v3448
    %v3454 = vlaneseq
    %v3455 = vshrl.u32 %v3454, 7
    %v3456 = vsub.s32 %v2966, %v3455
    %v3457 = vrot.slane %v2641, %v3456
    %v3458 = vsel %vm2971, %v3457, %v3453
    %v3459 = vlaneseq
    %v3460 = vshrl.u32 %v3459, 7
    %v3461 = vsub.s32 %v2973, %v3460
    %v3462 = vrot.slane %v2653, %v3461
    %v3463 = vsel %vm2978, %v3462, %v3458
    %v3464 = vlaneseq
    %v3465 = vshrl.u32 %v3464, 7
    %v3466 = vsub.s32 %v2980, %v3465
    %v3467 = vrot.slane %v2665, %v3466
    %v3468 = vsel %vm2985, %v3467, %v3463
    %v3469 = vlaneseq
    %v3470 = vshrl.u32 %v3469, 7
    %v3471 = vsub.s32 %v2987, %v3470
    %v3472 = vrot.slane %v2677, %v3471
    %v3473 = vsel %vm2992, %v3472, %v3468
    %v3474 = vlaneseq
    %v3475 = vshrl.u32 %v3474, 7
    %v3476 = vsub.s32 %v2994, %v3475
    %v3477 = vrot.slane %v2689, %v3476
    %v3478 = vsel %vm2999, %v3477, %v3473
    %v3479 = vlaneseq
    %v3480 = vshrl.u32 %v3479, 7
    %v3481 = vsub.s32 %v3001, %v3480
    %v3482 = vrot.slane %v2701, %v3481
    %v3483 = vsel %vm3006, %v3482, %v3478
    %v3484 = vlaneseq
    %v3485 = vshrl.u32 %v3484, 7
    %v3486 = vsub.s32 %v3008, %v3485
    %v3487 = vrot.slane %v2713, %v3486
    %v3488 = vsel %vm3013, %v3487, %v3483
    %v3489 = vlaneseq
    %v3490 = vshrl.u32 %v3489, 7
    %v3491 = vsub.s32 %v14, %v3490
    %v3492 = vrot.slane %v2725, %v3491
    %v3493 = vlaneseq
    %v3494 = vshrl.u32 %v3493, 7
    %v3495 = vsub.s32 %v2910, %v3494
    %v3496 = vrot.slane %v2737, %v3495
    %v3497 = vsel %vm2915, %v3496, %v3492
    %v3498 = vlaneseq
    %v3499 = vshrl.u32 %v3498, 7
    %v3500 = vsub.s32 %v2917, %v3499
    %v3501 = vrot.slane %v2749, %v3500
    %v3502 = vsel %vm2922, %v3501, %v3497
    %v3503 = vlaneseq
    %v3504 = vshrl.u32 %v3503, 7
    %v3505 = vsub.s32 %v2924, %v3504
    %v3506 = vrot.slane %v2761, %v3505
    %v3507 = vsel %vm2929, %v3506, %v3502
    %v3508 = vlaneseq
    %v3509 = vshrl.u32 %v3508, 7
    %v3510 = vsub.s32 %v2931, %v3509
    %v3511 = vrot.slane %v2773, %v3510
    %v3512 = vsel %vm2936, %v3511, %v3507
    %v3513 = vlaneseq
    %v3514 = vshrl.u32 %v3513, 7
    %v3515 = vsub.s32 %v2938, %v3514
    %v3516 = vrot.slane %v2785, %v3515
    %v3517 = vsel %vm2943, %v3516, %v3512
    %v3518 = vlaneseq
    %v3519 = vshrl.u32 %v3518, 7
    %v3520 = vsub.s32 %v2945, %v3519
    %v3521 = vrot.slane %v2797, %v3520
    %v3522 = vsel %vm2950, %v3521, %v3517
    %v3523 = vlaneseq
    %v3524 = vshrl.u32 %v3523, 7
    %v3525 = vsub.s32 %v2952, %v3524
    %v3526 = vrot.slane %v2809, %v3525
    %v3527 = vsel %vm2957, %v3526, %v3522
    %v3528 = vlaneseq
    %v3529 = vshrl.u32 %v3528, 7
    %v3530 = vsub.s32 %v2959, %v3529
    %v3531 = vrot.slane %v2821, %v3530
    %v3532 = vsel %vm2964, %v3531, %v3527
    %v3533 = vlaneseq
    %v3534 = vshrl.u32 %v3533, 7
    %v3535 = vsub.s32 %v2966, %v3534
    %v3536 = vrot.slane %v2833, %v3535
    %v3537 = vsel %vm2971, %v3536, %v3532
    %v3538 = vlaneseq
    %v3539 = vshrl.u32 %v3538, 7
    %v3540 = vsub.s32 %v2973, %v3539
    %v3541 = vrot.slane %v2845, %v3540
    %v3542 = vsel %vm2978, %v3541, %v3537
    %v3543 = vlaneseq
    %v3544 = vshrl.u32 %v3543, 7
    %v3545 = vsub.s32 %v2980, %v3544
    %v3546 = vrot.slane %v2857, %v3545
    %v3547 = vsel %vm2985, %v3546, %v3542
    %v3548 = vlaneseq
    %v3549 = vshrl.u32 %v3548, 7
    %v3550 = vsub.s32 %v2987, %v3549
    %v3551 = vrot.slane %v2869, %v3550
    %v3552 = vsel %vm2992, %v3551, %v3547
    %v3553 = vlaneseq
    %v3554 = vshrl.u32 %v3553, 7
    %v3555 = vsub.s32 %v2994, %v3554
    %v3556 = vrot.slane %v2881, %v3555
    %v3557 = vsel %vm2999, %v3556, %v3552
    %v3558 = vlaneseq
    %v3559 = vshrl.u32 %v3558, 7
    %v3560 = vsub.s32 %v3001, %v3559
    %v3561 = vrot.slane %v2893, %v3560
    %v3562 = vsel %vm3006, %v3561, %v3557
    %v3563 = vlaneseq
    %v3564 = vshrl.u32 %v3563, 7
    %v3565 = vsub.s32 %v3008, %v3564
    %v3566 = vrot.slane %v2905, %v3565
    %v3567 = vsel %vm3013, %v3566, %v3562
    %vm3568 = vcmask 1041409
    %v3569 = vsel %vm3568, %v3093, %v3014
    %vm3570 = vcmask 1042434
    %v3571 = vsel %vm3570, %v3172, %v3569
    %vm3572 = vcmask 1043459
    %v3573 = vsel %vm3572, %v3251, %v3571
    %vm3574 = vcmask 1044484
    %v3575 = vsel %vm3574, %v3330, %v3573
    %vm3576 = vcmask 1045509
    %v3577 = vsel %vm3576, %v3409, %v3575
    %vm3578 = vcmask 1046534
    %v3579 = vsel %vm3578, %v3488, %v3577
    %vm3580 = vcmask 1047559
    %v3581 = vsel %vm3580, %v3567, %v3579
    %v3582 = vsel %vm18, %v3581, 128
    %3583 = vst [vmem:[#allocation3] sm:$0xff] %v3582
    // Predicated region
    $region10: #{_mf_ranks_device.1} parent=1 // pred_check
      _
    $region11: #{_mf_ranks_device.1} parent=1 // pred_check_branch
      %3585 = sbr.rel (0) target = $region13
    $region12: #{_mf_ranks_device.1} parent=1 // pred_region
      %s3587 = ssub.s32 128, 128
      %3588 = vsyncadd [#allocation4], %s3587
      %s3590 = sshll.u32 [#allocation3], 4
      %s3591 = int_to_ptr.vmem [resolvable:$true] %s3590
      %3593 = dma.vmem_to_hbm [thread:$0]  %s3591, 128, %s2, [#allocation4]
    $region13: #{_mf_ranks_device.1} parent=1 // pred_fallthru
      _
    // Predicated region
    $region14: #{_mf_ranks_device.1} parent=1 // pred_check
      _
    $region15: #{_mf_ranks_device.1} parent=1 // pred_check_branch
      %3595 = sbr.rel (0) target = $region17
    $region16: #{_mf_ranks_device.1} parent=1 // pred_region
      %3596 = dma.done [#allocation4], 128
    $region17: #{_mf_ranks_device.1} parent=1 // pred_fallthru
      _
    %3597 = vsyncpa [#allocation4], 1

</llo_original>
